<compile_context>
chip_gen: v6e
topology: v6e:2x2x1
jax: 0.10.0
libtpu: 0.0.40
codegen_flags: <defaults>
</compile_context>

<pallas_src>
import functools

import jax
import jax.numpy as jnp
from jax import lax
from jax.experimental import pallas as pl
from jax.experimental.pallas import tpu as pltpu

EPS = 1e-5
NEG_SLOPE = 0.01
MATMUL_DTYPE = jnp.bfloat16   # MXU operand / intermediate dtype; stats & BN stay f32.


# ---------------------------------------------------------------------------
# Hardware-aware sizing helpers.
# ---------------------------------------------------------------------------
def _vmem_capacity_bytes():
    try:
        cap = getattr(pltpu.get_tpu_info(), "vmem_capacity_bytes", None)
        if cap:
            return int(cap)
    except Exception:
        pass
    return 64 << 20   # conservative default (v7x per-core VMEM)


def _vmem_limit(step_bytes, vmem_cap):
    hi = (3 * vmem_cap) // 4                       # 96 MiB on 128 MiB parts, 48 on v7x
    return int(min(hi, max(32 << 20, 2 * step_bytes + (4 << 20))))


def _pick_row_tile(H, W, Cin, Cout, target_bytes):
    """Row-strip height for Pass A: full H when it fits, else a divisor (mult. of 8)."""
    per_row = ((W + 2) * Cin * 2 * 3           # main block (x2 buffers) + concat strip
               + W * 9 * Cin * 2 * 2           # im2col patches + LHS transients (bf16)
               + W * Cout * (2 * 2 + 4))       # conv-out block (x2 buffers) + f32 acc
    cap = max(8, target_bytes // max(per_row, 1))
    if H <= cap:
        return H
    best = None
    for d in range(8, H + 1, 8):
        if H % d == 0 and d <= cap and (d * W) % 8 == 0:
            best = d
    return best if best is not None else H


def _pick_flat_tile(rows, row_bytes, target_bytes):
    """Row-block height for the lane-dense elementwise Pass B."""
    cap = max(8, target_bytes // max(row_bytes, 1))
    if rows <= cap:
        return rows
    best = None
    for d in range(8, rows + 1, 8):
        if rows % d == 0 and d <= cap:
            best = d
    return best if best is not None else rows


# ---------------------------------------------------------------------------
# Pass A kernel: im2col 3x3 conv (single MXU matmul) + per-strip BN partials.
# ---------------------------------------------------------------------------
def _conv_stats_kernel(xt_ref, xm_ref, xb_ref, w_ref, y_ref, stats_ref):
    # xt_ref   : (1,  W+2, Cin)  row just above the strip (ignored at the image top)
    # xm_ref   : (TH, W+2, Cin)  main row-strip, width already zero-padded (bf16)
    # xb_ref   : (1,  W+2, Cin)  row just below the strip (ignored at the image bottom)
    # w_ref    : (9*Cin, Cout)   im2col conv taps, row = (ky*3 + kx)*Cin + cin (bf16)
    # y_ref    : (TH*W, Cout)    raw conv output, no bias (bf16)
    # stats_ref: (2, Cout)       per-(image, strip) [sum; sumsq] partials (f32)
    TH, Wp, Cin = xm_ref.shape
    W = Wp - 2
    h = pl.program_id(1)

    # Zero the vertical halo rows at the image boundaries (conv padding=1 along H).
    top_keep = jnp.where(h > 0, 1.0, 0.0).astype(xm_ref.dtype)
    bot_keep = jnp.where(h < pl.num_programs(1) - 1, 1.0, 0.0).astype(xm_ref.dtype)
    x = jnp.concatenate(
        [xt_ref[...] * top_keep, xm_ref[...], xb_ref[...] * bot_keep], axis=0)

    # im2col: concatenate the 9 shifted windows along the channel (lane) axis and run a
    # single bf16 MXU matmul with f32 accumulation (9x K-depth vs per-tap matmuls).
    lhs = jnp.concatenate(
        [x[ky:ky + TH, kx:kx + W, :] for ky in range(3) for kx in range(3)],
        axis=-1).reshape(TH * W, 9 * Cin)
    acc = jnp.dot(lhs, w_ref[...], preferred_element_type=jnp.float32)

    # BN partials from the f32 accumulator, then downcast the stored intermediate.
    stats_ref[...] = jnp.concatenate(
        [jnp.sum(acc, axis=0, keepdims=True),
         jnp.sum(acc * acc, axis=0, keepdims=True)], axis=0)
    # TODO(synk): for Cout < 128 this store is lane-masked; padding Cout to 128 (and
    #             stripping it in Pass B) is the lever when Cout is not tiny.
    y_ref[...] = acc.astype(y_ref.dtype)


# ---------------------------------------------------------------------------
# Pass B kernel: folded BatchNorm + LeakyReLU on a lane-dense flat view.  For
# intermediate layers it emits the next layer's width-padded bf16 rows directly.
# ---------------------------------------------------------------------------
def _bn_lrelu_kernel(y_ref, scale_ref, shift_ref, o_ref, *, border_lanes):
    # y_ref: (TB, W*Cout) bf16 raw conv rows; scale/shift: (1, W*Cout) f32 (per-channel
    # params tiled W times); o_ref: (TB, W*Cout [+ 2*Cout zero borders]).
    y = y_ref[...].astype(jnp.float32) * scale_ref[...] + shift_ref[...]
    val = jnp.where(y >= 0, y, NEG_SLOPE * y).astype(o_ref.dtype)
    if border_lanes:
        z = jnp.zeros((val.shape[0], border_lanes), o_ref.dtype)
        val = jnp.concatenate([z, val, z], axis=1)
    o_ref[...] = val


# ---------------------------------------------------------------------------
# One ConvDropoutNormNonlin block on a width-padded bf16 NHWC activation.
# ---------------------------------------------------------------------------
def _conv_dropout_norm_nonlin_wpad(x_wpad, weight_oihw, gamma, beta, *,
                                   last_layer, final_dtype):
    """x_wpad: (N, H, W+2, Cin) bf16.  Returns (N, H, W+2, Cout) bf16 (intermediate
    layer, ready to be the next layer's input) or (N, H, W, Cout) final_dtype (last)."""
    N, H, Wp, Cin = x_wpad.shape
    W = Wp - 2
    Cout = weight_oihw.shape[0]

    vmem_cap = _vmem_capacity_bytes()
    th = _pick_row_tile(H, W, Cin, Cout, max(8 << 20, vmem_cap // 6))
    assert H % th == 0
    ht = H // th

    # Conv taps in im2col layout (one cheap XLA transpose of a tiny array).
    w_flat = jnp.transpose(weight_oihw, (2, 3, 1, 0)).reshape(9 * Cin, Cout)
    w_flat = w_flat.astype(MATMUL_DTYPE)

    step_bytes = (2 * th * Wp * Cin * 2 + 4 * Wp * Cin * 2      # strips + halos (x2)
                  + 2 * 9 * Cin * Cout * 2                      # weights (x2)
                  + 2 * th * W * Cout * 2                       # conv-out block (x2)
                  + (th + 2) * Wp * Cin * 2                     # concat strip transient
                  + 2 * th * W * 9 * Cin * 2                    # patches + im2col LHS
                  + th * W * Cout * 4)                          # f32 accumulator

    conv_raw, stats = pl.pallas_call(
        _conv_stats_kernel,
        out_shape=(jax.ShapeDtypeStruct((N * H * W, Cout), MATMUL_DTYPE),
                   jax.ShapeDtypeStruct((N, ht, 2, Cout), jnp.float32)),
        grid=(N, ht),
        in_specs=[
            # row above the strip (clamped; zeroed in-kernel when h == 0)
            pl.BlockSpec((None, 1, Wp, Cin),
                         lambda n, h: (n, jnp.maximum(h * th - 1, 0), 0, 0)),
            # main TH-row strip
            pl.BlockSpec((None, th, Wp, Cin), lambda n, h: (n, h, 0, 0)),
            # row below the strip (clamped; zeroed in-kernel when h == last)
            pl.BlockSpec((None, 1, Wp, Cin),
                         lambda n, h: (n, jnp.minimum(h * th + th, H - 1), 0, 0)),
            # conv taps: small, fully VMEM-resident
            pl.BlockSpec((9 * Cin, Cout), lambda n, h: (0, 0)),
        ],
        out_specs=(
            # flat raw-conv rows: block = this strip's th*W output pixels
            pl.BlockSpec((th * W, Cout), lambda n, h: (n * ht + h, 0)),
            # per-(image, strip) stats block -> no cross-strip carry, fully parallel
            pl.BlockSpec((None, None, 2, Cout), lambda n, h: (n, h, 0, 0)),
        ),
        compiler_params=pltpu.CompilerParams(
            dimension_semantics=("parallel", "parallel"),
            vmem_limit_bytes=_vmem_limit(step_bytes, vmem_cap),
        ),
    )(x_wpad, x_wpad, x_wpad, w_flat)

    # Tiny f32 reduction over per-strip partials + BN folding (XLA, negligible).
    count = jnp.float32(N * H * W)
    mean = jnp.sum(stats[:, :, 0, :], axis=(0, 1)) / count
    var = jnp.maximum(jnp.sum(stats[:, :, 1, :], axis=(0, 1)) / count - mean * mean, 0.0)
    # TODO(synk): E[x^2]-E[x]^2 in f32 loses precision if |mean| >> std; switch to
    #             shifted / Welford accumulation if such activation statistics show up.
    scale = gamma.astype(jnp.float32) * lax.rsqrt(var + EPS)
    shift = beta.astype(jnp.float32) - mean * scale

    rows = N * H
    wc_in = W * Cout
    border = 0 if last_layer else Cout            # width zero-borders for the next layer
    wc_out = wc_in + 2 * border
    out_dtype = final_dtype if last_layer else MATMUL_DTYPE
    out_elt = jnp.dtype(out_dtype).itemsize
    row_bytes = wc_in * (2 * 2 + 4 + 4) + wc_out * 2 * out_elt
    tb = _pick_flat_tile(rows, row_bytes, max(4 << 20, vmem_cap // 8))
    assert rows % tb == 0

    out_flat = pl.pallas_call(
        functools.partial(_bn_lrelu_kernel, border_lanes=border),
        out_shape=jax.ShapeDtypeStruct((rows, wc_out), out_dtype),
        grid=(rows // tb,),
        in_specs=[
            pl.BlockSpec((tb, wc_in), lambda i: (i, 0)),
            pl.BlockSpec((1, wc_in), lambda i: (0, 0)),
            pl.BlockSpec((1, wc_in), lambda i: (0, 0)),
        ],
        out_specs=pl.BlockSpec((tb, wc_out), lambda i: (i, 0)),
        compiler_params=pltpu.CompilerParams(
            dimension_semantics=("parallel",),
            vmem_limit_bytes=_vmem_limit(tb * row_bytes, vmem_cap),
        ),
    )(conv_raw.reshape(rows, wc_in),          # free row-major view of the flat buffer
      jnp.tile(scale, W).reshape(1, wc_in),
      jnp.tile(shift, W).reshape(1, wc_in))

    if last_layer:
        return out_flat.reshape(N, H, W, Cout)
    return out_flat.reshape(N, H, W + 2, Cout)   # already the next layer's padded input


# ---------------------------------------------------------------------------
# Module-level wrappers (NCHW boundary, PyTorch convention).
# ---------------------------------------------------------------------------
def stacked_conv_layers(x_nchw, layer_params):
    """StackedConvLayers forward.  layer_params: [(weight_oihw, bias, gamma, beta), ...]."""
    # NCHW -> width-padded bf16 NHWC once at the chain entry; between layers Pass B
    # produces the padded bf16 layout directly (no per-layer XLA pad/cast round trip).
    x = jnp.transpose(x_nchw, (0, 2, 3, 1))
    x = jnp.pad(x, ((0, 0), (0, 0), (1, 1), (0, 0))).astype(MATMUL_DTYPE)
    nl = len(layer_params)
    for li, (w, b, g, be) in enumerate(layer_params):
        # `b` (conv bias) cancels exactly under the train-mode BatchNorm that follows.
        x = _conv_dropout_norm_nonlin_wpad(
            x, w, g, be, last_layer=(li == nl - 1), final_dtype=x_nchw.dtype)
    return jnp.transpose(x, (0, 3, 1, 2))


def conv_dropout_norm_nonlin(x_nchw, weight_oihw, bias, gamma, beta):
    """Single ConvDropoutNormNonlin block at the NCHW boundary."""
    return stacked_conv_layers(x_nchw, [(weight_oihw, bias, gamma, beta)])


# ---------------------------------------------------------------------------
# Pure-JAX reference (same forward semantics; dropout = identity).
# ---------------------------------------------------------------------------
def _reference(x_nchw, layer_params, quantized):
    """quantized=True mimics the kernel's bf16 MXU inputs, dropped bias and bf16
    stored conv intermediate (BatchNorm statistics stay f32)."""
    x = x_nchw.astype(jnp.float32)
    for (w, b, g, be) in layer_params:
        lhs, rhs = x, w.astype(jnp.float32)
        bias = b.reshape(1, -1, 1, 1)
        if quantized:
            lhs = lhs.astype(MATMUL_DTYPE).astype(jnp.float32)
            rhs = rhs.astype(MATMUL_DTYPE).astype(jnp.float32)
            bias = jnp.zeros_like(bias)        # bias cancels exactly in train-mode BN
        conv = lax.conv_general_dilated(
            lhs, rhs, window_strides=(1, 1), padding=((1, 1), (1, 1)),
            dimension_numbers=("NCHW", "OIHW", "NCHW")) + bias
        mean = jnp.mean(conv, axis=(0, 2, 3), keepdims=True)
        var = jnp.mean((conv - mean) ** 2, axis=(0, 2, 3), keepdims=True)
        normed = conv
        if quantized:   # the kernel stores the conv intermediate in bf16
            normed = conv.astype(MATMUL_DTYPE).astype(jnp.float32)
        y = (normed - mean) * lax.rsqrt(var + EPS)
        y = y * g.reshape(1, -1, 1, 1) + be.reshape(1, -1, 1, 1)
        x = jnp.where(y >= 0, y, NEG_SLOPE * y)
    return x


if __name__ == "__main__":
    key = jax.random.PRNGKey(0)
    keys = jax.random.split(key, 16)

    N, Cin, Cout, H, W = 2, 4, 8, 16, 16
    num_convs = 2   # StackedConvLayers: first layer Cin->Cout, second Cout->Cout

    x = jax.random.normal(keys[0], (N, Cin, H, W), dtype=jnp.float32)

    layer_params = []
    ci = Cin
    for layer in range(num_convs):
        kw, kb, kg, kbe = keys[4 * layer + 1: 4 * layer + 5]
        fan_in = ci * 3 * 3
        bound = 1.0 / (fan_in ** 0.5)
        weight = jax.random.uniform(kw, (Cout, ci, 3, 3), jnp.float32, -bound, bound)
        bias = jax.random.uniform(kb, (Cout,), jnp.float32, -bound, bound)
        gamma = 1.0 + 0.1 * jax.random.normal(kg, (Cout,), dtype=jnp.float32)
        beta = 0.1 * jax.random.normal(kbe, (Cout,), dtype=jnp.float32)
        layer_params.append((weight, bias, gamma, beta))
        ci = Cout

    out = jax.jit(stacked_conv_layers)(x, layer_params)
    out = jax.block_until_ready(out)
    assert out.shape == (N, Cout, H, W), out.shape

    # Tight check vs a reference that models the kernel's quantization exactly.  The max
    # bound tolerates rare bf16 double-rounding flips of the stored conv intermediate
    # (kernel and XLA conv accumulate in slightly different f32 orders).
    ref_q = _reference(x, layer_params, quantized=True)
    err_q = jnp.abs(out - ref_q)
    max_q, mean_q = float(jnp.max(err_q)), float(jnp.mean(err_q))
    assert max_q < 4e-2 and mean_q < 1e-3, (max_q, mean_q)

    # Loose check vs the full-f32 reference (expected bf16 operand/intermediate error).
    ref_f = _reference(x, layer_params, quantized=False)
    err_f = float(jnp.max(jnp.abs(out - ref_f)))
    assert err_f < 1.5e-1, err_f

    print("KERNEL_OK")
</pallas_src>

<mosaic_0001>
module attributes {stable_mosaic.version = 11 : i64} {
  func.func @_bn_lrelu_kernel(%arg0: i32, %arg1: memref<32x128xbf16, #tpu.memory_space<vmem>>, %arg2: memref<1x128xf32, #tpu.memory_space<vmem>>, %arg3: memref<1x128xf32, #tpu.memory_space<vmem>>, %arg4: memref<32x144xbf16, #tpu.memory_space<vmem>>) attributes {dimension_semantics = [#tpu.dimension_semantics<parallel>], iteration_bounds = array<i64: 1>, scalar_prefetch = 0 : i64, scratch_operands = 0 : i64, tpu.core_type = #tpu.core_type<tc>, window_params = [{transform_indices = @transform_0, window_bounds = array<i64: 32, 128>}, {pipeline_mode = #tpu.pipeline_mode<synchronous>, transform_indices = @transform_1, window_bounds = array<i64: 1, 128>}, {pipeline_mode = #tpu.pipeline_mode<synchronous>, transform_indices = @transform_2, window_bounds = array<i64: 1, 128>}, {transform_indices = @transform_3, window_bounds = array<i64: 32, 144>}]} {
    %c0 = arith.constant 0 : index
    %c0_0 = arith.constant 0 : index
    %0 = vector.load %arg1[%c0, %c0_0] : memref<32x128xbf16, #tpu.memory_space<vmem>>, vector<32x128xbf16>
    %1 = arith.extf %0 : vector<32x128xbf16> to vector<32x128xf32>
    %c0_1 = arith.constant 0 : index
    %c0_2 = arith.constant 0 : index
    %2 = vector.load %arg2[%c0_1, %c0_2] : memref<1x128xf32, #tpu.memory_space<vmem>>, vector<1x128xf32>
    %3 = vector.broadcast %2 : vector<1x128xf32> to vector<32x128xf32>
    %4 = arith.mulf %1, %3 : vector<32x128xf32>
    %c0_3 = arith.constant 0 : index
    %c0_4 = arith.constant 0 : index
    %5 = vector.load %arg3[%c0_3, %c0_4] : memref<1x128xf32, #tpu.memory_space<vmem>>, vector<1x128xf32>
    %6 = vector.broadcast %5 : vector<1x128xf32> to vector<32x128xf32>
    %7 = arith.addf %4, %6 : vector<32x128xf32>
    %cst = arith.constant 0.000000e+00 : f32
    %8 = vector.broadcast %cst : f32 to vector<32x128xf32>
    %9 = arith.cmpf oge, %7, %8 : vector<32x128xf32>
    %cst_5 = arith.constant 0.00999999977 : f32
    %10 = vector.broadcast %cst_5 : f32 to vector<32x128xf32>
    %11 = arith.mulf %10, %7 : vector<32x128xf32>
    %12 = arith.select %9, %7, %11 : vector<32x128xi1>, vector<32x128xf32>
    %13 = arith.truncf %12 : vector<32x128xf32> to vector<32x128xbf16>
    %cst_6 = arith.constant 0.000000e+00 : bf16
    %14 = vector.broadcast %cst_6 : bf16 to vector<32x8xbf16>
    %15 = tpu.concatenate %14, %13, %14 in 1 : vector<32x8xbf16>, vector<32x128xbf16>, vector<32x8xbf16> -> vector<32x144xbf16>
    %c0_7 = arith.constant 0 : index
    %c0_8 = arith.constant 0 : index
    %16 = vector.load %arg4[%c0_7, %c0_8] : memref<32x144xbf16, #tpu.memory_space<vmem>>, vector<32x144xbf16>
    tpu.vector_store %arg4[%c0_7, %c0_8], %15 {strides = array<i32>} : memref<32x144xbf16, #tpu.memory_space<vmem>>, vector<32x144xbf16>,
    return
  }
  func.func @transform_0(%arg0: i32) -> (i32, i32) {
    %c0_i32 = arith.constant 0 : i32
    %c0_i32_0 = arith.constant 0 : i32
    return %arg0, %c0_i32 : i32, i32
  }
  func.func @transform_1(%arg0: i32) -> (i32, i32) {
    %c0_i32 = arith.constant 0 : i32
    %c0_i32_0 = arith.constant 0 : i32
    %c0_i32_1 = arith.constant 0 : i32
    return %c0_i32, %c0_i32_0 : i32, i32
  }
  func.func @transform_2(%arg0: i32) -> (i32, i32) {
    %c0_i32 = arith.constant 0 : i32
    %c0_i32_0 = arith.constant 0 : i32
    %c0_i32_1 = arith.constant 0 : i32
    return %c0_i32, %c0_i32_0 : i32, i32
  }
  func.func @transform_3(%arg0: i32) -> (i32, i32) {
    %c0_i32 = arith.constant 0 : i32
    %c0_i32_0 = arith.constant 0 : i32
    return %arg0, %c0_i32 : i32, i32
  }
}

module attributes {stable_mosaic.version = 11 : i64} {
  func.func @_conv_stats_kernel(%arg0: i32, %arg1: i32, %arg2: memref<1x1x18x4xbf16, #tpu.memory_space<vmem>>, %arg3: memref<1x16x18x4xbf16, #tpu.memory_space<vmem>>, %arg4: memref<1x1x18x4xbf16, #tpu.memory_space<vmem>>, %arg5: memref<36x8xbf16, #tpu.memory_space<vmem>>, %arg6: memref<256x8xbf16, #tpu.memory_space<vmem>>, %arg7: memref<1x1x2x8xf32, #tpu.memory_space<vmem>>) attributes {dimension_semantics = [#tpu.dimension_semantics<parallel>, #tpu.dimension_semantics<parallel>], iteration_bounds = array<i64: 2, 1>, scalar_prefetch = 0 : i64, scratch_operands = 0 : i64, tpu.core_type = #tpu.core_type<tc>, window_params = [{transform_indices = @transform_0, window_bounds = array<i64: 1, 1, 18, 4>}, {transform_indices = @transform_1, window_bounds = array<i64: 1, 16, 18, 4>}, {transform_indices = @transform_2, window_bounds = array<i64: 1, 1, 18, 4>}, {pipeline_mode = #tpu.pipeline_mode<synchronous>, transform_indices = @transform_3, window_bounds = array<i64: 36, 8>}, {transform_indices = @transform_4, window_bounds = array<i64: 256, 8>}, {transform_indices = @transform_5, window_bounds = array<i64: 1, 1, 2, 8>}]} {
    %c0_i32 = arith.constant 0 : i32
    %0 = arith.cmpi sgt, %arg1, %c0_i32 : i32
    %cst = arith.constant 1.000000e+00 : f32
    %cst_0 = arith.constant 0.000000e+00 : f32
    %1 = arith.select %0, %cst, %cst_0 : f32
    %2 = arith.truncf %1 : f32 to bf16
    %c0_i32_1 = arith.constant 0 : i32
    %3 = arith.cmpi slt, %arg1, %c0_i32_1 : i32
    %cst_2 = arith.constant 1.000000e+00 : f32
    %cst_3 = arith.constant 0.000000e+00 : f32
    %4 = arith.select %3, %cst_2, %cst_3 : f32
    %5 = arith.truncf %4 : f32 to bf16
    %c0 = arith.constant 0 : index
    %c0_4 = arith.constant 0 : index
    %c0_5 = arith.constant 0 : index
    %c0_6 = arith.constant 0 : index
    %6 = vector.load %arg2[%c0, %c0_4, %c0_5, %c0_6] : memref<1x1x18x4xbf16, #tpu.memory_space<vmem>>, vector<1x1x18x4xbf16>
    %7 = vector.shape_cast %6 : vector<1x1x18x4xbf16> to vector<1x18x4xbf16>
    %8 = vector.broadcast %2 : bf16 to vector<1x18x4xbf16>
    %9 = arith.mulf %7, %8 : vector<1x18x4xbf16>
    %c0_7 = arith.constant 0 : index
    %c0_8 = arith.constant 0 : index
    %c0_9 = arith.constant 0 : index
    %c0_10 = arith.constant 0 : index
    %10 = vector.load %arg3[%c0_7, %c0_8, %c0_9, %c0_10] : memref<1x16x18x4xbf16, #tpu.memory_space<vmem>>, vector<1x16x18x4xbf16>
    %11 = vector.shape_cast %10 : vector<1x16x18x4xbf16> to vector<16x18x4xbf16>
    %c0_11 = arith.constant 0 : index
    %c0_12 = arith.constant 0 : index
    %c0_13 = arith.constant 0 : index
    %c0_14 = arith.constant 0 : index
    %12 = vector.load %arg4[%c0_11, %c0_12, %c0_13, %c0_14] : memref<1x1x18x4xbf16, #tpu.memory_space<vmem>>, vector<1x1x18x4xbf16>
    %13 = vector.shape_cast %12 : vector<1x1x18x4xbf16> to vector<1x18x4xbf16>
    %14 = vector.broadcast %5 : bf16 to vector<1x18x4xbf16>
    %15 = arith.mulf %13, %14 : vector<1x18x4xbf16>
    %16 = tpu.concatenate %9, %11, %15 in 0 : vector<1x18x4xbf16>, vector<16x18x4xbf16>, vector<1x18x4xbf16> -> vector<18x18x4xbf16>
    %17 = vector.extract_strided_slice %16 {offsets = [0, 0, 0], sizes = [16, 16, 4], strides = [1, 1, 1]} : vector<18x18x4xbf16> to vector<16x16x4xbf16>
    %18 = vector.extract_strided_slice %16 {offsets = [0, 1, 0], sizes = [16, 16, 4], strides = [1, 1, 1]} : vector<18x18x4xbf16> to vector<16x16x4xbf16>
    %19 = vector.extract_strided_slice %16 {offsets = [0, 2, 0], sizes = [16, 16, 4], strides = [1, 1, 1]} : vector<18x18x4xbf16> to vector<16x16x4xbf16>
    %20 = vector.extract_strided_slice %16 {offsets = [1, 0, 0], sizes = [16, 16, 4], strides = [1, 1, 1]} : vector<18x18x4xbf16> to vector<16x16x4xbf16>
    %21 = vector.extract_strided_slice %16 {offsets = [1, 1, 0], sizes = [16, 16, 4], strides = [1, 1, 1]} : vector<18x18x4xbf16> to vector<16x16x4xbf16>
    %22 = vector.extract_strided_slice %16 {offsets = [1, 2, 0], sizes = [16, 16, 4], strides = [1, 1, 1]} : vector<18x18x4xbf16> to vector<16x16x4xbf16>
    %23 = vector.extract_strided_slice %16 {offsets = [2, 0, 0], sizes = [16, 16, 4], strides = [1, 1, 1]} : vector<18x18x4xbf16> to vector<16x16x4xbf16>
    %24 = vector.extract_strided_slice %16 {offsets = [2, 1, 0], sizes = [16, 16, 4], strides = [1, 1, 1]} : vector<18x18x4xbf16> to vector<16x16x4xbf16>
    %25 = vector.extract_strided_slice %16 {offsets = [2, 2, 0], sizes = [16, 16, 4], strides = [1, 1, 1]} : vector<18x18x4xbf16> to vector<16x16x4xbf16>
    %26 = tpu.concatenate %17, %18, %19, %20, %21, %22, %23, %24, %25 in 2 : vector<16x16x4xbf16>, vector<16x16x4xbf16>, vector<16x16x4xbf16>, vector<16x16x4xbf16>, vector<16x16x4xbf16>, vector<16x16x4xbf16>, vector<16x16x4xbf16>, vector<16x16x4xbf16>, vector<16x16x4xbf16> -> vector<16x16x36xbf16>
    %27 = vector.shape_cast %26 : vector<16x16x36xbf16> to vector<256x36xbf16>
    %c0_15 = arith.constant 0 : index
    %c0_16 = arith.constant 0 : index
    %28 = vector.load %arg5[%c0_15, %c0_16] : memref<36x8xbf16, #tpu.memory_space<vmem>>, vector<36x8xbf16>
    %cst_17 = arith.constant dense<0.000000e+00> : vector<256x8xf32>
    %29 = tpu.matmul %27, %28, %cst_17 {dimension_numbers = #tpu.dot_dimension_numbers<[1], [0], [0], [1], [0, 0, 1, 1], [], []>} : vector<256x36xbf16>, vector<36x8xbf16>, vector<256x8xf32> -> vector<256x8xf32>
    %cst_18 = arith.constant dense<0.000000e+00> : vector<8xf32>
    %30 = vector.multi_reduction <add>, %29, %cst_18 [0] : vector<256x8xf32> to vector<8xf32>
    %31 = vector.shape_cast %30 : vector<8xf32> to vector<1x8xf32>
    %32 = arith.mulf %29, %29 : vector<256x8xf32>
    %cst_19 = arith.constant dense<0.000000e+00> : vector<8xf32>
    %33 = vector.multi_reduction <add>, %32, %cst_19 [0] : vector<256x8xf32> to vector<8xf32>
    %34 = vector.shape_cast %33 : vector<8xf32> to vector<1x8xf32>
    %35 = tpu.concatenate %31, %34 in 0 : vector<1x8xf32>, vector<1x8xf32> -> vector<2x8xf32>
    %c0_20 = arith.constant 0 : index
    %c0_21 = arith.constant 0 : index
    %c0_22 = arith.constant 0 : index
    %c0_23 = arith.constant 0 : index
    %36 = vector.load %arg7[%c0_20, %c0_21, %c0_22, %c0_23] : memref<1x1x2x8xf32, #tpu.memory_space<vmem>>, vector<1x1x2x8xf32>
    %37 = vector.shape_cast %36 : vector<1x1x2x8xf32> to vector<2x8xf32>
    %38 = vector.shape_cast %35 : vector<2x8xf32> to vector<1x1x2x8xf32>
    tpu.vector_store %arg7[%c0_20, %c0_21, %c0_22, %c0_23], %38 {strides = array<i32>} : memref<1x1x2x8xf32, #tpu.memory_space<vmem>>, vector<1x1x2x8xf32>,
    %39 = arith.truncf %29 : vector<256x8xf32> to vector<256x8xbf16>
    %c0_24 = arith.constant 0 : index
    %c0_25 = arith.constant 0 : index
    %40 = vector.load %arg6[%c0_24, %c0_25] : memref<256x8xbf16, #tpu.memory_space<vmem>>, vector<256x8xbf16>
    tpu.vector_store %arg6[%c0_24, %c0_25], %39 {strides = array<i32>} : memref<256x8xbf16, #tpu.memory_space<vmem>>, vector<256x8xbf16>,
    return
  }
  func.func @transform_0(%arg0: i32, %arg1: i32) -> (i32, i32, i32, i32) {
    %c16_i32 = arith.constant 16 : i32
    %0 = arith.muli %arg1, %c16_i32 : i32
    %c1_i32 = arith.constant 1 : i32
    %1 = arith.subi %0, %c1_i32 : i32
    %c0_i32 = arith.constant 0 : i32
    %2 = arith.maxsi %1, %c0_i32 : i32
    %c0_i32_0 = arith.constant 0 : i32
    %c0_i32_1 = arith.constant 0 : i32
    %c0_i32_2 = arith.constant 0 : i32
    return %arg0, %2, %c0_i32_0, %c0_i32_1 : i32, i32, i32, i32
  }
  func.func @transform_1(%arg0: i32, %arg1: i32) -> (i32, i32, i32, i32) {
    %c0_i32 = arith.constant 0 : i32
    %c0_i32_0 = arith.constant 0 : i32
    %c0_i32_1 = arith.constant 0 : i32
    return %arg0, %arg1, %c0_i32, %c0_i32_0 : i32, i32, i32, i32
  }
  func.func @transform_2(%arg0: i32, %arg1: i32) -> (i32, i32, i32, i32) {
    %c16_i32 = arith.constant 16 : i32
    %0 = arith.muli %arg1, %c16_i32 : i32
    %c16_i32_0 = arith.constant 16 : i32
    %1 = arith.addi %0, %c16_i32_0 : i32
    %c15_i32 = arith.constant 15 : i32
    %2 = arith.minsi %1, %c15_i32 : i32
    %c0_i32 = arith.constant 0 : i32
    %c0_i32_1 = arith.constant 0 : i32
    %c0_i32_2 = arith.constant 0 : i32
    return %arg0, %2, %c0_i32, %c0_i32_1 : i32, i32, i32, i32
  }
  func.func @transform_3(%arg0: i32, %arg1: i32) -> (i32, i32) {
    %c0_i32 = arith.constant 0 : i32
    %c0_i32_0 = arith.constant 0 : i32
    %c0_i32_1 = arith.constant 0 : i32
    return %c0_i32, %c0_i32_0 : i32, i32
  }
  func.func @transform_4(%arg0: i32, %arg1: i32) -> (i32, i32) {
    %c1_i32 = arith.constant 1 : i32
    %0 = arith.muli %arg0, %c1_i32 : i32
    %1 = arith.addi %0, %arg1 : i32
    %c0_i32 = arith.constant 0 : i32
    %c0_i32_0 = arith.constant 0 : i32
    return %1, %c0_i32 : i32, i32
  }
  func.func @transform_5(%arg0: i32, %arg1: i32) -> (i32, i32, i32, i32) {
    %c0_i32 = arith.constant 0 : i32
    %c0_i32_0 = arith.constant 0 : i32
    %c0_i32_1 = arith.constant 0 : i32
    return %arg0, %arg1, %c0_i32, %c0_i32_0 : i32, i32, i32, i32
  }
}

module attributes {stable_mosaic.version = 11 : i64} {
  func.func @_bn_lrelu_kernel(%arg0: i32, %arg1: memref<32x128xbf16, #tpu.memory_space<vmem>>, %arg2: memref<1x128xf32, #tpu.memory_space<vmem>>, %arg3: memref<1x128xf32, #tpu.memory_space<vmem>>, %arg4: memref<32x128xf32, #tpu.memory_space<vmem>>) attributes {dimension_semantics = [#tpu.dimension_semantics<parallel>], iteration_bounds = array<i64: 1>, scalar_prefetch = 0 : i64, scratch_operands = 0 : i64, tpu.core_type = #tpu.core_type<tc>, window_params = [{transform_indices = @transform_0, window_bounds = array<i64: 32, 128>}, {pipeline_mode = #tpu.pipeline_mode<synchronous>, transform_indices = @transform_1, window_bounds = array<i64: 1, 128>}, {pipeline_mode = #tpu.pipeline_mode<synchronous>, transform_indices = @transform_2, window_bounds = array<i64: 1, 128>}, {transform_indices = @transform_3, window_bounds = array<i64: 32, 128>}]} {
    %c0 = arith.constant 0 : index
    %c0_0 = arith.constant 0 : index
    %0 = vector.load %arg1[%c0, %c0_0] : memref<32x128xbf16, #tpu.memory_space<vmem>>, vector<32x128xbf16>
    %1 = arith.extf %0 : vector<32x128xbf16> to vector<32x128xf32>
    %c0_1 = arith.constant 0 : index
    %c0_2 = arith.constant 0 : index
    %2 = vector.load %arg2[%c0_1, %c0_2] : memref<1x128xf32, #tpu.memory_space<vmem>>, vector<1x128xf32>
    %3 = vector.broadcast %2 : vector<1x128xf32> to vector<32x128xf32>
    %4 = arith.mulf %1, %3 : vector<32x128xf32>
    %c0_3 = arith.constant 0 : index
    %c0_4 = arith.constant 0 : index
    %5 = vector.load %arg3[%c0_3, %c0_4] : memref<1x128xf32, #tpu.memory_space<vmem>>, vector<1x128xf32>
    %6 = vector.broadcast %5 : vector<1x128xf32> to vector<32x128xf32>
    %7 = arith.addf %4, %6 : vector<32x128xf32>
    %cst = arith.constant 0.000000e+00 : f32
    %8 = vector.broadcast %cst : f32 to vector<32x128xf32>
    %9 = arith.cmpf oge, %7, %8 : vector<32x128xf32>
    %cst_5 = arith.constant 0.00999999977 : f32
    %10 = vector.broadcast %cst_5 : f32 to vector<32x128xf32>
    %11 = arith.mulf %10, %7 : vector<32x128xf32>
    %12 = arith.select %9, %7, %11 : vector<32x128xi1>, vector<32x128xf32>
    %c0_6 = arith.constant 0 : index
    %c0_7 = arith.constant 0 : index
    %13 = vector.load %arg4[%c0_6, %c0_7] : memref<32x128xf32, #tpu.memory_space<vmem>>, vector<32x128xf32>
    tpu.vector_store %arg4[%c0_6, %c0_7], %12 {strides = array<i32>} : memref<32x128xf32, #tpu.memory_space<vmem>>, vector<32x128xf32>,
    return
  }
  func.func @transform_0(%arg0: i32) -> (i32, i32) {
    %c0_i32 = arith.constant 0 : i32
    %c0_i32_0 = arith.constant 0 : i32
    return %arg0, %c0_i32 : i32, i32
  }
  func.func @transform_1(%arg0: i32) -> (i32, i32) {
    %c0_i32 = arith.constant 0 : i32
    %c0_i32_0 = arith.constant 0 : i32
    %c0_i32_1 = arith.constant 0 : i32
    return %c0_i32, %c0_i32_0 : i32, i32
  }
  func.func @transform_2(%arg0: i32) -> (i32, i32) {
    %c0_i32 = arith.constant 0 : i32
    %c0_i32_0 = arith.constant 0 : i32
    %c0_i32_1 = arith.constant 0 : i32
    return %c0_i32, %c0_i32_0 : i32, i32
  }
  func.func @transform_3(%arg0: i32) -> (i32, i32) {
    %c0_i32 = arith.constant 0 : i32
    %c0_i32_0 = arith.constant 0 : i32
    return %arg0, %c0_i32 : i32, i32
  }
}

module attributes {stable_mosaic.version = 11 : i64} {
  func.func @_conv_stats_kernel(%arg0: i32, %arg1: i32, %arg2: memref<1x1x18x8xbf16, #tpu.memory_space<vmem>>, %arg3: memref<1x16x18x8xbf16, #tpu.memory_space<vmem>>, %arg4: memref<1x1x18x8xbf16, #tpu.memory_space<vmem>>, %arg5: memref<72x8xbf16, #tpu.memory_space<vmem>>, %arg6: memref<256x8xbf16, #tpu.memory_space<vmem>>, %arg7: memref<1x1x2x8xf32, #tpu.memory_space<vmem>>) attributes {dimension_semantics = [#tpu.dimension_semantics<parallel>, #tpu.dimension_semantics<parallel>], iteration_bounds = array<i64: 2, 1>, scalar_prefetch = 0 : i64, scratch_operands = 0 : i64, tpu.core_type = #tpu.core_type<tc>, window_params = [{transform_indices = @transform_0, window_bounds = array<i64: 1, 1, 18, 8>}, {transform_indices = @transform_1, window_bounds = array<i64: 1, 16, 18, 8>}, {transform_indices = @transform_2, window_bounds = array<i64: 1, 1, 18, 8>}, {pipeline_mode = #tpu.pipeline_mode<synchronous>, transform_indices = @transform_3, window_bounds = array<i64: 72, 8>}, {transform_indices = @transform_4, window_bounds = array<i64: 256, 8>}, {transform_indices = @transform_5, window_bounds = array<i64: 1, 1, 2, 8>}]} {
    %c0_i32 = arith.constant 0 : i32
    %0 = arith.cmpi sgt, %arg1, %c0_i32 : i32
    %cst = arith.constant 1.000000e+00 : f32
    %cst_0 = arith.constant 0.000000e+00 : f32
    %1 = arith.select %0, %cst, %cst_0 : f32
    %2 = arith.truncf %1 : f32 to bf16
    %c0_i32_1 = arith.constant 0 : i32
    %3 = arith.cmpi slt, %arg1, %c0_i32_1 : i32
    %cst_2 = arith.constant 1.000000e+00 : f32
    %cst_3 = arith.constant 0.000000e+00 : f32
    %4 = arith.select %3, %cst_2, %cst_3 : f32
    %5 = arith.truncf %4 : f32 to bf16
    %c0 = arith.constant 0 : index
    %c0_4 = arith.constant 0 : index
    %c0_5 = arith.constant 0 : index
    %c0_6 = arith.constant 0 : index
    %6 = vector.load %arg2[%c0, %c0_4, %c0_5, %c0_6] : memref<1x1x18x8xbf16, #tpu.memory_space<vmem>>, vector<1x1x18x8xbf16>
    %7 = vector.shape_cast %6 : vector<1x1x18x8xbf16> to vector<1x18x8xbf16>
    %8 = vector.broadcast %2 : bf16 to vector<1x18x8xbf16>
    %9 = arith.mulf %7, %8 : vector<1x18x8xbf16>
    %c0_7 = arith.constant 0 : index
    %c0_8 = arith.constant 0 : index
    %c0_9 = arith.constant 0 : index
    %c0_10 = arith.constant 0 : index
    %10 = vector.load %arg3[%c0_7, %c0_8, %c0_9, %c0_10] : memref<1x16x18x8xbf16, #tpu.memory_space<vmem>>, vector<1x16x18x8xbf16>
    %11 = vector.shape_cast %10 : vector<1x16x18x8xbf16> to vector<16x18x8xbf16>
    %c0_11 = arith.constant 0 : index
    %c0_12 = arith.constant 0 : index
    %c0_13 = arith.constant 0 : index
    %c0_14 = arith.constant 0 : index
    %12 = vector.load %arg4[%c0_11, %c0_12, %c0_13, %c0_14] : memref<1x1x18x8xbf16, #tpu.memory_space<vmem>>, vector<1x1x18x8xbf16>
    %13 = vector.shape_cast %12 : vector<1x1x18x8xbf16> to vector<1x18x8xbf16>
    %14 = vector.broadcast %5 : bf16 to vector<1x18x8xbf16>
    %15 = arith.mulf %13, %14 : vector<1x18x8xbf16>
    %16 = tpu.concatenate %9, %11, %15 in 0 : vector<1x18x8xbf16>, vector<16x18x8xbf16>, vector<1x18x8xbf16> -> vector<18x18x8xbf16>
    %17 = vector.extract_strided_slice %16 {offsets = [0, 0, 0], sizes = [16, 16, 8], strides = [1, 1, 1]} : vector<18x18x8xbf16> to vector<16x16x8xbf16>
    %18 = vector.extract_strided_slice %16 {offsets = [0, 1, 0], sizes = [16, 16, 8], strides = [1, 1, 1]} : vector<18x18x8xbf16> to vector<16x16x8xbf16>
    %19 = vector.extract_strided_slice %16 {offsets = [0, 2, 0], sizes = [16, 16, 8], strides = [1, 1, 1]} : vector<18x18x8xbf16> to vector<16x16x8xbf16>
    %20 = vector.extract_strided_slice %16 {offsets = [1, 0, 0], sizes = [16, 16, 8], strides = [1, 1, 1]} : vector<18x18x8xbf16> to vector<16x16x8xbf16>
    %21 = vector.extract_strided_slice %16 {offsets = [1, 1, 0], sizes = [16, 16, 8], strides = [1, 1, 1]} : vector<18x18x8xbf16> to vector<16x16x8xbf16>
    %22 = vector.extract_strided_slice %16 {offsets = [1, 2, 0], sizes = [16, 16, 8], strides = [1, 1, 1]} : vector<18x18x8xbf16> to vector<16x16x8xbf16>
    %23 = vector.extract_strided_slice %16 {offsets = [2, 0, 0], sizes = [16, 16, 8], strides = [1, 1, 1]} : vector<18x18x8xbf16> to vector<16x16x8xbf16>
    %24 = vector.extract_strided_slice %16 {offsets = [2, 1, 0], sizes = [16, 16, 8], strides = [1, 1, 1]} : vector<18x18x8xbf16> to vector<16x16x8xbf16>
    %25 = vector.extract_strided_slice %16 {offsets = [2, 2, 0], sizes = [16, 16, 8], strides = [1, 1, 1]} : vector<18x18x8xbf16> to vector<16x16x8xbf16>
    %26 = tpu.concatenate %17, %18, %19, %20, %21, %22, %23, %24, %25 in 2 : vector<16x16x8xbf16>, vector<16x16x8xbf16>, vector<16x16x8xbf16>, vector<16x16x8xbf16>, vector<16x16x8xbf16>, vector<16x16x8xbf16>, vector<16x16x8xbf16>, vector<16x16x8xbf16>, vector<16x16x8xbf16> -> vector<16x16x72xbf16>
    %27 = vector.shape_cast %26 : vector<16x16x72xbf16> to vector<256x72xbf16>
    %c0_15 = arith.constant 0 : index
    %c0_16 = arith.constant 0 : index
    %28 = vector.load %arg5[%c0_15, %c0_16] : memref<72x8xbf16, #tpu.memory_space<vmem>>, vector<72x8xbf16>
    %cst_17 = arith.constant dense<0.000000e+00> : vector<256x8xf32>
    %29 = tpu.matmul %27, %28, %cst_17 {dimension_numbers = #tpu.dot_dimension_numbers<[1], [0], [0], [1], [0, 0, 1, 1], [], []>} : vector<256x72xbf16>, vector<72x8xbf16>, vector<256x8xf32> -> vector<256x8xf32>
    %cst_18 = arith.constant dense<0.000000e+00> : vector<8xf32>
    %30 = vector.multi_reduction <add>, %29, %cst_18 [0] : vector<256x8xf32> to vector<8xf32>
    %31 = vector.shape_cast %30 : vector<8xf32> to vector<1x8xf32>
    %32 = arith.mulf %29, %29 : vector<256x8xf32>
    %cst_19 = arith.constant dense<0.000000e+00> : vector<8xf32>
    %33 = vector.multi_reduction <add>, %32, %cst_19 [0] : vector<256x8xf32> to vector<8xf32>
    %34 = vector.shape_cast %33 : vector<8xf32> to vector<1x8xf32>
    %35 = tpu.concatenate %31, %34 in 0 : vector<1x8xf32>, vector<1x8xf32> -> vector<2x8xf32>
    %c0_20 = arith.constant 0 : index
    %c0_21 = arith.constant 0 : index
    %c0_22 = arith.constant 0 : index
    %c0_23 = arith.constant 0 : index
    %36 = vector.load %arg7[%c0_20, %c0_21, %c0_22, %c0_23] : memref<1x1x2x8xf32, #tpu.memory_space<vmem>>, vector<1x1x2x8xf32>
    %37 = vector.shape_cast %36 : vector<1x1x2x8xf32> to vector<2x8xf32>
    %38 = vector.shape_cast %35 : vector<2x8xf32> to vector<1x1x2x8xf32>
    tpu.vector_store %arg7[%c0_20, %c0_21, %c0_22, %c0_23], %38 {strides = array<i32>} : memref<1x1x2x8xf32, #tpu.memory_space<vmem>>, vector<1x1x2x8xf32>,
    %39 = arith.truncf %29 : vector<256x8xf32> to vector<256x8xbf16>
    %c0_24 = arith.constant 0 : index
    %c0_25 = arith.constant 0 : index
    %40 = vector.load %arg6[%c0_24, %c0_25] : memref<256x8xbf16, #tpu.memory_space<vmem>>, vector<256x8xbf16>
    tpu.vector_store %arg6[%c0_24, %c0_25], %39 {strides = array<i32>} : memref<256x8xbf16, #tpu.memory_space<vmem>>, vector<256x8xbf16>,
    return
  }
  func.func @transform_0(%arg0: i32, %arg1: i32) -> (i32, i32, i32, i32) {
    %c16_i32 = arith.constant 16 : i32
    %0 = arith.muli %arg1, %c16_i32 : i32
    %c1_i32 = arith.constant 1 : i32
    %1 = arith.subi %0, %c1_i32 : i32
    %c0_i32 = arith.constant 0 : i32
    %2 = arith.maxsi %1, %c0_i32 : i32
    %c0_i32_0 = arith.constant 0 : i32
    %c0_i32_1 = arith.constant 0 : i32
    %c0_i32_2 = arith.constant 0 : i32
    return %arg0, %2, %c0_i32_0, %c0_i32_1 : i32, i32, i32, i32
  }
  func.func @transform_1(%arg0: i32, %arg1: i32) -> (i32, i32, i32, i32) {
    %c0_i32 = arith.constant 0 : i32
    %c0_i32_0 = arith.constant 0 : i32
    %c0_i32_1 = arith.constant 0 : i32
    return %arg0, %arg1, %c0_i32, %c0_i32_0 : i32, i32, i32, i32
  }
  func.func @transform_2(%arg0: i32, %arg1: i32) -> (i32, i32, i32, i32) {
    %c16_i32 = arith.constant 16 : i32
    %0 = arith.muli %arg1, %c16_i32 : i32
    %c16_i32_0 = arith.constant 16 : i32
    %1 = arith.addi %0, %c16_i32_0 : i32
    %c15_i32 = arith.constant 15 : i32
    %2 = arith.minsi %1, %c15_i32 : i32
    %c0_i32 = arith.constant 0 : i32
    %c0_i32_1 = arith.constant 0 : i32
    %c0_i32_2 = arith.constant 0 : i32
    return %arg0, %2, %c0_i32, %c0_i32_1 : i32, i32, i32, i32
  }
  func.func @transform_3(%arg0: i32, %arg1: i32) -> (i32, i32) {
    %c0_i32 = arith.constant 0 : i32
    %c0_i32_0 = arith.constant 0 : i32
    %c0_i32_1 = arith.constant 0 : i32
    return %c0_i32, %c0_i32_0 : i32, i32
  }
  func.func @transform_4(%arg0: i32, %arg1: i32) -> (i32, i32) {
    %c1_i32 = arith.constant 1 : i32
    %0 = arith.muli %arg0, %c1_i32 : i32
    %1 = arith.addi %0, %arg1 : i32
    %c0_i32 = arith.constant 0 : i32
    %c0_i32_0 = arith.constant 0 : i32
    return %1, %c0_i32 : i32, i32
  }
  func.func @transform_5(%arg0: i32, %arg1: i32) -> (i32, i32, i32, i32) {
    %c0_i32 = arith.constant 0 : i32
    %c0_i32_0 = arith.constant 0 : i32
    %c0_i32_1 = arith.constant 0 : i32
    return %arg0, %arg1, %c0_i32, %c0_i32_0 : i32, i32, i32, i32
  }
}

</mosaic_0001>

<llo_original>
// kernel: tile.23
$region0: #{tile.23}
  #allocation0 [shape = 's32[1]{0}', space=sflag, size = 0x4, scoped, tag = 'scoped memory for tile.23']
  %s0 = inlined_call_operand.vmem [shape: f32[8], index: 0, kind: input, shape index: {}]
  %s1 = inlined_call_operand.vmem [shape: f32[16,8], index: 1, kind: output, shape index: {}]
  // Predicated region
  $region2: #{tile.23} parent=0 // pred_check
    _
  $region3: #{tile.23} parent=0 // pred_check_branch
    %3 = sbr.rel (0) target = $region5
  $region4: #{tile.23} parent=0 // pred_region
    _
  $region5: #{tile.23} parent=0 // pred_fallthru
    _
  %v4 = vld [vmem:[%s0] ss:$0 sm:$0xff]
  %5 = vst [vmem:[%s1] sm:$0xff] %v4
  %s6 = scalar_lea.vmem %s1, 8
  %7 = vst [vmem:[%s6] sm:$0xff] %v4

// kernel: tile.24
$region0: #{tile.24}
  %s0 = inlined_call_operand.vmem [shape: f32[16,8], index: 0, kind: input, shape index: {}]
  %s1 = inlined_call_operand.vmem [shape: f32[1,128], index: 1, kind: output, shape index: {}]
  $region1: #{tile.24} parent=0
    #allocation0 [shape = 'u8[4096]{0}', space=vmem, size = 0x1000, scoped, tag = 'scoped mem for output reshape']
    %v2 = vld [vmem:[%s0] sm:$0x1]
    %vm3 = vcmask 64512
    %4 = vst.msk [vmem:[#allocation0] sm:$0x1] %vm3, %v2
    %s5 = scalar_lea.vmem %s0, 15
    %v6 = vld [vmem:[%s5] sm:$0x1]
    %7 = vrot.lane.b32.xlu0 %v6, 120
    %v8 = vpop.permute.xlu0 %7
    %vm9 = vcmask 1048512
    %10 = vst.msk [vmem:[#allocation0] sm:$0x1] %vm9, %v8
    %s11 = scalar_lea.vmem %s0, 14
    %v12 = vld [vmem:[%s11] sm:$0x1]
    %13 = vrot.lane.b32.xlu0 %v12, 112
    %v14 = vpop.permute.xlu0 %13
    %vm15 = vcmask 982912
    %16 = vst.msk [vmem:[#allocation0] sm:$0x1] %vm15, %v14
    %s17 = scalar_lea.vmem %s0, 13
    %v18 = vld [vmem:[%s17] sm:$0x1]
    %19 = vrot.lane.b32.xlu0 %v18, 104
    %v20 = vpop.permute.xlu0 %19
    %vm21 = vcmask 917312
    %22 = vst.msk [vmem:[#allocation0] sm:$0x1] %vm21, %v20
    %s23 = scalar_lea.vmem %s0, 12
    %v24 = vld [vmem:[%s23] sm:$0x1]
    %25 = vrot.lane.b32.xlu0 %v24, 96
    %v26 = vpop.permute.xlu0 %25
    %vm27 = vcmask 851712
    %28 = vst.msk [vmem:[#allocation0] sm:$0x1] %vm27, %v26
    %s29 = scalar_lea.vmem %s0, 11
    %v30 = vld [vmem:[%s29] sm:$0x1]
    %31 = vrot.lane.b32.xlu0 %v30, 88
    %v32 = vpop.permute.xlu0 %31
    %vm33 = vcmask 786112
    %34 = vst.msk [vmem:[#allocation0] sm:$0x1] %vm33, %v32
    %s35 = scalar_lea.vmem %s0, 10
    %v36 = vld [vmem:[%s35] sm:$0x1]
    %37 = vrot.lane.b32.xlu0 %v36, 80
    %v38 = vpop.permute.xlu0 %37
    %vm39 = vcmask 720512
    %40 = vst.msk [vmem:[#allocation0] sm:$0x1] %vm39, %v38
    %s41 = scalar_lea.vmem %s0, 9
    %v42 = vld [vmem:[%s41] sm:$0x1]
    %43 = vrot.lane.b32.xlu0 %v42, 72
    %v44 = vpop.permute.xlu0 %43
    %vm45 = vcmask 654912
    %46 = vst.msk [vmem:[#allocation0] sm:$0x1] %vm45, %v44
    %s47 = scalar_lea.vmem %s0, 8
    %v48 = vld [vmem:[%s47] sm:$0x1]
    %49 = vrot.lane.b32.xlu0 %v48, 64
    %v50 = vpop.permute.xlu0 %49
    %vm51 = vcmask 589312
    %52 = vst.msk [vmem:[#allocation0] sm:$0x1] %vm51, %v50
    %s53 = scalar_lea.vmem %s0, 7
    %v54 = vld [vmem:[%s53] sm:$0x1]
    %55 = vrot.lane.b32.xlu0 %v54, 56
    %v56 = vpop.permute.xlu0 %55
    %vm57 = vcmask 523712
    %58 = vst.msk [vmem:[#allocation0] sm:$0x1] %vm57, %v56
    %s59 = scalar_lea.vmem %s0, 6
    %v60 = vld [vmem:[%s59] sm:$0x1]
    %61 = vrot.lane.b32.xlu0 %v60, 48
    %v62 = vpop.permute.xlu0 %61
    %vm63 = vcmask 458112
    %64 = vst.msk [vmem:[#allocation0] sm:$0x1] %vm63, %v62
    %s65 = scalar_lea.vmem %s0, 5
    %v66 = vld [vmem:[%s65] sm:$0x1]
    %67 = vrot.lane.b32.xlu0 %v66, 40
    %v68 = vpop.permute.xlu0 %67
    %vm69 = vcmask 392512
    %70 = vst.msk [vmem:[#allocation0] sm:$0x1] %vm69, %v68
    %s71 = scalar_lea.vmem %s0, 4
    %v72 = vld [vmem:[%s71] sm:$0x1]
    %73 = vrot.lane.b32.xlu0 %v72, 32
    %v74 = vpop.permute.xlu0 %73
    %vm75 = vcmask 326912
    %76 = vst.msk [vmem:[#allocation0] sm:$0x1] %vm75, %v74
    %s77 = scalar_lea.vmem %s0, 3
    %v78 = vld [vmem:[%s77] sm:$0x1]
    %79 = vrot.lane.b32.xlu0 %v78, 24
    %v80 = vpop.permute.xlu0 %79
    %vm81 = vcmask 261312
    %82 = vst.msk [vmem:[#allocation0] sm:$0x1] %vm81, %v80
    %s83 = scalar_lea.vmem %s0, 2
    %v84 = vld [vmem:[%s83] sm:$0x1]
    %85 = vrot.lane.b32.xlu0 %v84, 16
    %v86 = vpop.permute.xlu0 %85
    %vm87 = vcmask 195712
    %88 = vst.msk [vmem:[#allocation0] sm:$0x1] %vm87, %v86
    %s89 = scalar_lea.vmem %s0, 1
    %v90 = vld [vmem:[%s89] sm:$0x1]
    %91 = vrot.lane.b32.xlu0 %v90, 8
    %v92 = vpop.permute.xlu0 %91
    %vm93 = vcmask 130112
    %94 = vst.msk [vmem:[#allocation0] sm:$0x1] %vm93, %v92
    %s96 = sshll.u32 1, 1
    %s97 = ssub.s32 %s96, 1
    %v99 = vld [vmem:[#allocation0] sm:%s97]
    %s100 = sshll.u32 1, 1
    %s101 = ssub.s32 %s100, 1
    %102 = vst [vmem:[%s1] sm:%s101] %v99

// kernel: stacked_conv_layers.5
$region0: #{stacked_conv_layers.5}
  #allocation0 [shape = 'u32[]', space=smem, size = 0x4, offset = 0x4, fixed_abs, tag = 'smem constant byte address 0x4 - core index']
  #allocation1 [shape = 'u32[144,128]{1,0:T(1,128)}', space=vmem, size = 0x12000, scoped, tag = 'internal scratch']
  %s0 = inlined_call_operand.vmem [shape: bf16[32,128], index: 0, kind: input, shape index: {}]
  %s1 = inlined_call_operand.vmem [shape: f32[1,128], index: 1, kind: input, shape index: {}]
  %s2 = inlined_call_operand.vmem [shape: f32[1,128], index: 2, kind: input, shape index: {}]
  %s3 = inlined_call_operand.vmem [shape: bf16[32,144], index: 3, kind: output, shape index: {}]
  %s4 = sld [smem:[#allocation0]]
  $region22: #{stacked_conv_layers.5} parent=0
    _
  %s6 = ssub.s32 1, %s4
  %s7 = scalar_select 0, %s6, %s4
  // Predicated region
  $region2: #{stacked_conv_layers.5} parent=0 // pred_check
    _
  $region3: #{stacked_conv_layers.5} parent=0 // pred_check_branch
    %9 = sbr.rel (0) target = $region5
  $region4: #{stacked_conv_layers.5} parent=0 // pred_region
    _
  $region5: #{stacked_conv_layers.5} parent=0 // pred_fallthru
    _
  // Predicated region
  $region6: #{stacked_conv_layers.5} parent=0 // pred_check
    _
  $region7: #{stacked_conv_layers.5} parent=0 // pred_check_branch
    %11 = sbr.rel (0) target = $region9
  $region8: #{stacked_conv_layers.5} parent=0 // pred_region
    _
  $region9: #{stacked_conv_layers.5} parent=0 // pred_fallthru
    _
  // Predicated region
  $region10: #{stacked_conv_layers.5} parent=0 // pred_check
    _
  $region11: #{stacked_conv_layers.5} parent=0 // pred_check_branch
    %13 = sbr.rel (0) target = $region13
  $region12: #{stacked_conv_layers.5} parent=0 // pred_region
    _
  $region13: #{stacked_conv_layers.5} parent=0 // pred_fallthru
    _
  %v15 = vld [vmem:[%s0] sm:$0xf]
  %v16 = vld [vmem:[%s0 + $0x4] sm:$0xf]
  %v17 = vld [vmem:[%s0 + $0x8] sm:$0xf]
  %v18 = vld [vmem:[%s0 + $0xc] sm:$0xf]
  %v19 = vunpack.c.l.bf16 %v15
  %v20 = vunpack.c.l.bf16 %v16
  %v21 = vunpack.c.l.bf16 %v17
  %v22 = vunpack.c.l.bf16 %v18
  %v23 = vld [vmem:[%s1] sm:$0x1]
  %v25 = vlaneseq
  %v26 = vshrl.u32 %v25, 7
  %v27 = vsub.s32 0, %v26
  %v28 = vrot.slane %v23, %v27
  %v30 = vmul.f32 %v19, %v28
  %v31 = vmul.f32 %v20, %v28
  %v32 = vmul.f32 %v21, %v28
  %v33 = vmul.f32 %v22, %v28
  %v34 = vld [vmem:[%s2] sm:$0x1]
  %v36 = vlaneseq
  %v37 = vshrl.u32 %v36, 7
  %v38 = vsub.s32 0, %v37
  %v39 = vrot.slane %v34, %v38
  %v41 = vadd.f32 %v30, %v39
  %v42 = vadd.f32 %v31, %v39
  %v43 = vadd.f32 %v32, %v39
  %v44 = vadd.f32 %v33, %v39
  %vm45 = vcmp.ge.f32.partialorder %v41, 0.0
  %vm46 = vcmp.ge.f32.partialorder %v42, 0.0
  %vm47 = vcmp.ge.f32.partialorder %v43, 0.0
  %vm48 = vcmp.ge.f32.partialorder %v44, 0.0
  %v49 = vmul.f32 %v41, 0.01
  %v50 = vmul.f32 %v42, 0.01
  %v51 = vmul.f32 %v43, 0.01
  %v52 = vmul.f32 %v44, 0.01
  %v53 = vsel %vm45, %v41, %v49
  %v54 = vsel %vm46, %v42, %v50
  %v55 = vsel %vm47, %v43, %v51
  %v56 = vsel %vm48, %v44, %v52
  %v57 = vpack.c.bf16 %v54, %v53
  %v58 = vpack.c.bf16 %v56, %v55
  %61 = vrot.lane.b32.xlu0 %v57, 8
  %v62 = vpop.permute.xlu0 %61
  %63 = vrot.lane.b32.xlu0 %v58, 8
  %v64 = vpop.permute.xlu0 %63
  %vm65 = vcmask 64512
  %v68 = vsel %vm65, 0, %v62
  %v70 = vsel %vm65, 0, %v64
  %v71 = vsel %vm65, %v62, 0
  %v72 = vsel %vm65, %v64, 0
  %v77 = vunpack.c.l.b16 %v68
  %v78 = vunpack.c.l.b16 %v71
  %v79 = vunpack.c.h.b16 %v68
  %v80 = vunpack.c.h.b16 %v71
  %v81 = vunpack.c.l.b16 %v70
  %v82 = vunpack.c.l.b16 %v72
  %v83 = vunpack.c.h.b16 %v70
  %v84 = vunpack.c.h.b16 %v72
  %v85 = vpack.c.b16 %v78, %v77
  %v86 = vpack.c.b16 %v80, %v79
  %v87 = vpack.c.b16 %v82, %v81
  %v88 = vpack.c.b16 %v84, %v83
  %vm93 = vcmask 1043456
  %vm94 = vcmask 130052
  %vm95 = vmor %vm94, %vm93
  %96 = vst.msk [vmem:[%s3] sm:$0xff] %vm95, %v85
  %97 = vst.msk [vmem:[%s3 + $0x8] sm:$0xff] %vm95, %v86
  %98 = vst.msk [vmem:[%s3 + $0x10] sm:$0xff] %vm95, %v87
  %99 = vst.msk [vmem:[%s3 + $0x18] sm:$0xff] %vm95, %v88
  // Predicated region
  $region14: #{stacked_conv_layers.5} parent=0 // pred_check
    _
  $region15: #{stacked_conv_layers.5} parent=0 // pred_check_branch
    %101 = sbr.rel (0) target = $region17
  $region16: #{stacked_conv_layers.5} parent=0 // pred_region
    _
  $region17: #{stacked_conv_layers.5} parent=0 // pred_fallthru
    _
  // Predicated region
  $region18: #{stacked_conv_layers.5} parent=0 // pred_check
    _
  $region19: #{stacked_conv_layers.5} parent=0 // pred_check_branch
    %103 = sbr.rel (0) target = $region21
  $region20: #{stacked_conv_layers.5} parent=0 // pred_region
    _
  $region21: #{stacked_conv_layers.5} parent=0 // pred_fallthru
    _

// kernel: stacked_conv_layers.7
$region0: #{stacked_conv_layers.7}
  #allocation0 [shape = 'u32[]', space=smem, size = 0x4, offset = 0x4, fixed_abs, tag = 'smem constant byte address 0x4 - core index']
  #allocation1 [shape = 'u32[144,128]{1,0:T(1,128)}', space=vmem, size = 0x12000, scoped, tag = 'internal scratch']
  %s0 = inlined_call_operand.vmem [shape: bf16[32,128], index: 0, kind: input, shape index: {}]
  %s1 = inlined_call_operand.vmem [shape: f32[1,128], index: 1, kind: input, shape index: {}]
  %s2 = inlined_call_operand.vmem [shape: f32[1,128], index: 2, kind: input, shape index: {}]
  %s3 = inlined_call_operand.vmem [shape: f32[32,128], index: 3, kind: output, shape index: {}]
  %s4 = sld [smem:[#allocation0]]
  $region22: #{stacked_conv_layers.7} parent=0
    _
  %s6 = ssub.s32 1, %s4
  %s7 = scalar_select 0, %s6, %s4
  // Predicated region
  $region2: #{stacked_conv_layers.7} parent=0 // pred_check
    _
  $region3: #{stacked_conv_layers.7} parent=0 // pred_check_branch
    %9 = sbr.rel (0) target = $region5
  $region4: #{stacked_conv_layers.7} parent=0 // pred_region
    _
  $region5: #{stacked_conv_layers.7} parent=0 // pred_fallthru
    _
  // Predicated region
  $region6: #{stacked_conv_layers.7} parent=0 // pred_check
    _
  $region7: #{stacked_conv_layers.7} parent=0 // pred_check_branch
    %11 = sbr.rel (0) target = $region9
  $region8: #{stacked_conv_layers.7} parent=0 // pred_region
    _
  $region9: #{stacked_conv_layers.7} parent=0 // pred_fallthru
    _
  // Predicated region
  $region10: #{stacked_conv_layers.7} parent=0 // pred_check
    _
  $region11: #{stacked_conv_layers.7} parent=0 // pred_check_branch
    %13 = sbr.rel (0) target = $region13
  $region12: #{stacked_conv_layers.7} parent=0 // pred_region
    _
  $region13: #{stacked_conv_layers.7} parent=0 // pred_fallthru
    _
  %v14 = vld [vmem:[%s0] sm:$0xf]
  %v15 = vld [vmem:[%s0 + $0x4] sm:$0xf]
  %v16 = vld [vmem:[%s0 + $0x8] sm:$0xf]
  %v17 = vld [vmem:[%s0 + $0xc] sm:$0xf]
  %v18 = vunpack.c.l.bf16 %v14
  %v19 = vunpack.c.l.bf16 %v15
  %v20 = vunpack.c.l.bf16 %v16
  %v21 = vunpack.c.l.bf16 %v17
  %v22 = vld [vmem:[%s1] sm:$0x1]
  %v24 = vlaneseq
  %v25 = vshrl.u32 %v24, 7
  %v26 = vsub.s32 0, %v25
  %v27 = vrot.slane %v22, %v26
  %v29 = vmul.f32 %v18, %v27
  %v30 = vmul.f32 %v19, %v27
  %v31 = vmul.f32 %v20, %v27
  %v32 = vmul.f32 %v21, %v27
  %v33 = vld [vmem:[%s2] sm:$0x1]
  %v35 = vlaneseq
  %v36 = vshrl.u32 %v35, 7
  %v37 = vsub.s32 0, %v36
  %v38 = vrot.slane %v33, %v37
  %v40 = vadd.f32 %v29, %v38
  %v41 = vadd.f32 %v30, %v38
  %v42 = vadd.f32 %v31, %v38
  %v43 = vadd.f32 %v32, %v38
  %vm44 = vcmp.ge.f32.partialorder %v40, 0.0
  %vm45 = vcmp.ge.f32.partialorder %v41, 0.0
  %vm46 = vcmp.ge.f32.partialorder %v42, 0.0
  %vm47 = vcmp.ge.f32.partialorder %v43, 0.0
  %v48 = vmul.f32 %v40, 0.01
  %v49 = vmul.f32 %v41, 0.01
  %v50 = vmul.f32 %v42, 0.01
  %v51 = vmul.f32 %v43, 0.01
  %v52 = vsel %vm44, %v40, %v48
  %v53 = vsel %vm45, %v41, %v49
  %v54 = vsel %vm46, %v42, %v50
  %v55 = vsel %vm47, %v43, %v51
  %56 = vst [vmem:[%s3] sm:$0xff] %v52
  %57 = vst [vmem:[%s3 + $0x8] sm:$0xff] %v53
  %58 = vst [vmem:[%s3 + $0x10] sm:$0xff] %v54
  %59 = vst [vmem:[%s3 + $0x18] sm:$0xff] %v55
  // Predicated region
  $region14: #{stacked_conv_layers.7} parent=0 // pred_check
    _
  $region15: #{stacked_conv_layers.7} parent=0 // pred_check_branch
    %61 = sbr.rel (0) target = $region17
  $region16: #{stacked_conv_layers.7} parent=0 // pred_region
    _
  $region17: #{stacked_conv_layers.7} parent=0 // pred_fallthru
    _
  // Predicated region
  $region18: #{stacked_conv_layers.7} parent=0 // pred_check
    _
  $region19: #{stacked_conv_layers.7} parent=0 // pred_check_branch
    %63 = sbr.rel (0) target = $region21
  $region20: #{stacked_conv_layers.7} parent=0 // pred_region
    _
  $region21: #{stacked_conv_layers.7} parent=0 // pred_fallthru
    _

// kernel: stacked_conv_layers.4
$region0: #{stacked_conv_layers.4}
  #allocation0 [shape = 'u32[]', space=smem, size = 0x4, offset = 0x4, fixed_abs, tag = 'smem constant byte address 0x4 - core index']
  #allocation1 [shape = 'u32[144,128]{1,0:T(1,128)}', space=vmem, size = 0x12000, scoped, tag = 'internal scratch']
  %s0 = inlined_call_operand.vmem [shape: bf16[2,16,18,4], index: 0, kind: input, shape index: {}, may-alias: {0,1,2}]
  %s1 = inlined_call_operand.vmem [shape: bf16[2,16,18,4], index: 1, kind: input, shape index: {}, may-alias: {0,1,2}]
  %s2 = inlined_call_operand.vmem [shape: bf16[2,16,18,4], index: 2, kind: input, shape index: {}, may-alias: {0,1,2}]
  %s3 = inlined_call_operand.vmem [shape: bf16[36,8], index: 3, kind: input, shape index: {}]
  %s4 = inlined_call_operand.vmem [shape: bf16[512,8], index: 4, kind: output, shape index: {0}]
  %s5 = inlined_call_operand.vmem [shape: f32[2,1,2,8], index: 5, kind: output, shape index: {1}]
  %6 = xla_tuple %s4, %s5
  %s7 = sld [smem:[#allocation0]]
  $region57: #{stacked_conv_layers.4} parent=0
    _
  %s9 = ssub.s32 1, %s7
  %s10 = scalar_select 0, %s9, %s7
  loop: start=0, step=1, limit=4
  $region2: #{stacked_conv_layers.4} parent=0 // loop_pre_header
    _
  $region3: #{stacked_conv_layers.4} parent=0 // loop_header
    %s12 = sphi 0, %s16
    %p13 = scmp.ge.s32.totalorder %s12, 4
    %s19 = sphi 0, %s31
    %s20 = sphi 0, %s27
    %s21 = sphi 0, %s19
    %s22 = sphi 0, %s20
    %s23 = sphi 0, %s21
    %s24 = sphi 0, %s22
    %s44 = sphi 0, %s46
    %s47 = sphi 0, %s44
    %s48 = sphi 0, %s47
    %s64 = sphi 0, %s48
    %s72 = sphi 0, %s74
    %s75 = sphi 0, %s72
    %s76 = sphi 0, %s75
    %s92 = sphi 0, %s76
    %s108 = sphi 0, %s110
    %s111 = sphi 0, %s108
    %s112 = sphi 0, %s111
    %s128 = sphi 0, %s112
    %s132 = sphi 0, %s132
    %s134 = sphi 0, %s132
    %s135 = sphi 0, %s134
    %s149 = sphi 0, %s135
    %s157 = sphi 0, %s159
    %s160 = sphi 0, %s157
    %s161 = sphi 0, %s160
    %s177 = sphi 0, %s161
    %s185 = sphi 0, %s187
    %s188 = sphi 0, %s185
    %s189 = sphi 0, %s188
    %s205 = sphi 0, %s189
  $region4: #{stacked_conv_layers.4} parent=0 // loop_header_branch
    %15 = sbr.rel (%p13) target = $region8
  $region5: #{stacked_conv_layers.4} parent=0 // loop_body
    %s17 = ssub.s32 %s12, 1
    %s18 = ssub.s32 %s12, 2
    %s25 = sadd.s32 1, %s20
    %p26 = scmp.ge.s32.totalorder %s25, 1
    %s27 = scalar_select %p26, 0, %s25
    %s28 = sadd.s32 1, %s19
    %s29 = scalar_select %p26, %s28, %s19
    %p30 = scmp.ge.s32.totalorder %s29, 2
    %s31 = scalar_select %p30, 0, %s29
    %s32 = smul.u32 %s20, 16
    %s33 = ssub.s32 %s32, 1
    %p34 = scmp.gt.s32.totalorder %s33, 0
    %s35 = scalar_select %p34, %s33, 0
    %s36 = smul.u32 %s27, 16
    %s37 = ssub.s32 %s36, 1
    %p38 = scmp.gt.s32.totalorder %s37, 0
    %s39 = scalar_select %p38, %s37, 0
    %s40 = ssub.s32 %s19, %s31
    %s41 = ssub.s32 %s35, %s39
    %s42 = sor.u32 %s40, %s41
    %p43 = scmp.eq.s32.totalorder %s42, 0
    %s45 = sadd.s32 %s44, 1
    %s46 = scalar_select %p43, %s44, %s45
    %p49 = pneg %p43
    %p50 = scmp.eq.s32.totalorder %s12, 1
    %p51 = por %p49, %p50
    %p52 = scmp.ne.s32.totalorder %s44, %s47
    %p53 = scmp.eq.s32.totalorder %s12, 0
    %p54 = por %p52, %p53
    %p55 = scmp.ne.s32.totalorder %s44, %s47
    %p56 = scmp.eq.s32.totalorder %s17, 1
    %p57 = por %p55, %p56
    %p58 = scmp.ne.s32.totalorder %s47, %s48
    %p59 = scmp.eq.s32.totalorder %s17, 0
    %p60 = por %p58, %p59
    %p61 = scmp.ne.s32.totalorder %s47, %s48
    %p62 = scmp.eq.s32.totalorder %s18, 1
    %p63 = por %p61, %p62
    %p65 = scmp.ne.s32.totalorder %s48, %s64
    %p66 = scmp.eq.s32.totalorder %s18, 0
    %p67 = por %p65, %p66
    %s68 = ssub.s32 %s19, %s31
    %s69 = ssub.s32 %s20, %s27
    %s70 = sor.u32 %s68, %s69
    %p71 = scmp.eq.s32.totalorder %s70, 0
    %s73 = sadd.s32 %s72, 1
    %s74 = scalar_select %p71, %s72, %s73
    %p77 = pneg %p71
    %p78 = scmp.eq.s32.totalorder %s12, 1
    %p79 = por %p77, %p78
    %p80 = scmp.ne.s32.totalorder %s72, %s75
    %p81 = scmp.eq.s32.totalorder %s12, 0
    %p82 = por %p80, %p81
    %p83 = scmp.ne.s32.totalorder %s72, %s75
    %p84 = scmp.eq.s32.totalorder %s17, 1
    %p85 = por %p83, %p84
    %p86 = scmp.ne.s32.totalorder %s75, %s76
    %p87 = scmp.eq.s32.totalorder %s17, 0
    %p88 = por %p86, %p87
    %p89 = scmp.ne.s32.totalorder %s75, %s76
    %p90 = scmp.eq.s32.totalorder %s18, 1
    %p91 = por %p89, %p90
    %p93 = scmp.ne.s32.totalorder %s76, %s92
    %p94 = scmp.eq.s32.totalorder %s18, 0
    %p95 = por %p93, %p94
    %s96 = smul.u32 %s20, 16
    %s97 = sadd.s32 %s96, 16
    %p98 = scmp.lt.s32.totalorder %s97, 15
    %s99 = scalar_select %p98, %s97, 15
    %s100 = smul.u32 %s27, 16
    %s101 = sadd.s32 %s100, 16
    %p102 = scmp.lt.s32.totalorder %s101, 15
    %s103 = scalar_select %p102, %s101, 15
    %s104 = ssub.s32 %s19, %s31
    %s105 = ssub.s32 %s99, %s103
    %s106 = sor.u32 %s104, %s105
    %p107 = scmp.eq.s32.totalorder %s106, 0
    %s109 = sadd.s32 %s108, 1
    %s110 = scalar_select %p107, %s108, %s109
    %p113 = pneg %p107
    %p114 = scmp.eq.s32.totalorder %s12, 1
    %p115 = por %p113, %p114
    %p116 = scmp.ne.s32.totalorder %s108, %s111
    %p117 = scmp.eq.s32.totalorder %s12, 0
    %p118 = por %p116, %p117
    %p119 = scmp.ne.s32.totalorder %s108, %s111
    %p120 = scmp.eq.s32.totalorder %s17, 1
    %p121 = por %p119, %p120
    %p122 = scmp.ne.s32.totalorder %s111, %s112
    %p123 = scmp.eq.s32.totalorder %s17, 0
    %p124 = por %p122, %p123
    %p125 = scmp.ne.s32.totalorder %s111, %s112
    %p126 = scmp.eq.s32.totalorder %s18, 1
    %p127 = por %p125, %p126
    %p129 = scmp.ne.s32.totalorder %s112, %s128
    %p130 = scmp.eq.s32.totalorder %s18, 0
    %p131 = por %p129, %p130
    %s133 = sadd.s32 %s132, 1
    %p136 = scmp.eq.s32.totalorder %s12, 1
    %p137 = scmp.ne.s32.totalorder %s132, %s134
    %p138 = scmp.eq.s32.totalorder %s12, 0
    %p139 = por %p137, %p138
    %p140 = scmp.ne.s32.totalorder %s132, %s134
    %p141 = scmp.eq.s32.totalorder %s17, 1
    %p142 = por %p140, %p141
    %p143 = scmp.ne.s32.totalorder %s134, %s135
    %p144 = scmp.eq.s32.totalorder %s17, 0
    %p145 = por %p143, %p144
    %p146 = scmp.ne.s32.totalorder %s134, %s135
    %p147 = scmp.eq.s32.totalorder %s18, 1
    %p148 = por %p146, %p147
    %p150 = scmp.ne.s32.totalorder %s135, %s149
    %p151 = scmp.eq.s32.totalorder %s18, 0
    %p152 = por %p150, %p151
    %s153 = sadd.s32 %s19, %s20
    %s154 = sadd.s32 %s31, %s27
    %s155 = ssub.s32 %s153, %s154
    %p156 = scmp.eq.s32.totalorder %s155, 0
    %s158 = sadd.s32 %s157, 1
    %s159 = scalar_select %p156, %s157, %s158
    %p162 = pneg %p156
    %p163 = scmp.eq.s32.totalorder %s12, 1
    %p164 = por %p162, %p163
    %p165 = scmp.ne.s32.totalorder %s157, %s160
    %p166 = scmp.eq.s32.totalorder %s12, 0
    %p167 = por %p165, %p166
    %p168 = scmp.ne.s32.totalorder %s157, %s160
    %p169 = scmp.eq.s32.totalorder %s17, 1
    %p170 = por %p168, %p169
    %p171 = scmp.ne.s32.totalorder %s160, %s161
    %p172 = scmp.eq.s32.totalorder %s17, 0
    %p173 = por %p171, %p172
    %p174 = scmp.ne.s32.totalorder %s160, %s161
    %p175 = scmp.eq.s32.totalorder %s18, 1
    %p176 = por %p174, %p175
    %p178 = scmp.ne.s32.totalorder %s161, %s177
    %p179 = scmp.eq.s32.totalorder %s18, 0
    %p180 = por %p178, %p179
    %s181 = ssub.s32 %s19, %s31
    %s182 = ssub.s32 %s20, %s27
    %s183 = sor.u32 %s181, %s182
    %p184 = scmp.eq.s32.totalorder %s183, 0
    %s186 = sadd.s32 %s185, 1
    %s187 = scalar_select %p184, %s185, %s186
    %p190 = pneg %p184
    %p191 = scmp.eq.s32.totalorder %s12, 1
    %p192 = por %p190, %p191
    %p193 = scmp.ne.s32.totalorder %s185, %s188
    %p194 = scmp.eq.s32.totalorder %s12, 0
    %p195 = por %p193, %p194
    %p196 = scmp.ne.s32.totalorder %s185, %s188
    %p197 = scmp.eq.s32.totalorder %s17, 1
    %p198 = por %p196, %p197
    %p199 = scmp.ne.s32.totalorder %s188, %s189
    %p200 = scmp.eq.s32.totalorder %s17, 0
    %p201 = por %p199, %p200
    %p202 = scmp.ne.s32.totalorder %s188, %s189
    %p203 = scmp.eq.s32.totalorder %s18, 1
    %p204 = por %p202, %p203
    %p206 = scmp.ne.s32.totalorder %s189, %s205
    %p207 = scmp.eq.s32.totalorder %s18, 0
    %p208 = por %p206, %p207
    %p209 = scmp.le.s32.totalorder 1, %s12
    %p210 = scmp.lt.s32.totalorder %s12, 3
    %p211 = pnand %p209, %p210
    %p212 = pneg %p211
    // Predicated region
    $region9: #{stacked_conv_layers.4} parent=5 // pred_check
      _
    $region10: #{stacked_conv_layers.4} parent=5 // pred_check_branch
      %214 = sbr.rel (%p211) target = $region12
    $region11: #{stacked_conv_layers.4} parent=5 // pred_region
      %s215 = ssub.s32 %s12, 1
      // Predicated region
      $region13: #{stacked_conv_layers.4} parent=11 // pred_check
        %p216 = pneg %p145
      $region14: #{stacked_conv_layers.4} parent=11 // pred_check_branch
        %218 = sbr.rel (%p216) target = $region16
      $region15: #{stacked_conv_layers.4} parent=11 // pred_region
        _
      $region16: #{stacked_conv_layers.4} parent=11 // pred_fallthru
        _
    $region12: #{stacked_conv_layers.4} parent=5 // pred_fallthru
      _
    %p219 = scmp.lt.s32.totalorder %s12, 2
    // Predicated region
    $region17: #{stacked_conv_layers.4} parent=5 // pred_check
      %p220 = pneg %p219
    $region18: #{stacked_conv_layers.4} parent=5 // pred_check_branch
      %222 = sbr.rel (%p220) target = $region20
    $region19: #{stacked_conv_layers.4} parent=5 // pred_region
      // Predicated region
      $region21: #{stacked_conv_layers.4} parent=19 // pred_check
        %p223 = pneg %p54
      $region22: #{stacked_conv_layers.4} parent=19 // pred_check_branch
        %225 = sbr.rel (%p223) target = $region24
      $region23: #{stacked_conv_layers.4} parent=19 // pred_region
        %s226 = smul.u32 %s20, 16
        %s227 = ssub.s32 %s226, 1
        %p228 = scmp.gt.s32.totalorder %s227, 0
        %s229 = scalar_select %p228, %s227, 0
        %p230 = scmp.lt.s32.totalorder %s19, 1
        %s231 = scalar_select %p230, %s19, 1
        %p232 = scmp.lt.s32.totalorder %s229, 15
        %s233 = scalar_select %p232, %s229, 15
        %s234 = smul.addr %s233, 3
        %s235 = smul.addr %s231, 48
        %s236 = sadd.s32 %s234, %s235
        %s237 = smul.addr %s236, 4
        %s238 = scalar_lea.vmem %s0, %s237
        %s239 = smul.u32 %s20, 16
        %s240 = ssub.s32 %s239, 1
        %p241 = scmp.gt.s32.totalorder %s240, 0
        %s242 = scalar_select %p241, %s240, 0
      $region24: #{stacked_conv_layers.4} parent=19 // pred_fallthru
        _
      // Predicated region
      $region25: #{stacked_conv_layers.4} parent=19 // pred_check
        %p243 = pneg %p82
      $region26: #{stacked_conv_layers.4} parent=19 // pred_check_branch
        %245 = sbr.rel (%p243) target = $region28
      $region27: #{stacked_conv_layers.4} parent=19 // pred_region
        %s246 = smul.u32 16, %s20
        %p247 = scmp.lt.s32.totalorder %s19, 1
        %s248 = scalar_select %p247, %s19, 1
        %p249 = scmp.lt.s32.totalorder %s246, 15
        %s250 = scalar_select %p249, %s246, 15
        %s251 = smul.addr %s250, 3
        %s252 = smul.addr %s248, 48
        %s253 = sadd.s32 %s251, %s252
        %s254 = smul.addr %s253, 4
        %s255 = scalar_lea.vmem %s1, %s254
        %s256 = smul.u32 16, %s20
      $region28: #{stacked_conv_layers.4} parent=19 // pred_fallthru
        _
      // Predicated region
      $region29: #{stacked_conv_layers.4} parent=19 // pred_check
        %p257 = pneg %p118
      $region30: #{stacked_conv_layers.4} parent=19 // pred_check_branch
        %259 = sbr.rel (%p257) target = $region32
      $region31: #{stacked_conv_layers.4} parent=19 // pred_region
        %s260 = smul.u32 %s20, 16
        %s261 = sadd.s32 %s260, 16
        %p262 = scmp.lt.s32.totalorder %s261, 15
        %s263 = scalar_select %p262, %s261, 15
        %p264 = scmp.lt.s32.totalorder %s19, 1
        %s265 = scalar_select %p264, %s19, 1
        %p266 = scmp.lt.s32.totalorder %s263, 15
        %s267 = scalar_select %p266, %s263, 15
        %s268 = smul.addr %s267, 3
        %s269 = smul.addr %s265, 48
        %s270 = sadd.s32 %s268, %s269
        %s271 = smul.addr %s270, 4
        %s272 = scalar_lea.vmem %s2, %s271
        %s273 = smul.u32 %s20, 16
        %s274 = sadd.s32 %s273, 16
        %p275 = scmp.lt.s32.totalorder %s274, 15
        %s276 = scalar_select %p275, %s274, 15
      $region32: #{stacked_conv_layers.4} parent=19 // pred_fallthru
        _
    $region20: #{stacked_conv_layers.4} parent=5 // pred_fallthru
      _
    %p277 = scmp.le.s32.totalorder 1, %s12
    %p278 = scmp.lt.s32.totalorder %s12, 3
    %p279 = pnand %p277, %p278
    %p280 = pneg %p279
    // Predicated region
    $region33: #{stacked_conv_layers.4} parent=5 // pred_check
      _
    $region34: #{stacked_conv_layers.4} parent=5 // pred_check_branch
      %282 = sbr.rel (%p279) target = $region36
    $region35: #{stacked_conv_layers.4} parent=5 // pred_region
      %s283 = ssub.s32 %s12, 1
      %s284 = smul.u32 %s22, 16
      %s285 = ssub.s32 %s284, 1
      %p286 = scmp.gt.s32.totalorder %s285, 0
      %s287 = scalar_select %p286, %s285, 0
      %p288 = scmp.lt.s32.totalorder %s21, 1
      %s289 = scalar_select %p288, %s21, 1
      %p290 = scmp.lt.s32.totalorder %s287, 15
      %s291 = scalar_select %p290, %s287, 15
      %s292 = smul.addr %s291, 3
      %s293 = smul.addr %s289, 48
      %s294 = sadd.s32 %s292, %s293
      %s295 = smul.addr %s294, 4
      %s296 = scalar_lea.vmem %s0, %s295
      %p297 = pneg %p60
      %p298 = pneg %p57
      %s299 = smul.u32 16, %s22
      %p300 = scmp.lt.s32.totalorder %s21, 1
      %s301 = scalar_select %p300, %s21, 1
      %p302 = scmp.lt.s32.totalorder %s299, 15
      %s303 = scalar_select %p302, %s299, 15
      %s304 = smul.addr %s303, 3
      %s305 = smul.addr %s301, 48
      %s306 = sadd.s32 %s304, %s305
      %s307 = smul.addr %s306, 4
      %s308 = scalar_lea.vmem %s1, %s307
      %p309 = pneg %p88
      %p310 = pneg %p85
      %s311 = smul.u32 %s22, 16
      %s312 = sadd.s32 %s311, 16
      %p313 = scmp.lt.s32.totalorder %s312, 15
      %s314 = scalar_select %p313, %s312, 15
      %p315 = scmp.lt.s32.totalorder %s21, 1
      %s316 = scalar_select %p315, %s21, 1
      %p317 = scmp.lt.s32.totalorder %s314, 15
      %s318 = scalar_select %p317, %s314, 15
      %s319 = smul.addr %s318, 3
      %s320 = smul.addr %s316, 48
      %s321 = sadd.s32 %s319, %s320
      %s322 = smul.addr %s321, 4
      %s323 = scalar_lea.vmem %s2, %s322
      %p324 = pneg %p124
      %p325 = pneg %p121
      %p326 = pneg %p145
      %p327 = pneg %p142
      %p328 = pneg %p173
      %p329 = pneg %p170
      %s330 = sadd.s32 %s21, %s22
      %s331 = smul.u32 32, %s330
      %p332 = scmp.lt.s32.totalorder %s331, 63
      %s333 = scalar_select %p332, %s331, 63
      %s334 = smul.addr %s333, 4
      %s335 = scalar_lea.vmem %s4, %s334
      %p336 = pneg %p201
      %p337 = pneg %p198
      %p338 = scmp.lt.s32.totalorder %s21, 1
      %s339 = scalar_select %p338, %s21, 1
      %p340 = scmp.lt.s32.totalorder %s22, 0
      %s341 = scalar_select %p340, %s22, 0
      %s342 = sadd.s32 %s341, %s339
      %s343 = smul.addr %s342, 2
      %s344 = scalar_lea.vmem %s5, %s343
      %s345 = smul.u32 %s22, 16
      %s346 = ssub.s32 %s345, 1
      %p347 = scmp.gt.s32.totalorder %s346, 0
      %s348 = scalar_select %p347, %s346, 0
      %p349 = scmp.lt.s32.totalorder %s21, 1
      %s350 = scalar_select %p349, %s21, 1
      %p351 = scmp.lt.s32.totalorder %s348, 15
      %s352 = scalar_select %p351, %s348, 15
      %s353 = smul.addr %s352, 3
      %s354 = smul.addr %s350, 48
      %s355 = sadd.s32 %s353, %s354
      %s356 = smul.addr %s355, 4
      %s357 = scalar_lea.vmem %s0, %s356
      %s358 = smul.u32 %s22, 16
      %s359 = ssub.s32 %s358, 1
      %p360 = scmp.gt.s32.totalorder %s359, 0
      %s361 = scalar_select %p360, %s359, 0
      %s362 = smul.u32 16, %s22
      %p363 = scmp.lt.s32.totalorder %s21, 1
      %s364 = scalar_select %p363, %s21, 1
      %p365 = scmp.lt.s32.totalorder %s362, 15
      %s366 = scalar_select %p365, %s362, 15
      %s367 = smul.addr %s366, 3
      %s368 = smul.addr %s364, 48
      %s369 = sadd.s32 %s367, %s368
      %s370 = smul.addr %s369, 4
      %s371 = scalar_lea.vmem %s1, %s370
      %s372 = smul.u32 16, %s22
      %s373 = smul.u32 %s22, 16
      %s374 = sadd.s32 %s373, 16
      %p375 = scmp.lt.s32.totalorder %s374, 15
      %s376 = scalar_select %p375, %s374, 15
      %p377 = scmp.lt.s32.totalorder %s21, 1
      %s378 = scalar_select %p377, %s21, 1
      %p379 = scmp.lt.s32.totalorder %s376, 15
      %s380 = scalar_select %p379, %s376, 15
      %s381 = smul.addr %s380, 3
      %s382 = smul.addr %s378, 48
      %s383 = sadd.s32 %s381, %s382
      %s384 = smul.addr %s383, 4
      %s385 = scalar_lea.vmem %s2, %s384
      %s386 = smul.u32 %s22, 16
      %s387 = sadd.s32 %s386, 16
      %p388 = scmp.lt.s32.totalorder %s387, 15
      %s389 = scalar_select %p388, %s387, 15
      %s390 = sadd.s32 %s21, %s22
      %s391 = smul.u32 32, %s390
      %p392 = scmp.lt.s32.totalorder %s391, 63
      %s393 = scalar_select %p392, %s391, 63
      %s394 = smul.addr %s393, 4
      %s395 = scalar_lea.vmem %s4, %s394
      %s396 = sadd.s32 %s21, %s22
      %s397 = smul.u32 32, %s396
      %p398 = scmp.lt.s32.totalorder %s21, 1
      %s399 = scalar_select %p398, %s21, 1
      %p400 = scmp.lt.s32.totalorder %s22, 0
      %s401 = scalar_select %p400, %s22, 0
      %s402 = sadd.s32 %s401, %s399
      %s403 = smul.addr %s402, 2
      %s404 = scalar_lea.vmem %s5, %s403
      %p406 = scmp.gt.s32.totalorder %s22, 0
      %s407 = scalar_select %p406, 1.0, 0.0
      %p409 = scmp.ne.f32.partialorder %s407, %s407
      %s410 = sshrl.u32 %s407, 16
      %s411 = sand.u32 %s410, 1
      %s412 = sadd.s32 32767, %s411
      %s413 = sadd.s32 %s407, %s412
      %s414 = sand.u32 %s413, 4294901760
      %s415 = scalar_select %p409, 2143289344, %s414
      %s417 = sshrl.u32 %s415, 16
      %p418 = scmp.lt.s32.totalorder %s22, 0
      %s419 = scalar_select %p418, 1.0, 0.0
      %p421 = scmp.ne.f32.partialorder %s419, %s419
      %s422 = sshrl.u32 %s419, 16
      %s423 = sand.u32 %s422, 1
      %s424 = sadd.s32 32767, %s423
      %s425 = sadd.s32 %s419, %s424
      %s426 = sand.u32 %s425, 4294901760
      %s427 = scalar_select %p421, 2143289344, %s426
      %s429 = sshrl.u32 %s427, 16
      %v430 = vld [vmem:[%s357] sm:$0xf]
      %v431 = vld [vmem:[%s357 + $0x4] sm:$0xf]
      %v432 = vld [vmem:[%s357 + $0x8] sm:$0x1]
      %s433 = sshll.u32 %s417, 16
      %s434 = sor.u32 %s417, %s433
      %v435 = vstv %s434
      %v437 = vmul.bf16 %v430, %v435
      %v438 = vmul.bf16 %v431, %v435
      %v439 = vmul.bf16 %v432, %v435
      %v440 = vld [vmem:[%s371] sm:$0xf]
      %v441 = vld [vmem:[%s371 + $0x4] sm:$0xf]
      %v442 = vld [vmem:[%s371 + $0x8] sm:$0x1]
      %v443 = vld [vmem:[%s371 + $0xc] sm:$0xf]
      %v444 = vld [vmem:[%s371 + $0x10] sm:$0xf]
      %v445 = vld [vmem:[%s371 + $0x14] sm:$0x1]
      %v446 = vld [vmem:[%s371 + $0x18] sm:$0xf]
      %v447 = vld [vmem:[%s371 + $0x1c] sm:$0xf]
      %v448 = vld [vmem:[%s371 + $0x20] sm:$0x1]
      %v449 = vld [vmem:[%s371 + $0x24] sm:$0xf]
      %v450 = vld [vmem:[%s371 + $0x28] sm:$0xf]
      %v451 = vld [vmem:[%s371 + $0x2c] sm:$0x1]
      %v452 = vld [vmem:[%s371 + $0x30] sm:$0xf]
      %v453 = vld [vmem:[%s371 + $0x34] sm:$0xf]
      %v454 = vld [vmem:[%s371 + $0x38] sm:$0x1]
      %v455 = vld [vmem:[%s371 + $0x3c] sm:$0xf]
      %v456 = vld [vmem:[%s371 + $0x40] sm:$0xf]
      %v457 = vld [vmem:[%s371 + $0x44] sm:$0x1]
      %v458 = vld [vmem:[%s371 + $0x48] sm:$0xf]
      %v459 = vld [vmem:[%s371 + $0x4c] sm:$0xf]
      %v460 = vld [vmem:[%s371 + $0x50] sm:$0x1]
      %v461 = vld [vmem:[%s371 + $0x54] sm:$0xf]
      %v462 = vld [vmem:[%s371 + $0x58] sm:$0xf]
      %v463 = vld [vmem:[%s371 + $0x5c] sm:$0x1]
      %v464 = vld [vmem:[%s371 + $0x60] sm:$0xf]
      %v465 = vld [vmem:[%s371 + $0x64] sm:$0xf]
      %v466 = vld [vmem:[%s371 + $0x68] sm:$0x1]
      %v467 = vld [vmem:[%s371 + $0x6c] sm:$0xf]
      %v468 = vld [vmem:[%s371 + $0x70] sm:$0xf]
      %v469 = vld [vmem:[%s371 + $0x74] sm:$0x1]
      %v470 = vld [vmem:[%s371 + $0x78] sm:$0xf]
      %v471 = vld [vmem:[%s371 + $0x7c] sm:$0xf]
      %v472 = vld [vmem:[%s371 + $0x80] sm:$0x1]
      %v473 = vld [vmem:[%s371 + $0x84] sm:$0xf]
      %v474 = vld [vmem:[%s371 + $0x88] sm:$0xf]
      %v475 = vld [vmem:[%s371 + $0x8c] sm:$0x1]
      %v476 = vld [vmem:[%s371 + $0x90] sm:$0xf]
      %v477 = vld [vmem:[%s371 + $0x94] sm:$0xf]
      %v478 = vld [vmem:[%s371 + $0x98] sm:$0x1]
      %v479 = vld [vmem:[%s371 + $0x9c] sm:$0xf]
      %v480 = vld [vmem:[%s371 + $0xa0] sm:$0xf]
      %v481 = vld [vmem:[%s371 + $0xa4] sm:$0x1]
      %v482 = vld [vmem:[%s371 + $0xa8] sm:$0xf]
      %v483 = vld [vmem:[%s371 + $0xac] sm:$0xf]
      %v484 = vld [vmem:[%s371 + $0xb0] sm:$0x1]
      %v485 = vld [vmem:[%s371 + $0xb4] sm:$0xf]
      %v486 = vld [vmem:[%s371 + $0xb8] sm:$0xf]
      %v487 = vld [vmem:[%s371 + $0xbc] sm:$0x1]
      %v488 = vld [vmem:[%s385] sm:$0xf]
      %v489 = vld [vmem:[%s385 + $0x4] sm:$0xf]
      %v490 = vld [vmem:[%s385 + $0x8] sm:$0x1]
      %s491 = sshll.u32 %s429, 16
      %s492 = sor.u32 %s429, %s491
      %v493 = vstv %s492
      %v495 = vmul.bf16 %v488, %v493
      %v496 = vmul.bf16 %v489, %v493
      %v497 = vmul.bf16 %v490, %v493
      %v530 = vunpack.c.l.b16 %v437
      %v531 = vunpack.c.l.b16 %v438
      %v532 = vunpack.c.l.b16 %v440
      %v533 = vunpack.c.l.b16 %v441
      %v534 = vunpack.c.l.b16 %v443
      %v535 = vunpack.c.l.b16 %v444
      %v536 = vunpack.c.l.b16 %v446
      %v537 = vunpack.c.l.b16 %v447
      %v538 = vunpack.c.l.b16 %v449
      %v539 = vunpack.c.l.b16 %v450
      %v540 = vunpack.c.l.b16 %v452
      %v541 = vunpack.c.l.b16 %v453
      %v542 = vunpack.c.l.b16 %v455
      %v543 = vunpack.c.l.b16 %v456
      %v544 = vunpack.c.l.b16 %v458
      %v545 = vunpack.c.l.b16 %v459
      %v546 = vunpack.c.l.b16 %v461
      %v547 = vunpack.c.l.b16 %v462
      %v548 = vunpack.c.l.b16 %v464
      %v549 = vunpack.c.l.b16 %v465
      %v550 = vunpack.c.l.b16 %v467
      %v551 = vunpack.c.l.b16 %v468
      %v552 = vunpack.c.l.b16 %v470
      %v553 = vunpack.c.l.b16 %v471
      %v554 = vunpack.c.l.b16 %v473
      %v555 = vunpack.c.l.b16 %v474
      %v556 = vunpack.c.l.b16 %v476
      %v557 = vunpack.c.l.b16 %v477
      %v558 = vunpack.c.l.b16 %v479
      %v559 = vunpack.c.l.b16 %v480
      %v560 = vunpack.c.l.b16 %v482
      %v561 = vunpack.c.l.b16 %v483
      %v562 = vpack.c.b16 %v531, %v530
      %v563 = vpack.c.b16 %v533, %v532
      %v564 = vpack.c.b16 %v535, %v534
      %v565 = vpack.c.b16 %v537, %v536
      %v566 = vpack.c.b16 %v539, %v538
      %v567 = vpack.c.b16 %v541, %v540
      %v568 = vpack.c.b16 %v543, %v542
      %v569 = vpack.c.b16 %v545, %v544
      %v570 = vpack.c.b16 %v547, %v546
      %v571 = vpack.c.b16 %v549, %v548
      %v572 = vpack.c.b16 %v551, %v550
      %v573 = vpack.c.b16 %v553, %v552
      %v574 = vpack.c.b16 %v555, %v554
      %v575 = vpack.c.b16 %v557, %v556
      %v576 = vpack.c.b16 %v559, %v558
      %v577 = vpack.c.b16 %v561, %v560
      %v594 = vunpack.c.l.b16 %v439
      %v595 = vunpack.c.l.b16 %v442
      %v596 = vunpack.c.l.b16 %v445
      %v597 = vunpack.c.l.b16 %v448
      %v598 = vunpack.c.l.b16 %v451
      %v599 = vunpack.c.l.b16 %v454
      %v600 = vunpack.c.l.b16 %v457
      %v601 = vunpack.c.l.b16 %v460
      %v602 = vunpack.c.l.b16 %v463
      %v603 = vunpack.c.l.b16 %v466
      %v604 = vunpack.c.l.b16 %v469
      %v605 = vunpack.c.l.b16 %v472
      %v606 = vunpack.c.l.b16 %v475
      %v607 = vunpack.c.l.b16 %v478
      %v608 = vunpack.c.l.b16 %v481
      %v609 = vunpack.c.l.b16 %v484
      %v610 = vpack.c.b16 %v594, %v594
      %v611 = vpack.c.b16 %v595, %v595
      %v612 = vpack.c.b16 %v596, %v596
      %v613 = vpack.c.b16 %v597, %v597
      %v614 = vpack.c.b16 %v598, %v598
      %v615 = vpack.c.b16 %v599, %v599
      %v616 = vpack.c.b16 %v600, %v600
      %v617 = vpack.c.b16 %v601, %v601
      %v618 = vpack.c.b16 %v602, %v602
      %v619 = vpack.c.b16 %v603, %v603
      %v620 = vpack.c.b16 %v604, %v604
      %v621 = vpack.c.b16 %v605, %v605
      %v622 = vpack.c.b16 %v606, %v606
      %v623 = vpack.c.b16 %v607, %v607
      %v624 = vpack.c.b16 %v608, %v608
      %v625 = vpack.c.b16 %v609, %v609
      %vm626 = vsmask.f32 7424
      %v628 = vshrl.u32 %v562, 16
      %v630 = vshll.u32 %v562, 16
      %v632 = vrot.slane %v630, 1
      %v633 = vor.u32 %v628, %v632
      %v635 = vshll.u32 %v610, 16
      %v637 = vrot.slane %v635, 1
      %v638 = vsel %vm626, %v633, %v637
      %v640 = vshrl.u32 %v563, 16
      %v642 = vshll.u32 %v563, 16
      %v644 = vrot.slane %v642, 1
      %v645 = vor.u32 %v640, %v644
      %v647 = vshll.u32 %v611, 16
      %v649 = vrot.slane %v647, 1
      %v650 = vsel %vm626, %v645, %v649
      %v652 = vshrl.u32 %v564, 16
      %v654 = vshll.u32 %v564, 16
      %v656 = vrot.slane %v654, 1
      %v657 = vor.u32 %v652, %v656
      %v659 = vshll.u32 %v612, 16
      %v661 = vrot.slane %v659, 1
      %v662 = vsel %vm626, %v657, %v661
      %v664 = vshrl.u32 %v565, 16
      %v666 = vshll.u32 %v565, 16
      %v668 = vrot.slane %v666, 1
      %v669 = vor.u32 %v664, %v668
      %v671 = vshll.u32 %v613, 16
      %v673 = vrot.slane %v671, 1
      %v674 = vsel %vm626, %v669, %v673
      %v676 = vshrl.u32 %v566, 16
      %v678 = vshll.u32 %v566, 16
      %v680 = vrot.slane %v678, 1
      %v681 = vor.u32 %v676, %v680
      %v683 = vshll.u32 %v614, 16
      %v685 = vrot.slane %v683, 1
      %v686 = vsel %vm626, %v681, %v685
      %v688 = vshrl.u32 %v567, 16
      %v690 = vshll.u32 %v567, 16
      %v692 = vrot.slane %v690, 1
      %v693 = vor.u32 %v688, %v692
      %v695 = vshll.u32 %v615, 16
      %v697 = vrot.slane %v695, 1
      %v698 = vsel %vm626, %v693, %v697
      %v700 = vshrl.u32 %v568, 16
      %v702 = vshll.u32 %v568, 16
      %v704 = vrot.slane %v702, 1
      %v705 = vor.u32 %v700, %v704
      %v707 = vshll.u32 %v616, 16
      %v709 = vrot.slane %v707, 1
      %v710 = vsel %vm626, %v705, %v709
      %v712 = vshrl.u32 %v569, 16
      %v714 = vshll.u32 %v569, 16
      %v716 = vrot.slane %v714, 1
      %v717 = vor.u32 %v712, %v716
      %v719 = vshll.u32 %v617, 16
      %v721 = vrot.slane %v719, 1
      %v722 = vsel %vm626, %v717, %v721
      %v724 = vshrl.u32 %v570, 16
      %v726 = vshll.u32 %v570, 16
      %v728 = vrot.slane %v726, 1
      %v729 = vor.u32 %v724, %v728
      %v731 = vshll.u32 %v618, 16
      %v733 = vrot.slane %v731, 1
      %v734 = vsel %vm626, %v729, %v733
      %v736 = vshrl.u32 %v571, 16
      %v738 = vshll.u32 %v571, 16
      %v740 = vrot.slane %v738, 1
      %v741 = vor.u32 %v736, %v740
      %v743 = vshll.u32 %v619, 16
      %v745 = vrot.slane %v743, 1
      %v746 = vsel %vm626, %v741, %v745
      %v748 = vshrl.u32 %v572, 16
      %v750 = vshll.u32 %v572, 16
      %v752 = vrot.slane %v750, 1
      %v753 = vor.u32 %v748, %v752
      %v755 = vshll.u32 %v620, 16
      %v757 = vrot.slane %v755, 1
      %v758 = vsel %vm626, %v753, %v757
      %v760 = vshrl.u32 %v573, 16
      %v762 = vshll.u32 %v573, 16
      %v764 = vrot.slane %v762, 1
      %v765 = vor.u32 %v760, %v764
      %v767 = vshll.u32 %v621, 16
      %v769 = vrot.slane %v767, 1
      %v770 = vsel %vm626, %v765, %v769
      %v772 = vshrl.u32 %v574, 16
      %v774 = vshll.u32 %v574, 16
      %v776 = vrot.slane %v774, 1
      %v777 = vor.u32 %v772, %v776
      %v779 = vshll.u32 %v622, 16
      %v781 = vrot.slane %v779, 1
      %v782 = vsel %vm626, %v777, %v781
      %v784 = vshrl.u32 %v575, 16
      %v786 = vshll.u32 %v575, 16
      %v788 = vrot.slane %v786, 1
      %v789 = vor.u32 %v784, %v788
      %v791 = vshll.u32 %v623, 16
      %v793 = vrot.slane %v791, 1
      %v794 = vsel %vm626, %v789, %v793
      %v796 = vshrl.u32 %v576, 16
      %v798 = vshll.u32 %v576, 16
      %v800 = vrot.slane %v798, 1
      %v801 = vor.u32 %v796, %v800
      %v803 = vshll.u32 %v624, 16
      %v805 = vrot.slane %v803, 1
      %v806 = vsel %vm626, %v801, %v805
      %v808 = vshrl.u32 %v577, 16
      %v810 = vshll.u32 %v577, 16
      %v812 = vrot.slane %v810, 1
      %v813 = vor.u32 %v808, %v812
      %v815 = vshll.u32 %v625, 16
      %v817 = vrot.slane %v815, 1
      %v818 = vsel %vm626, %v813, %v817
      %819 = vrot.lane.b32.xlu0 %v638, 4
      %v820 = vpop.permute.xlu0 %819
      %821 = vrot.lane.b32.xlu0 %v650, 4
      %v822 = vpop.permute.xlu0 %821
      %823 = vrot.lane.b32.xlu0 %v662, 4
      %v824 = vpop.permute.xlu0 %823
      %825 = vrot.lane.b32.xlu0 %v674, 4
      %v826 = vpop.permute.xlu0 %825
      %827 = vrot.lane.b32.xlu0 %v686, 4
      %v828 = vpop.permute.xlu0 %827
      %829 = vrot.lane.b32.xlu0 %v698, 4
      %v830 = vpop.permute.xlu0 %829
      %831 = vrot.lane.b32.xlu0 %v710, 4
      %v832 = vpop.permute.xlu0 %831
      %833 = vrot.lane.b32.xlu0 %v722, 4
      %v834 = vpop.permute.xlu0 %833
      %835 = vrot.lane.b32.xlu0 %v734, 4
      %v836 = vpop.permute.xlu0 %835
      %837 = vrot.lane.b32.xlu0 %v746, 4
      %v838 = vpop.permute.xlu0 %837
      %839 = vrot.lane.b32.xlu0 %v758, 4
      %v840 = vpop.permute.xlu0 %839
      %841 = vrot.lane.b32.xlu0 %v770, 4
      %v842 = vpop.permute.xlu0 %841
      %843 = vrot.lane.b32.xlu0 %v782, 4
      %v844 = vpop.permute.xlu0 %843
      %845 = vrot.lane.b32.xlu0 %v794, 4
      %v846 = vpop.permute.xlu0 %845
      %847 = vrot.lane.b32.xlu0 %v806, 4
      %v848 = vpop.permute.xlu0 %847
      %849 = vrot.lane.b32.xlu0 %v818, 4
      %v850 = vpop.permute.xlu0 %849
      %vm851 = vcmask 1046528
      %v852 = vrot.slane %v562, 1
      %v853 = vrot.slane %v610, 1
      %v854 = vsel %vm851, %v852, %v853
      %v855 = vrot.slane %v563, 1
      %v856 = vrot.slane %v611, 1
      %v857 = vsel %vm851, %v855, %v856
      %v858 = vrot.slane %v564, 1
      %v859 = vrot.slane %v612, 1
      %v860 = vsel %vm851, %v858, %v859
      %v861 = vrot.slane %v565, 1
      %v862 = vrot.slane %v613, 1
      %v863 = vsel %vm851, %v861, %v862
      %v864 = vrot.slane %v566, 1
      %v865 = vrot.slane %v614, 1
      %v866 = vsel %vm851, %v864, %v865
      %v867 = vrot.slane %v567, 1
      %v868 = vrot.slane %v615, 1
      %v869 = vsel %vm851, %v867, %v868
      %v870 = vrot.slane %v568, 1
      %v871 = vrot.slane %v616, 1
      %v872 = vsel %vm851, %v870, %v871
      %v873 = vrot.slane %v569, 1
      %v874 = vrot.slane %v617, 1
      %v875 = vsel %vm851, %v873, %v874
      %v876 = vrot.slane %v570, 1
      %v877 = vrot.slane %v618, 1
      %v878 = vsel %vm851, %v876, %v877
      %v879 = vrot.slane %v571, 1
      %v880 = vrot.slane %v619, 1
      %v881 = vsel %vm851, %v879, %v880
      %v882 = vrot.slane %v572, 1
      %v883 = vrot.slane %v620, 1
      %v884 = vsel %vm851, %v882, %v883
      %v885 = vrot.slane %v573, 1
      %v886 = vrot.slane %v621, 1
      %v887 = vsel %vm851, %v885, %v886
      %v888 = vrot.slane %v574, 1
      %v889 = vrot.slane %v622, 1
      %v890 = vsel %vm851, %v888, %v889
      %v891 = vrot.slane %v575, 1
      %v892 = vrot.slane %v623, 1
      %v893 = vsel %vm851, %v891, %v892
      %v894 = vrot.slane %v576, 1
      %v895 = vrot.slane %v624, 1
      %v896 = vsel %vm851, %v894, %v895
      %v897 = vrot.slane %v577, 1
      %v898 = vrot.slane %v625, 1
      %v899 = vsel %vm851, %v897, %v898
      %900 = vrot.lane.b32.xlu0 %v854, 8
      %v901 = vpop.permute.xlu0 %900
      %902 = vrot.lane.b32.xlu0 %v857, 8
      %v903 = vpop.permute.xlu0 %902
      %904 = vrot.lane.b32.xlu0 %v860, 8
      %v905 = vpop.permute.xlu0 %904
      %906 = vrot.lane.b32.xlu0 %v863, 8
      %v907 = vpop.permute.xlu0 %906
      %908 = vrot.lane.b32.xlu0 %v866, 8
      %v909 = vpop.permute.xlu0 %908
      %910 = vrot.lane.b32.xlu0 %v869, 8
      %v911 = vpop.permute.xlu0 %910
      %912 = vrot.lane.b32.xlu0 %v872, 8
      %v913 = vpop.permute.xlu0 %912
      %914 = vrot.lane.b32.xlu0 %v875, 8
      %v915 = vpop.permute.xlu0 %914
      %916 = vrot.lane.b32.xlu0 %v878, 8
      %v917 = vpop.permute.xlu0 %916
      %918 = vrot.lane.b32.xlu0 %v881, 8
      %v919 = vpop.permute.xlu0 %918
      %920 = vrot.lane.b32.xlu0 %v884, 8
      %v921 = vpop.permute.xlu0 %920
      %922 = vrot.lane.b32.xlu0 %v887, 8
      %v923 = vpop.permute.xlu0 %922
      %924 = vrot.lane.b32.xlu0 %v890, 8
      %v925 = vpop.permute.xlu0 %924
      %926 = vrot.lane.b32.xlu0 %v893, 8
      %v927 = vpop.permute.xlu0 %926
      %928 = vrot.lane.b32.xlu0 %v896, 8
      %v929 = vpop.permute.xlu0 %928
      %930 = vrot.lane.b32.xlu0 %v899, 8
      %v931 = vpop.permute.xlu0 %930
      %v934 = vunpack.c.l.b16 %v485
      %v935 = vunpack.c.l.b16 %v486
      %v936 = vpack.c.b16 %v935, %v934
      %937 = vrot.lane.b32.xlu0 %v563, 12
      %v938 = vpop.permute.xlu0 %937
      %939 = vrot.lane.b32.xlu0 %v564, 12
      %v940 = vpop.permute.xlu0 %939
      %941 = vrot.lane.b32.xlu0 %v565, 12
      %v942 = vpop.permute.xlu0 %941
      %943 = vrot.lane.b32.xlu0 %v566, 12
      %v944 = vpop.permute.xlu0 %943
      %945 = vrot.lane.b32.xlu0 %v567, 12
      %v946 = vpop.permute.xlu0 %945
      %947 = vrot.lane.b32.xlu0 %v568, 12
      %v948 = vpop.permute.xlu0 %947
      %949 = vrot.lane.b32.xlu0 %v569, 12
      %v950 = vpop.permute.xlu0 %949
      %951 = vrot.lane.b32.xlu0 %v570, 12
      %v952 = vpop.permute.xlu0 %951
      %953 = vrot.lane.b32.xlu0 %v571, 12
      %v954 = vpop.permute.xlu0 %953
      %955 = vrot.lane.b32.xlu0 %v572, 12
      %v956 = vpop.permute.xlu0 %955
      %957 = vrot.lane.b32.xlu0 %v573, 12
      %v958 = vpop.permute.xlu0 %957
      %959 = vrot.lane.b32.xlu0 %v574, 12
      %v960 = vpop.permute.xlu0 %959
      %961 = vrot.lane.b32.xlu0 %v575, 12
      %v962 = vpop.permute.xlu0 %961
      %963 = vrot.lane.b32.xlu0 %v576, 12
      %v964 = vpop.permute.xlu0 %963
      %965 = vrot.lane.b32.xlu0 %v577, 12
      %v966 = vpop.permute.xlu0 %965
      %967 = vrot.lane.b32.xlu0 %v936, 12
      %v968 = vpop.permute.xlu0 %967
      %v970 = vunpack.c.l.b16 %v487
      %v971 = vpack.c.b16 %v970, %v970
      %v973 = vshrl.u32 %v936, 16
      %v975 = vshll.u32 %v936, 16
      %v977 = vrot.slane %v975, 1
      %v978 = vor.u32 %v973, %v977
      %v980 = vshll.u32 %v971, 16
      %v982 = vrot.slane %v980, 1
      %v983 = vsel %vm626, %v978, %v982
      %984 = vrot.lane.b32.xlu0 %v650, 16
      %v985 = vpop.permute.xlu0 %984
      %986 = vrot.lane.b32.xlu0 %v662, 16
      %v987 = vpop.permute.xlu0 %986
      %988 = vrot.lane.b32.xlu0 %v674, 16
      %v989 = vpop.permute.xlu0 %988
      %990 = vrot.lane.b32.xlu0 %v686, 16
      %v991 = vpop.permute.xlu0 %990
      %992 = vrot.lane.b32.xlu0 %v698, 16
      %v993 = vpop.permute.xlu0 %992
      %994 = vrot.lane.b32.xlu0 %v710, 16
      %v995 = vpop.permute.xlu0 %994
      %996 = vrot.lane.b32.xlu0 %v722, 16
      %v997 = vpop.permute.xlu0 %996
      %998 = vrot.lane.b32.xlu0 %v734, 16
      %v999 = vpop.permute.xlu0 %998
      %1000 = vrot.lane.b32.xlu0 %v746, 16
      %v1001 = vpop.permute.xlu0 %1000
      %1002 = vrot.lane.b32.xlu0 %v758, 16
      %v1003 = vpop.permute.xlu0 %1002
      %1004 = vrot.lane.b32.xlu0 %v770, 16
      %v1005 = vpop.permute.xlu0 %1004
      %1006 = vrot.lane.b32.xlu0 %v782, 16
      %v1007 = vpop.permute.xlu0 %1006
      %1008 = vrot.lane.b32.xlu0 %v794, 16
      %v1009 = vpop.permute.xlu0 %1008
      %1010 = vrot.lane.b32.xlu0 %v806, 16
      %v1011 = vpop.permute.xlu0 %1010
      %1012 = vrot.lane.b32.xlu0 %v818, 16
      %v1013 = vpop.permute.xlu0 %1012
      %1014 = vrot.lane.b32.xlu0 %v983, 16
      %v1015 = vpop.permute.xlu0 %1014
      %v1016 = vrot.slane %v936, 1
      %v1017 = vrot.slane %v971, 1
      %v1018 = vsel %vm851, %v1016, %v1017
      %1019 = vrot.lane.b32.xlu0 %v857, 20
      %v1020 = vpop.permute.xlu0 %1019
      %1021 = vrot.lane.b32.xlu0 %v860, 20
      %v1022 = vpop.permute.xlu0 %1021
      %1023 = vrot.lane.b32.xlu0 %v863, 20
      %v1024 = vpop.permute.xlu0 %1023
      %1025 = vrot.lane.b32.xlu0 %v866, 20
      %v1026 = vpop.permute.xlu0 %1025
      %1027 = vrot.lane.b32.xlu0 %v869, 20
      %v1028 = vpop.permute.xlu0 %1027
      %1029 = vrot.lane.b32.xlu0 %v872, 20
      %v1030 = vpop.permute.xlu0 %1029
      %1031 = vrot.lane.b32.xlu0 %v875, 20
      %v1032 = vpop.permute.xlu0 %1031
      %1033 = vrot.lane.b32.xlu0 %v878, 20
      %v1034 = vpop.permute.xlu0 %1033
      %1035 = vrot.lane.b32.xlu0 %v881, 20
      %v1036 = vpop.permute.xlu0 %1035
      %1037 = vrot.lane.b32.xlu0 %v884, 20
      %v1038 = vpop.permute.xlu0 %1037
      %1039 = vrot.lane.b32.xlu0 %v887, 20
      %v1040 = vpop.permute.xlu0 %1039
      %1041 = vrot.lane.b32.xlu0 %v890, 20
      %v1042 = vpop.permute.xlu0 %1041
      %1043 = vrot.lane.b32.xlu0 %v893, 20
      %v1044 = vpop.permute.xlu0 %1043
      %1045 = vrot.lane.b32.xlu0 %v896, 20
      %v1046 = vpop.permute.xlu0 %1045
      %1047 = vrot.lane.b32.xlu0 %v899, 20
      %v1048 = vpop.permute.xlu0 %1047
      %1049 = vrot.lane.b32.xlu0 %v1018, 20
      %v1050 = vpop.permute.xlu0 %1049
      %v1053 = vunpack.c.l.b16 %v495
      %v1054 = vunpack.c.l.b16 %v496
      %v1055 = vpack.c.b16 %v1054, %v1053
      %1056 = vrot.lane.b32.xlu0 %v564, 24
      %v1057 = vpop.permute.xlu0 %1056
      %1058 = vrot.lane.b32.xlu0 %v565, 24
      %v1059 = vpop.permute.xlu0 %1058
      %1060 = vrot.lane.b32.xlu0 %v566, 24
      %v1061 = vpop.permute.xlu0 %1060
      %1062 = vrot.lane.b32.xlu0 %v567, 24
      %v1063 = vpop.permute.xlu0 %1062
      %1064 = vrot.lane.b32.xlu0 %v568, 24
      %v1065 = vpop.permute.xlu0 %1064
      %1066 = vrot.lane.b32.xlu0 %v569, 24
      %v1067 = vpop.permute.xlu0 %1066
      %1068 = vrot.lane.b32.xlu0 %v570, 24
      %v1069 = vpop.permute.xlu0 %1068
      %1070 = vrot.lane.b32.xlu0 %v571, 24
      %v1071 = vpop.permute.xlu0 %1070
      %1072 = vrot.lane.b32.xlu0 %v572, 24
      %v1073 = vpop.permute.xlu0 %1072
      %1074 = vrot.lane.b32.xlu0 %v573, 24
      %v1075 = vpop.permute.xlu0 %1074
      %1076 = vrot.lane.b32.xlu0 %v574, 24
      %v1077 = vpop.permute.xlu0 %1076
      %1078 = vrot.lane.b32.xlu0 %v575, 24
      %v1079 = vpop.permute.xlu0 %1078
      %1080 = vrot.lane.b32.xlu0 %v576, 24
      %v1081 = vpop.permute.xlu0 %1080
      %1082 = vrot.lane.b32.xlu0 %v577, 24
      %v1083 = vpop.permute.xlu0 %1082
      %1084 = vrot.lane.b32.xlu0 %v936, 24
      %v1085 = vpop.permute.xlu0 %1084
      %1086 = vrot.lane.b32.xlu0 %v1055, 24
      %v1087 = vpop.permute.xlu0 %1086
      %v1089 = vunpack.c.l.b16 %v497
      %v1090 = vpack.c.b16 %v1089, %v1089
      %v1092 = vshrl.u32 %v1055, 16
      %v1094 = vshll.u32 %v1055, 16
      %v1096 = vrot.slane %v1094, 1
      %v1097 = vor.u32 %v1092, %v1096
      %v1099 = vshll.u32 %v1090, 16
      %v1101 = vrot.slane %v1099, 1
      %v1102 = vsel %vm626, %v1097, %v1101
      %1103 = vrot.lane.b32.xlu0 %v662, 28
      %v1104 = vpop.permute.xlu0 %1103
      %1105 = vrot.lane.b32.xlu0 %v674, 28
      %v1106 = vpop.permute.xlu0 %1105
      %1107 = vrot.lane.b32.xlu0 %v686, 28
      %v1108 = vpop.permute.xlu0 %1107
      %1109 = vrot.lane.b32.xlu0 %v698, 28
      %v1110 = vpop.permute.xlu0 %1109
      %1111 = vrot.lane.b32.xlu0 %v710, 28
      %v1112 = vpop.permute.xlu0 %1111
      %1113 = vrot.lane.b32.xlu0 %v722, 28
      %v1114 = vpop.permute.xlu0 %1113
      %1115 = vrot.lane.b32.xlu0 %v734, 28
      %v1116 = vpop.permute.xlu0 %1115
      %1117 = vrot.lane.b32.xlu0 %v746, 28
      %v1118 = vpop.permute.xlu0 %1117
      %1119 = vrot.lane.b32.xlu0 %v758, 28
      %v1120 = vpop.permute.xlu0 %1119
      %1121 = vrot.lane.b32.xlu0 %v770, 28
      %v1122 = vpop.permute.xlu0 %1121
      %1123 = vrot.lane.b32.xlu0 %v782, 28
      %v1124 = vpop.permute.xlu0 %1123
      %1125 = vrot.lane.b32.xlu0 %v794, 28
      %v1126 = vpop.permute.xlu0 %1125
      %1127 = vrot.lane.b32.xlu0 %v806, 28
      %v1128 = vpop.permute.xlu0 %1127
      %1129 = vrot.lane.b32.xlu0 %v818, 28
      %v1130 = vpop.permute.xlu0 %1129
      %1131 = vrot.lane.b32.xlu0 %v983, 28
      %v1132 = vpop.permute.xlu0 %1131
      %1133 = vrot.lane.b32.xlu0 %v1102, 28
      %v1134 = vpop.permute.xlu0 %1133
      %v1135 = vrot.slane %v1055, 1
      %v1136 = vrot.slane %v1090, 1
      %v1137 = vsel %vm851, %v1135, %v1136
      %1138 = vrot.lane.b32.xlu0 %v860, 32
      %v1139 = vpop.permute.xlu0 %1138
      %1140 = vrot.lane.b32.xlu0 %v863, 32
      %v1141 = vpop.permute.xlu0 %1140
      %1142 = vrot.lane.b32.xlu0 %v866, 32
      %v1143 = vpop.permute.xlu0 %1142
      %1144 = vrot.lane.b32.xlu0 %v869, 32
      %v1145 = vpop.permute.xlu0 %1144
      %1146 = vrot.lane.b32.xlu0 %v872, 32
      %v1147 = vpop.permute.xlu0 %1146
      %1148 = vrot.lane.b32.xlu0 %v875, 32
      %v1149 = vpop.permute.xlu0 %1148
      %1150 = vrot.lane.b32.xlu0 %v878, 32
      %v1151 = vpop.permute.xlu0 %1150
      %1152 = vrot.lane.b32.xlu0 %v881, 32
      %v1153 = vpop.permute.xlu0 %1152
      %1154 = vrot.lane.b32.xlu0 %v884, 32
      %v1155 = vpop.permute.xlu0 %1154
      %1156 = vrot.lane.b32.xlu0 %v887, 32
      %v1157 = vpop.permute.xlu0 %1156
      %1158 = vrot.lane.b32.xlu0 %v890, 32
      %v1159 = vpop.permute.xlu0 %1158
      %1160 = vrot.lane.b32.xlu0 %v893, 32
      %v1161 = vpop.permute.xlu0 %1160
      %1162 = vrot.lane.b32.xlu0 %v896, 32
      %v1163 = vpop.permute.xlu0 %1162
      %1164 = vrot.lane.b32.xlu0 %v899, 32
      %v1165 = vpop.permute.xlu0 %1164
      %1166 = vrot.lane.b32.xlu0 %v1018, 32
      %v1167 = vpop.permute.xlu0 %1166
      %1168 = vrot.lane.b32.xlu0 %v1137, 32
      %v1169 = vpop.permute.xlu0 %1168
      %vm1170 = vcmask 31744
      %v1172 = vsel %vm1170, %v562, %v820
      %v1174 = vsel %vm1170, %v563, %v822
      %v1176 = vsel %vm1170, %v564, %v824
      %v1178 = vsel %vm1170, %v565, %v826
      %v1180 = vsel %vm1170, %v566, %v828
      %v1182 = vsel %vm1170, %v567, %v830
      %v1184 = vsel %vm1170, %v568, %v832
      %v1186 = vsel %vm1170, %v569, %v834
      %v1188 = vsel %vm1170, %v570, %v836
      %v1190 = vsel %vm1170, %v571, %v838
      %v1192 = vsel %vm1170, %v572, %v840
      %v1194 = vsel %vm1170, %v573, %v842
      %v1196 = vsel %vm1170, %v574, %v844
      %v1198 = vsel %vm1170, %v575, %v846
      %v1200 = vsel %vm1170, %v576, %v848
      %v1202 = vsel %vm1170, %v577, %v850
      %vm1203 = vcmask 64512
      %v1205 = vsel %vm1203, %v1172, %v901
      %v1207 = vsel %vm1203, %v1174, %v903
      %v1209 = vsel %vm1203, %v1176, %v905
      %v1211 = vsel %vm1203, %v1178, %v907
      %v1213 = vsel %vm1203, %v1180, %v909
      %v1215 = vsel %vm1203, %v1182, %v911
      %v1217 = vsel %vm1203, %v1184, %v913
      %v1219 = vsel %vm1203, %v1186, %v915
      %v1221 = vsel %vm1203, %v1188, %v917
      %v1223 = vsel %vm1203, %v1190, %v919
      %v1225 = vsel %vm1203, %v1192, %v921
      %v1227 = vsel %vm1203, %v1194, %v923
      %v1229 = vsel %vm1203, %v1196, %v925
      %v1231 = vsel %vm1203, %v1198, %v927
      %v1233 = vsel %vm1203, %v1200, %v929
      %v1235 = vsel %vm1203, %v1202, %v931
      %vm1236 = vcmask 97280
      %v1238 = vsel %vm1236, %v1205, %v938
      %v1240 = vsel %vm1236, %v1207, %v940
      %v1242 = vsel %vm1236, %v1209, %v942
      %v1244 = vsel %vm1236, %v1211, %v944
      %v1246 = vsel %vm1236, %v1213, %v946
      %v1248 = vsel %vm1236, %v1215, %v948
      %v1250 = vsel %vm1236, %v1217, %v950
      %v1252 = vsel %vm1236, %v1219, %v952
      %v1254 = vsel %vm1236, %v1221, %v954
      %v1256 = vsel %vm1236, %v1223, %v956
      %v1258 = vsel %vm1236, %v1225, %v958
      %v1260 = vsel %vm1236, %v1227, %v960
      %v1262 = vsel %vm1236, %v1229, %v962
      %v1264 = vsel %vm1236, %v1231, %v964
      %v1266 = vsel %vm1236, %v1233, %v966
      %v1268 = vsel %vm1236, %v1235, %v968
      %vm1269 = vcmask 130048
      %v1271 = vsel %vm1269, %v1238, %v985
      %v1273 = vsel %vm1269, %v1240, %v987
      %v1275 = vsel %vm1269, %v1242, %v989
      %v1277 = vsel %vm1269, %v1244, %v991
      %v1279 = vsel %vm1269, %v1246, %v993
      %v1281 = vsel %vm1269, %v1248, %v995
      %v1283 = vsel %vm1269, %v1250, %v997
      %v1285 = vsel %vm1269, %v1252, %v999
      %v1287 = vsel %vm1269, %v1254, %v1001
      %v1289 = vsel %vm1269, %v1256, %v1003
      %v1291 = vsel %vm1269, %v1258, %v1005
      %v1293 = vsel %vm1269, %v1260, %v1007
      %v1295 = vsel %vm1269, %v1262, %v1009
      %v1297 = vsel %vm1269, %v1264, %v1011
      %v1299 = vsel %vm1269, %v1266, %v1013
      %v1301 = vsel %vm1269, %v1268, %v1015
      %vm1302 = vcmask 162816
      %v1304 = vsel %vm1302, %v1271, %v1020
      %v1306 = vsel %vm1302, %v1273, %v1022
      %v1308 = vsel %vm1302, %v1275, %v1024
      %v1310 = vsel %vm1302, %v1277, %v1026
      %v1312 = vsel %vm1302, %v1279, %v1028
      %v1314 = vsel %vm1302, %v1281, %v1030
      %v1316 = vsel %vm1302, %v1283, %v1032
      %v1318 = vsel %vm1302, %v1285, %v1034
      %v1320 = vsel %vm1302, %v1287, %v1036
      %v1322 = vsel %vm1302, %v1289, %v1038
      %v1324 = vsel %vm1302, %v1291, %v1040
      %v1326 = vsel %vm1302, %v1293, %v1042
      %v1328 = vsel %vm1302, %v1295, %v1044
      %v1330 = vsel %vm1302, %v1297, %v1046
      %v1332 = vsel %vm1302, %v1299, %v1048
      %v1334 = vsel %vm1302, %v1301, %v1050
      %vm1335 = vcmask 195584
      %v1337 = vsel %vm1335, %v1304, %v1057
      %v1339 = vsel %vm1335, %v1306, %v1059
      %v1341 = vsel %vm1335, %v1308, %v1061
      %v1343 = vsel %vm1335, %v1310, %v1063
      %v1345 = vsel %vm1335, %v1312, %v1065
      %v1347 = vsel %vm1335, %v1314, %v1067
      %v1349 = vsel %vm1335, %v1316, %v1069
      %v1351 = vsel %vm1335, %v1318, %v1071
      %v1353 = vsel %vm1335, %v1320, %v1073
      %v1355 = vsel %vm1335, %v1322, %v1075
      %v1357 = vsel %vm1335, %v1324, %v1077
      %v1359 = vsel %vm1335, %v1326, %v1079
      %v1361 = vsel %vm1335, %v1328, %v1081
      %v1363 = vsel %vm1335, %v1330, %v1083
      %v1365 = vsel %vm1335, %v1332, %v1085
      %v1367 = vsel %vm1335, %v1334, %v1087
      %vm1368 = vcmask 228352
      %v1370 = vsel %vm1368, %v1337, %v1104
      %v1372 = vsel %vm1368, %v1339, %v1106
      %v1374 = vsel %vm1368, %v1341, %v1108
      %v1376 = vsel %vm1368, %v1343, %v1110
      %v1378 = vsel %vm1368, %v1345, %v1112
      %v1380 = vsel %vm1368, %v1347, %v1114
      %v1382 = vsel %vm1368, %v1349, %v1116
      %v1384 = vsel %vm1368, %v1351, %v1118
      %v1386 = vsel %vm1368, %v1353, %v1120
      %v1388 = vsel %vm1368, %v1355, %v1122
      %v1390 = vsel %vm1368, %v1357, %v1124
      %v1392 = vsel %vm1368, %v1359, %v1126
      %v1394 = vsel %vm1368, %v1361, %v1128
      %v1396 = vsel %vm1368, %v1363, %v1130
      %v1398 = vsel %vm1368, %v1365, %v1132
      %v1400 = vsel %vm1368, %v1367, %v1134
      %vm1401 = vcmask 261120
      %v1403 = vsel %vm1401, %v1370, %v1139
      %v1405 = vsel %vm1401, %v1372, %v1141
      %v1407 = vsel %vm1401, %v1374, %v1143
      %v1409 = vsel %vm1401, %v1376, %v1145
      %v1411 = vsel %vm1401, %v1378, %v1147
      %v1413 = vsel %vm1401, %v1380, %v1149
      %v1415 = vsel %vm1401, %v1382, %v1151
      %v1417 = vsel %vm1401, %v1384, %v1153
      %v1419 = vsel %vm1401, %v1386, %v1155
      %v1421 = vsel %vm1401, %v1388, %v1157
      %v1423 = vsel %vm1401, %v1390, %v1159
      %v1425 = vsel %vm1401, %v1392, %v1161
      %v1427 = vsel %vm1401, %v1394, %v1163
      %v1429 = vsel %vm1401, %v1396, %v1165
      %v1431 = vsel %vm1401, %v1398, %v1167
      %v1433 = vsel %vm1401, %v1400, %v1169
      %v1434 = vld [vmem:[%s3] sm:$0xf]
      %v1435 = vld [vmem:[%s3 + $0x4] sm:$0xf]
      %v1436 = vld [vmem:[%s3 + $0x8] sm:$0xf]
      %v1437 = vld [vmem:[%s3 + $0xc] sm:$0xf]
      %v1438 = vld [vmem:[%s3 + $0x10] sm:$0x3]
      %v1444 = vunpack.c.l.b16 %v1434
      %v1445 = vunpack.c.l.b16 %v1435
      %v1446 = vunpack.c.l.b16 %v1436
      %v1447 = vunpack.c.l.b16 %v1437
      %v1448 = vunpack.c.l.b16 %v1438
      %v1449 = vpack.c.b16 %v1445, %v1444
      %v1450 = vpack.c.b16 %v1447, %v1446
      %v1451 = vpack.c.b16 %v1448, %v1448
      %vm1454 = vcmask 293888
      %v1455 = vsel %vm1454, %v1403, 0
      %v1457 = vsel %vm1454, %v1405, 0
      %v1459 = vsel %vm1454, %v1407, 0
      %v1461 = vsel %vm1454, %v1409, 0
      %v1463 = vsel %vm1454, %v1411, 0
      %v1465 = vsel %vm1454, %v1413, 0
      %v1467 = vsel %vm1454, %v1415, 0
      %v1469 = vsel %vm1454, %v1417, 0
      %v1471 = vsel %vm1454, %v1419, 0
      %v1473 = vsel %vm1454, %v1421, 0
      %v1475 = vsel %vm1454, %v1423, 0
      %v1477 = vsel %vm1454, %v1425, 0
      %v1479 = vsel %vm1454, %v1427, 0
      %v1481 = vsel %vm1454, %v1429, 0
      %v1483 = vsel %vm1454, %v1431, 0
      %v1485 = vsel %vm1454, %v1433, 0
      %vm1487 = vcmask 1041408
      %v1489 = vsel %vm1487, %v1451, 0
      %1491 = vmatprep.subr.bf16.mxu0 0
      %1492 = vmatpush1.bf16.msra.mxu0 0
      %1493 = vmatprep.subr.bf16.mxu0 0
      %1494 = vmatpush1.bf16.msra.mxu0 0
      %1495 = vmatprep.subr.bf16.mxu0 0
      %1496 = vmatpush1.bf16.msra.mxu0 0
      %1497 = vmatprep.subr.bf16.mxu0 0
      %1498 = vmatpush1.bf16.msra.mxu0 0
      %1499 = vmatprep.subr.bf16.mxu0 0
      %1500 = vmatpush1.bf16.msra.mxu0 0
      %1501 = vmatprep.subr.bf16.mxu0 0
      %1502 = vmatpush1.bf16.msra.mxu0 %v1489
      %1503 = vmatprep.subr.bf16.mxu0 0
      %1504 = vmatpush1.bf16.msra.mxu0 %v1450
      %1505 = vmatprep.subr.bf16.mxu0 0
      %1506 = vmatpush1.bf16.msra.mxu0 %v1449
      %1507 = vmatprep.subr.bf16.mxu0 0
      %1508 = vmatpush2.bf16.msra.mxu0 0
      %1509 = vmatprep.subr.bf16.mxu0 0
      %1510 = vmatpush2.bf16.msra.mxu0 0
      %1511 = vmatprep.subr.bf16.mxu0 0
      %1512 = vmatpush2.bf16.msra.mxu0 0
      %1513 = vmatprep.subr.bf16.mxu0 0
      %1514 = vmatpush2.bf16.msra.mxu0 0
      %1515 = vmatprep.subr.bf16.mxu0 0
      %1516 = vmatpush2.bf16.msra.mxu0 0
      %1517 = vmatprep.subr.bf16.mxu0 0
      %1518 = vmatpush2.bf16.msra.mxu0 0
      %1519 = vmatprep.subr.bf16.mxu0 0
      %1520 = vmatpush2.bf16.msra.mxu0 0
      %1521 = vmatprep.subr.bf16.mxu0 0
      %1522 = vmatpush2.bf16.msra.mxu0 0
      %1523 = vmatprep.mubr.bf16.mxu0 0
      %1524 = vmatmul.mubr.bf16.gmra.mxu0 %v1455
      %v1525 = vpop.f32.mrf.mxu0
      %v1526 = vadd.f32 0.0, %v1525
      %v1527 = vpop.f32.mrf.mxu0
      %v1528 = vpop.f32.mrf.mxu0
      %v1529 = vadd.f32 0.0, %v1528
      %v1530 = vpop.f32.mrf.mxu0
      %1531 = vmatprep.mubr.bf16.mxu0 0
      %1532 = vmatmul.mubr.bf16.gmra.mxu0 %v1457
      %v1533 = vpop.f32.mrf.mxu0
      %v1534 = vadd.f32 0.0, %v1533
      %v1535 = vpop.f32.mrf.mxu0
      %v1536 = vpop.f32.mrf.mxu0
      %v1537 = vadd.f32 0.0, %v1536
      %v1538 = vpop.f32.mrf.mxu0
      %1539 = vmatprep.mubr.bf16.mxu0 0
      %1540 = vmatmul.mubr.bf16.gmra.mxu0 %v1459
      %v1541 = vpop.f32.mrf.mxu0
      %v1542 = vadd.f32 0.0, %v1541
      %v1543 = vpop.f32.mrf.mxu0
      %v1544 = vpop.f32.mrf.mxu0
      %v1545 = vadd.f32 0.0, %v1544
      %v1546 = vpop.f32.mrf.mxu0
      %1547 = vmatprep.mubr.bf16.mxu0 0
      %1548 = vmatmul.mubr.bf16.gmra.mxu0 %v1461
      %v1549 = vpop.f32.mrf.mxu0
      %v1550 = vadd.f32 0.0, %v1549
      %v1551 = vpop.f32.mrf.mxu0
      %v1552 = vpop.f32.mrf.mxu0
      %v1553 = vadd.f32 0.0, %v1552
      %v1554 = vpop.f32.mrf.mxu0
      %1555 = vmatprep.mubr.bf16.mxu0 0
      %1556 = vmatmul.mubr.bf16.gmra.mxu0 %v1463
      %v1557 = vpop.f32.mrf.mxu0
      %v1558 = vadd.f32 0.0, %v1557
      %v1559 = vpop.f32.mrf.mxu0
      %v1560 = vpop.f32.mrf.mxu0
      %v1561 = vadd.f32 0.0, %v1560
      %v1562 = vpop.f32.mrf.mxu0
      %1563 = vmatprep.mubr.bf16.mxu0 0
      %1564 = vmatmul.mubr.bf16.gmra.mxu0 %v1465
      %v1565 = vpop.f32.mrf.mxu0
      %v1566 = vadd.f32 0.0, %v1565
      %v1567 = vpop.f32.mrf.mxu0
      %v1568 = vpop.f32.mrf.mxu0
      %v1569 = vadd.f32 0.0, %v1568
      %v1570 = vpop.f32.mrf.mxu0
      %1571 = vmatprep.mubr.bf16.mxu0 0
      %1572 = vmatmul.mubr.bf16.gmra.mxu0 %v1467
      %v1573 = vpop.f32.mrf.mxu0
      %v1574 = vadd.f32 0.0, %v1573
      %v1575 = vpop.f32.mrf.mxu0
      %v1576 = vpop.f32.mrf.mxu0
      %v1577 = vadd.f32 0.0, %v1576
      %v1578 = vpop.f32.mrf.mxu0
      %1579 = vmatprep.mubr.bf16.mxu0 0
      %1580 = vmatmul.mubr.bf16.gmra.mxu0 %v1469
      %v1581 = vpop.f32.mrf.mxu0
      %v1582 = vadd.f32 0.0, %v1581
      %v1583 = vpop.f32.mrf.mxu0
      %v1584 = vpop.f32.mrf.mxu0
      %v1585 = vadd.f32 0.0, %v1584
      %v1586 = vpop.f32.mrf.mxu0
      %1587 = vmatprep.mubr.bf16.mxu0 0
      %1588 = vmatmul.mubr.bf16.gmra.mxu0 %v1471
      %v1589 = vpop.f32.mrf.mxu0
      %v1590 = vadd.f32 0.0, %v1589
      %v1591 = vpop.f32.mrf.mxu0
      %v1592 = vpop.f32.mrf.mxu0
      %v1593 = vadd.f32 0.0, %v1592
      %v1594 = vpop.f32.mrf.mxu0
      %1595 = vmatprep.mubr.bf16.mxu0 0
      %1596 = vmatmul.mubr.bf16.gmra.mxu0 %v1473
      %v1597 = vpop.f32.mrf.mxu0
      %v1598 = vadd.f32 0.0, %v1597
      %v1599 = vpop.f32.mrf.mxu0
      %v1600 = vpop.f32.mrf.mxu0
      %v1601 = vadd.f32 0.0, %v1600
      %v1602 = vpop.f32.mrf.mxu0
      %1603 = vmatprep.mubr.bf16.mxu0 0
      %1604 = vmatmul.mubr.bf16.gmra.mxu0 %v1475
      %v1605 = vpop.f32.mrf.mxu0
      %v1606 = vadd.f32 0.0, %v1605
      %v1607 = vpop.f32.mrf.mxu0
      %v1608 = vpop.f32.mrf.mxu0
      %v1609 = vadd.f32 0.0, %v1608
      %v1610 = vpop.f32.mrf.mxu0
      %1611 = vmatprep.mubr.bf16.mxu0 0
      %1612 = vmatmul.mubr.bf16.gmra.mxu0 %v1477
      %v1613 = vpop.f32.mrf.mxu0
      %v1614 = vadd.f32 0.0, %v1613
      %v1615 = vpop.f32.mrf.mxu0
      %v1616 = vpop.f32.mrf.mxu0
      %v1617 = vadd.f32 0.0, %v1616
      %v1618 = vpop.f32.mrf.mxu0
      %1619 = vmatprep.mubr.bf16.mxu0 0
      %1620 = vmatmul.mubr.bf16.gmra.mxu0 %v1479
      %v1621 = vpop.f32.mrf.mxu0
      %v1622 = vadd.f32 0.0, %v1621
      %v1623 = vpop.f32.mrf.mxu0
      %v1624 = vpop.f32.mrf.mxu0
      %v1625 = vadd.f32 0.0, %v1624
      %v1626 = vpop.f32.mrf.mxu0
      %1627 = vmatprep.mubr.bf16.mxu0 0
      %1628 = vmatmul.mubr.bf16.gmra.mxu0 %v1481
      %v1629 = vpop.f32.mrf.mxu0
      %v1630 = vadd.f32 0.0, %v1629
      %v1631 = vpop.f32.mrf.mxu0
      %v1632 = vpop.f32.mrf.mxu0
      %v1633 = vadd.f32 0.0, %v1632
      %v1634 = vpop.f32.mrf.mxu0
      %1635 = vmatprep.mubr.bf16.mxu0 0
      %1636 = vmatmul.mubr.bf16.gmra.mxu0 %v1483
      %v1637 = vpop.f32.mrf.mxu0
      %v1638 = vadd.f32 0.0, %v1637
      %v1639 = vpop.f32.mrf.mxu0
      %v1640 = vpop.f32.mrf.mxu0
      %v1641 = vadd.f32 0.0, %v1640
      %v1642 = vpop.f32.mrf.mxu0
      %1643 = vmatprep.mubr.bf16.mxu0 0
      %1644 = vmatmul.mubr.bf16.gmra.mxu0 %v1485
      %v1645 = vpop.f32.mrf.mxu0
      %v1646 = vadd.f32 0.0, %v1645
      %v1647 = vpop.f32.mrf.mxu0
      %v1648 = vpop.f32.mrf.mxu0
      %v1649 = vadd.f32 0.0, %v1648
      %v1650 = vpop.f32.mrf.mxu0
      %1651 = vdwg.mxu0
      %v1652 = vsel %vm1203, %v1526, 0.0
      %v1653 = vsel %vm1203, %v1529, 0.0
      %v1654 = vadd.f32 %v1652, %v1653
      %v1655 = vsel %vm1203, %v1534, 0.0
      %v1656 = vadd.f32 %v1654, %v1655
      %v1657 = vsel %vm1203, %v1537, 0.0
      %v1658 = vadd.f32 %v1656, %v1657
      %v1659 = vsel %vm1203, %v1542, 0.0
      %v1660 = vadd.f32 %v1658, %v1659
      %v1661 = vsel %vm1203, %v1545, 0.0
      %v1662 = vadd.f32 %v1660, %v1661
      %v1663 = vsel %vm1203, %v1550, 0.0
      %v1664 = vadd.f32 %v1662, %v1663
      %v1665 = vsel %vm1203, %v1553, 0.0
      %v1666 = vadd.f32 %v1664, %v1665
      %v1667 = vsel %vm1203, %v1558, 0.0
      %v1668 = vadd.f32 %v1666, %v1667
      %v1669 = vsel %vm1203, %v1561, 0.0
      %v1670 = vadd.f32 %v1668, %v1669
      %v1671 = vsel %vm1203, %v1566, 0.0
      %v1672 = vadd.f32 %v1670, %v1671
      %v1673 = vsel %vm1203, %v1569, 0.0
      %v1674 = vadd.f32 %v1672, %v1673
      %v1675 = vsel %vm1203, %v1574, 0.0
      %v1676 = vadd.f32 %v1674, %v1675
      %v1677 = vsel %vm1203, %v1577, 0.0
      %v1678 = vadd.f32 %v1676, %v1677
      %v1679 = vsel %vm1203, %v1582, 0.0
      %v1680 = vadd.f32 %v1678, %v1679
      %v1681 = vsel %vm1203, %v1585, 0.0
      %v1682 = vadd.f32 %v1680, %v1681
      %v1683 = vsel %vm1203, %v1590, 0.0
      %v1684 = vadd.f32 %v1682, %v1683
      %v1685 = vsel %vm1203, %v1593, 0.0
      %v1686 = vadd.f32 %v1684, %v1685
      %v1687 = vsel %vm1203, %v1598, 0.0
      %v1688 = vadd.f32 %v1686, %v1687
      %v1689 = vsel %vm1203, %v1601, 0.0
      %v1690 = vadd.f32 %v1688, %v1689
      %v1691 = vsel %vm1203, %v1606, 0.0
      %v1692 = vadd.f32 %v1690, %v1691
      %v1693 = vsel %vm1203, %v1609, 0.0
      %v1694 = vadd.f32 %v1692, %v1693
      %v1695 = vsel %vm1203, %v1614, 0.0
      %v1696 = vadd.f32 %v1694, %v1695
      %v1697 = vsel %vm1203, %v1617, 0.0
      %v1698 = vadd.f32 %v1696, %v1697
      %v1699 = vsel %vm1203, %v1622, 0.0
      %v1700 = vadd.f32 %v1698, %v1699
      %v1701 = vsel %vm1203, %v1625, 0.0
      %v1702 = vadd.f32 %v1700, %v1701
      %v1703 = vsel %vm1203, %v1630, 0.0
      %v1704 = vadd.f32 %v1702, %v1703
      %v1705 = vsel %vm1203, %v1633, 0.0
      %v1706 = vadd.f32 %v1704, %v1705
      %v1707 = vsel %vm1203, %v1638, 0.0
      %v1708 = vadd.f32 %v1706, %v1707
      %v1709 = vsel %vm1203, %v1641, 0.0
      %v1710 = vadd.f32 %v1708, %v1709
      %v1711 = vsel %vm1203, %v1646, 0.0
      %v1712 = vadd.f32 %v1710, %v1711
      %v1713 = vsel %vm1203, %v1649, 0.0
      %v1714 = vadd.f32 %v1712, %v1713
      %v1715 = vrot.slane %v1714, 4
      %v1716 = vadd.f32 %v1714, %v1715
      %v1717 = vrot.slane %v1716, 2
      %v1718 = vadd.f32 %v1716, %v1717
      %v1719 = vrot.slane %v1718, 1
      %v1720 = vadd.f32 %v1718, %v1719
      %v1721 = vmul.f32 %v1526, %v1526
      %v1722 = vmul.f32 %v1529, %v1529
      %v1723 = vmul.f32 %v1534, %v1534
      %v1724 = vmul.f32 %v1537, %v1537
      %v1725 = vmul.f32 %v1542, %v1542
      %v1726 = vmul.f32 %v1545, %v1545
      %v1727 = vmul.f32 %v1550, %v1550
      %v1728 = vmul.f32 %v1553, %v1553
      %v1729 = vmul.f32 %v1558, %v1558
      %v1730 = vmul.f32 %v1561, %v1561
      %v1731 = vmul.f32 %v1566, %v1566
      %v1732 = vmul.f32 %v1569, %v1569
      %v1733 = vmul.f32 %v1574, %v1574
      %v1734 = vmul.f32 %v1577, %v1577
      %v1735 = vmul.f32 %v1582, %v1582
      %v1736 = vmul.f32 %v1585, %v1585
      %v1737 = vmul.f32 %v1590, %v1590
      %v1738 = vmul.f32 %v1593, %v1593
      %v1739 = vmul.f32 %v1598, %v1598
      %v1740 = vmul.f32 %v1601, %v1601
      %v1741 = vmul.f32 %v1606, %v1606
      %v1742 = vmul.f32 %v1609, %v1609
      %v1743 = vmul.f32 %v1614, %v1614
      %v1744 = vmul.f32 %v1617, %v1617
      %v1745 = vmul.f32 %v1622, %v1622
      %v1746 = vmul.f32 %v1625, %v1625
      %v1747 = vmul.f32 %v1630, %v1630
      %v1748 = vmul.f32 %v1633, %v1633
      %v1749 = vmul.f32 %v1638, %v1638
      %v1750 = vmul.f32 %v1641, %v1641
      %v1751 = vmul.f32 %v1646, %v1646
      %v1752 = vmul.f32 %v1649, %v1649
      %v1753 = vsel %vm1203, %v1721, 0.0
      %v1754 = vsel %vm1203, %v1722, 0.0
      %v1755 = vadd.f32 %v1753, %v1754
      %v1756 = vsel %vm1203, %v1723, 0.0
      %v1757 = vadd.f32 %v1755, %v1756
      %v1758 = vsel %vm1203, %v1724, 0.0
      %v1759 = vadd.f32 %v1757, %v1758
      %v1760 = vsel %vm1203, %v1725, 0.0
      %v1761 = vadd.f32 %v1759, %v1760
      %v1762 = vsel %vm1203, %v1726, 0.0
      %v1763 = vadd.f32 %v1761, %v1762
      %v1764 = vsel %vm1203, %v1727, 0.0
      %v1765 = vadd.f32 %v1763, %v1764
      %v1766 = vsel %vm1203, %v1728, 0.0
      %v1767 = vadd.f32 %v1765, %v1766
      %v1768 = vsel %vm1203, %v1729, 0.0
      %v1769 = vadd.f32 %v1767, %v1768
      %v1770 = vsel %vm1203, %v1730, 0.0
      %v1771 = vadd.f32 %v1769, %v1770
      %v1772 = vsel %vm1203, %v1731, 0.0
      %v1773 = vadd.f32 %v1771, %v1772
      %v1774 = vsel %vm1203, %v1732, 0.0
      %v1775 = vadd.f32 %v1773, %v1774
      %v1776 = vsel %vm1203, %v1733, 0.0
      %v1777 = vadd.f32 %v1775, %v1776
      %v1778 = vsel %vm1203, %v1734, 0.0
      %v1779 = vadd.f32 %v1777, %v1778
      %v1780 = vsel %vm1203, %v1735, 0.0
      %v1781 = vadd.f32 %v1779, %v1780
      %v1782 = vsel %vm1203, %v1736, 0.0
      %v1783 = vadd.f32 %v1781, %v1782
      %v1784 = vsel %vm1203, %v1737, 0.0
      %v1785 = vadd.f32 %v1783, %v1784
      %v1786 = vsel %vm1203, %v1738, 0.0
      %v1787 = vadd.f32 %v1785, %v1786
      %v1788 = vsel %vm1203, %v1739, 0.0
      %v1789 = vadd.f32 %v1787, %v1788
      %v1790 = vsel %vm1203, %v1740, 0.0
      %v1791 = vadd.f32 %v1789, %v1790
      %v1792 = vsel %vm1203, %v1741, 0.0
      %v1793 = vadd.f32 %v1791, %v1792
      %v1794 = vsel %vm1203, %v1742, 0.0
      %v1795 = vadd.f32 %v1793, %v1794
      %v1796 = vsel %vm1203, %v1743, 0.0
      %v1797 = vadd.f32 %v1795, %v1796
      %v1798 = vsel %vm1203, %v1744, 0.0
      %v1799 = vadd.f32 %v1797, %v1798
      %v1800 = vsel %vm1203, %v1745, 0.0
      %v1801 = vadd.f32 %v1799, %v1800
      %v1802 = vsel %vm1203, %v1746, 0.0
      %v1803 = vadd.f32 %v1801, %v1802
      %v1804 = vsel %vm1203, %v1747, 0.0
      %v1805 = vadd.f32 %v1803, %v1804
      %v1806 = vsel %vm1203, %v1748, 0.0
      %v1807 = vadd.f32 %v1805, %v1806
      %v1808 = vsel %vm1203, %v1749, 0.0
      %v1809 = vadd.f32 %v1807, %v1808
      %v1810 = vsel %vm1203, %v1750, 0.0
      %v1811 = vadd.f32 %v1809, %v1810
      %v1812 = vsel %vm1203, %v1751, 0.0
      %v1813 = vadd.f32 %v1811, %v1812
      %v1814 = vsel %vm1203, %v1752, 0.0
      %v1815 = vadd.f32 %v1813, %v1814
      %v1816 = vrot.slane %v1815, 4
      %v1817 = vadd.f32 %v1815, %v1816
      %v1818 = vrot.slane %v1817, 2
      %v1819 = vadd.f32 %v1817, %v1818
      %v1820 = vrot.slane %v1819, 1
      %v1821 = vadd.f32 %v1819, %v1820
      %vm1822 = vcmask 1040384
      %v1823 = vsel %vm1822, %v1720, %v1821
      %vm1824 = vcmask 58368
      %1825 = vst.msk [vmem:[%s404] sm:$0x3] %vm1824, %v1823
      %v1826 = vpack.c.bf16 %v1529, %v1526
      %v1827 = vpack.c.bf16 %v1537, %v1534
      %v1828 = vpack.c.bf16 %v1545, %v1542
      %v1829 = vpack.c.bf16 %v1553, %v1550
      %v1830 = vpack.c.bf16 %v1561, %v1558
      %v1831 = vpack.c.bf16 %v1569, %v1566
      %v1832 = vpack.c.bf16 %v1577, %v1574
      %v1833 = vpack.c.bf16 %v1585, %v1582
      %v1834 = vpack.c.bf16 %v1593, %v1590
      %v1835 = vpack.c.bf16 %v1601, %v1598
      %v1836 = vpack.c.bf16 %v1609, %v1606
      %v1837 = vpack.c.bf16 %v1617, %v1614
      %v1838 = vpack.c.bf16 %v1625, %v1622
      %v1839 = vpack.c.bf16 %v1633, %v1630
      %v1840 = vpack.c.bf16 %v1641, %v1638
      %v1841 = vpack.c.bf16 %v1649, %v1646
      %v1858 = vunpack.c.l.b16 %v1826
      %v1859 = vunpack.c.h.b16 %v1826
      %v1860 = vunpack.c.l.b16 %v1827
      %v1861 = vunpack.c.h.b16 %v1827
      %v1862 = vunpack.c.l.b16 %v1828
      %v1863 = vunpack.c.h.b16 %v1828
      %v1864 = vunpack.c.l.b16 %v1829
      %v1865 = vunpack.c.h.b16 %v1829
      %v1866 = vunpack.c.l.b16 %v1830
      %v1867 = vunpack.c.h.b16 %v1830
      %v1868 = vunpack.c.l.b16 %v1831
      %v1869 = vunpack.c.h.b16 %v1831
      %v1870 = vunpack.c.l.b16 %v1832
      %v1871 = vunpack.c.h.b16 %v1832
      %v1872 = vunpack.c.l.b16 %v1833
      %v1873 = vunpack.c.h.b16 %v1833
      %v1874 = vunpack.c.l.b16 %v1834
      %v1875 = vunpack.c.h.b16 %v1834
      %v1876 = vunpack.c.l.b16 %v1835
      %v1877 = vunpack.c.h.b16 %v1835
      %v1878 = vunpack.c.l.b16 %v1836
      %v1879 = vunpack.c.h.b16 %v1836
      %v1880 = vunpack.c.l.b16 %v1837
      %v1881 = vunpack.c.h.b16 %v1837
      %v1882 = vunpack.c.l.b16 %v1838
      %v1883 = vunpack.c.h.b16 %v1838
      %v1884 = vunpack.c.l.b16 %v1839
      %v1885 = vunpack.c.h.b16 %v1839
      %v1886 = vunpack.c.l.b16 %v1840
      %v1887 = vunpack.c.h.b16 %v1840
      %v1888 = vunpack.c.l.b16 %v1841
      %v1889 = vunpack.c.h.b16 %v1841
      %v1890 = vpack.c.b16 %v1858, %v1858
      %v1891 = vpack.c.b16 %v1859, %v1859
      %v1892 = vpack.c.b16 %v1860, %v1860
      %v1893 = vpack.c.b16 %v1861, %v1861
      %v1894 = vpack.c.b16 %v1862, %v1862
      %v1895 = vpack.c.b16 %v1863, %v1863
      %v1896 = vpack.c.b16 %v1864, %v1864
      %v1897 = vpack.c.b16 %v1865, %v1865
      %v1898 = vpack.c.b16 %v1866, %v1866
      %v1899 = vpack.c.b16 %v1867, %v1867
      %v1900 = vpack.c.b16 %v1868, %v1868
      %v1901 = vpack.c.b16 %v1869, %v1869
      %v1902 = vpack.c.b16 %v1870, %v1870
      %v1903 = vpack.c.b16 %v1871, %v1871
      %v1904 = vpack.c.b16 %v1872, %v1872
      %v1905 = vpack.c.b16 %v1873, %v1873
      %v1906 = vpack.c.b16 %v1874, %v1874
      %v1907 = vpack.c.b16 %v1875, %v1875
      %v1908 = vpack.c.b16 %v1876, %v1876
      %v1909 = vpack.c.b16 %v1877, %v1877
      %v1910 = vpack.c.b16 %v1878, %v1878
      %v1911 = vpack.c.b16 %v1879, %v1879
      %v1912 = vpack.c.b16 %v1880, %v1880
      %v1913 = vpack.c.b16 %v1881, %v1881
      %v1914 = vpack.c.b16 %v1882, %v1882
      %v1915 = vpack.c.b16 %v1883, %v1883
      %v1916 = vpack.c.b16 %v1884, %v1884
      %v1917 = vpack.c.b16 %v1885, %v1885
      %v1918 = vpack.c.b16 %v1886, %v1886
      %v1919 = vpack.c.b16 %v1887, %v1887
      %v1920 = vpack.c.b16 %v1888, %v1888
      %v1921 = vpack.c.b16 %v1889, %v1889
      %vm1954 = vcmask 60416
      %1955 = vst.msk [vmem:[%s395] sm:$0xf] %vm1954, %v1890
      %1956 = vst.msk [vmem:[%s395 + $0x4] sm:$0xf] %vm1954, %v1891
      %1957 = vst.msk [vmem:[%s395 + $0x8] sm:$0xf] %vm1954, %v1892
      %1958 = vst.msk [vmem:[%s395 + $0xc] sm:$0xf] %vm1954, %v1893
      %1959 = vst.msk [vmem:[%s395 + $0x10] sm:$0xf] %vm1954, %v1894
      %1960 = vst.msk [vmem:[%s395 + $0x14] sm:$0xf] %vm1954, %v1895
      %1961 = vst.msk [vmem:[%s395 + $0x18] sm:$0xf] %vm1954, %v1896
      %1962 = vst.msk [vmem:[%s395 + $0x1c] sm:$0xf] %vm1954, %v1897
      %1963 = vst.msk [vmem:[%s395 + $0x20] sm:$0xf] %vm1954, %v1898
      %1964 = vst.msk [vmem:[%s395 + $0x24] sm:$0xf] %vm1954, %v1899
      %1965 = vst.msk [vmem:[%s395 + $0x28] sm:$0xf] %vm1954, %v1900
      %1966 = vst.msk [vmem:[%s395 + $0x2c] sm:$0xf] %vm1954, %v1901
      %1967 = vst.msk [vmem:[%s395 + $0x30] sm:$0xf] %vm1954, %v1902
      %1968 = vst.msk [vmem:[%s395 + $0x34] sm:$0xf] %vm1954, %v1903
      %1969 = vst.msk [vmem:[%s395 + $0x38] sm:$0xf] %vm1954, %v1904
      %1970 = vst.msk [vmem:[%s395 + $0x3c] sm:$0xf] %vm1954, %v1905
      %1971 = vst.msk [vmem:[%s395 + $0x40] sm:$0xf] %vm1954, %v1906
      %1972 = vst.msk [vmem:[%s395 + $0x44] sm:$0xf] %vm1954, %v1907
      %1973 = vst.msk [vmem:[%s395 + $0x48] sm:$0xf] %vm1954, %v1908
      %1974 = vst.msk [vmem:[%s395 + $0x4c] sm:$0xf] %vm1954, %v1909
      %1975 = vst.msk [vmem:[%s395 + $0x50] sm:$0xf] %vm1954, %v1910
      %1976 = vst.msk [vmem:[%s395 + $0x54] sm:$0xf] %vm1954, %v1911
      %1977 = vst.msk [vmem:[%s395 + $0x58] sm:$0xf] %vm1954, %v1912
      %1978 = vst.msk [vmem:[%s395 + $0x5c] sm:$0xf] %vm1954, %v1913
      %1979 = vst.msk [vmem:[%s395 + $0x60] sm:$0xf] %vm1954, %v1914
      %1980 = vst.msk [vmem:[%s395 + $0x64] sm:$0xf] %vm1954, %v1915
      %1981 = vst.msk [vmem:[%s395 + $0x68] sm:$0xf] %vm1954, %v1916
      %1982 = vst.msk [vmem:[%s395 + $0x6c] sm:$0xf] %vm1954, %v1917
      %1983 = vst.msk [vmem:[%s395 + $0x70] sm:$0xf] %vm1954, %v1918
      %1984 = vst.msk [vmem:[%s395 + $0x74] sm:$0xf] %vm1954, %v1919
      %1985 = vst.msk [vmem:[%s395 + $0x78] sm:$0xf] %vm1954, %v1920
      %1986 = vst.msk [vmem:[%s395 + $0x7c] sm:$0xf] %vm1954, %v1921
      %s1987 = sadd.s32 %s21, %s22
      %s1988 = smul.u32 32, %s1987
      %p1989 = scmp.lt.s32.totalorder %s1988, 63
      %s1990 = scalar_select %p1989, %s1988, 63
      %s1991 = smul.addr %s1990, 4
      %s1992 = scalar_lea.vmem %s4, %s1991
      %p1993 = scmp.lt.s32.totalorder %s21, 1
      %s1994 = scalar_select %p1993, %s21, 1
      %p1995 = scmp.lt.s32.totalorder %s22, 0
      %s1996 = scalar_select %p1995, %s22, 0
      %s1997 = sadd.s32 %s1996, %s1994
      %s1998 = smul.addr %s1997, 2
      %s1999 = scalar_lea.vmem %s5, %s1998
      // Predicated region
      $region37: #{stacked_conv_layers.4} parent=35 // pred_check
        %p2000 = pneg %p170
      $region38: #{stacked_conv_layers.4} parent=35 // pred_check_branch
        %2002 = sbr.rel (%p2000) target = $region40
      $region39: #{stacked_conv_layers.4} parent=35 // pred_region
        %s2003 = sadd.s32 %s21, %s22
        %s2004 = smul.u32 32, %s2003
      $region40: #{stacked_conv_layers.4} parent=35 // pred_fallthru
        _
      // Predicated region
      $region41: #{stacked_conv_layers.4} parent=35 // pred_check
        %p2005 = pneg %p198
      $region42: #{stacked_conv_layers.4} parent=35 // pred_check_branch
        %2007 = sbr.rel (%p2005) target = $region44
      $region43: #{stacked_conv_layers.4} parent=35 // pred_region
        _
      $region44: #{stacked_conv_layers.4} parent=35 // pred_fallthru
        _
    $region36: #{stacked_conv_layers.4} parent=5 // pred_fallthru
      _
    %p2008 = scmp.le.s32.totalorder 2, %s12
    // Predicated region
    $region45: #{stacked_conv_layers.4} parent=5 // pred_check
      %p2009 = pneg %p2008
    $region46: #{stacked_conv_layers.4} parent=5 // pred_check_branch
      %2011 = sbr.rel (%p2009) target = $region48
    $region47: #{stacked_conv_layers.4} parent=5 // pred_region
      %s2012 = ssub.s32 %s12, 2
      // Predicated region
      $region49: #{stacked_conv_layers.4} parent=47 // pred_check
        %p2013 = pneg %p176
      $region50: #{stacked_conv_layers.4} parent=47 // pred_check_branch
        %2015 = sbr.rel (%p2013) target = $region52
      $region51: #{stacked_conv_layers.4} parent=47 // pred_region
        %s2016 = sadd.s32 %s23, %s24
        %s2017 = smul.u32 32, %s2016
        %p2018 = scmp.lt.s32.totalorder %s2017, 63
        %s2019 = scalar_select %p2018, %s2017, 63
        %s2020 = smul.addr %s2019, 4
        %s2021 = scalar_lea.vmem %s4, %s2020
      $region52: #{stacked_conv_layers.4} parent=47 // pred_fallthru
        _
      // Predicated region
      $region53: #{stacked_conv_layers.4} parent=47 // pred_check
        %p2022 = pneg %p204
      $region54: #{stacked_conv_layers.4} parent=47 // pred_check_branch
        %2024 = sbr.rel (%p2022) target = $region56
      $region55: #{stacked_conv_layers.4} parent=47 // pred_region
        %p2025 = scmp.lt.s32.totalorder %s23, 1
        %s2026 = scalar_select %p2025, %s23, 1
        %p2027 = scmp.lt.s32.totalorder %s24, 0
        %s2028 = scalar_select %p2027, %s24, 0
        %s2029 = sadd.s32 %s2028, %s2026
        %s2030 = smul.addr %s2029, 2
        %s2031 = scalar_lea.vmem %s5, %s2030
      $region56: #{stacked_conv_layers.4} parent=47 // pred_fallthru
        _
    $region48: #{stacked_conv_layers.4} parent=5 // pred_fallthru
      _
  $region6: #{stacked_conv_layers.4} parent=0 // loop_footer
    %s16 = sadd.s32 1, %s12
  $region7: #{stacked_conv_layers.4} parent=0 // loop_footer_branch
    %11 = sbr.rel target = $region3
  $region8: #{stacked_conv_layers.4} parent=0 // loop_exit
    _

// kernel: stacked_conv_layers.6
$region0: #{stacked_conv_layers.6}
  #allocation0 [shape = 'u32[]', space=smem, size = 0x4, offset = 0x4, fixed_abs, tag = 'smem constant byte address 0x4 - core index']
  #allocation1 [shape = 'u32[144,128]{1,0:T(1,128)}', space=vmem, size = 0x12000, scoped, tag = 'internal scratch']
  %s0 = inlined_call_operand.vmem [shape: bf16[2,16,18,8], index: 0, kind: input, shape index: {}, may-alias: {0,1,2}]
  %s1 = inlined_call_operand.vmem [shape: bf16[2,16,18,8], index: 1, kind: input, shape index: {}, may-alias: {0,1,2}]
  %s2 = inlined_call_operand.vmem [shape: bf16[2,16,18,8], index: 2, kind: input, shape index: {}, may-alias: {0,1,2}]
  %s3 = inlined_call_operand.vmem [shape: bf16[72,8], index: 3, kind: input, shape index: {}]
  %s4 = inlined_call_operand.vmem [shape: bf16[512,8], index: 4, kind: output, shape index: {0}]
  %s5 = inlined_call_operand.vmem [shape: f32[2,1,2,8], index: 5, kind: output, shape index: {1}]
  %6 = xla_tuple %s4, %s5
  %s7 = sld [smem:[#allocation0]]
  $region57: #{stacked_conv_layers.6} parent=0
    _
  %s9 = ssub.s32 1, %s7
  %s10 = scalar_select 0, %s9, %s7
  loop: start=0, step=1, limit=4
  $region2: #{stacked_conv_layers.6} parent=0 // loop_pre_header
    _
  $region3: #{stacked_conv_layers.6} parent=0 // loop_header
    %s12 = sphi 0, %s16
    %p13 = scmp.ge.s32.totalorder %s12, 4
    %s19 = sphi 0, %s31
    %s20 = sphi 0, %s27
    %s21 = sphi 0, %s19
    %s22 = sphi 0, %s20
    %s23 = sphi 0, %s21
    %s24 = sphi 0, %s22
    %s44 = sphi 0, %s46
    %s47 = sphi 0, %s44
    %s48 = sphi 0, %s47
    %s64 = sphi 0, %s48
    %s72 = sphi 0, %s74
    %s75 = sphi 0, %s72
    %s76 = sphi 0, %s75
    %s92 = sphi 0, %s76
    %s108 = sphi 0, %s110
    %s111 = sphi 0, %s108
    %s112 = sphi 0, %s111
    %s128 = sphi 0, %s112
    %s132 = sphi 0, %s132
    %s134 = sphi 0, %s132
    %s135 = sphi 0, %s134
    %s149 = sphi 0, %s135
    %s157 = sphi 0, %s159
    %s160 = sphi 0, %s157
    %s161 = sphi 0, %s160
    %s177 = sphi 0, %s161
    %s185 = sphi 0, %s187
    %s188 = sphi 0, %s185
    %s189 = sphi 0, %s188
    %s205 = sphi 0, %s189
  $region4: #{stacked_conv_layers.6} parent=0 // loop_header_branch
    %15 = sbr.rel (%p13) target = $region8
  $region5: #{stacked_conv_layers.6} parent=0 // loop_body
    %s17 = ssub.s32 %s12, 1
    %s18 = ssub.s32 %s12, 2
    %s25 = sadd.s32 1, %s20
    %p26 = scmp.ge.s32.totalorder %s25, 1
    %s27 = scalar_select %p26, 0, %s25
    %s28 = sadd.s32 1, %s19
    %s29 = scalar_select %p26, %s28, %s19
    %p30 = scmp.ge.s32.totalorder %s29, 2
    %s31 = scalar_select %p30, 0, %s29
    %s32 = smul.u32 %s20, 16
    %s33 = ssub.s32 %s32, 1
    %p34 = scmp.gt.s32.totalorder %s33, 0
    %s35 = scalar_select %p34, %s33, 0
    %s36 = smul.u32 %s27, 16
    %s37 = ssub.s32 %s36, 1
    %p38 = scmp.gt.s32.totalorder %s37, 0
    %s39 = scalar_select %p38, %s37, 0
    %s40 = ssub.s32 %s19, %s31
    %s41 = ssub.s32 %s35, %s39
    %s42 = sor.u32 %s40, %s41
    %p43 = scmp.eq.s32.totalorder %s42, 0
    %s45 = sadd.s32 %s44, 1
    %s46 = scalar_select %p43, %s44, %s45
    %p49 = pneg %p43
    %p50 = scmp.eq.s32.totalorder %s12, 1
    %p51 = por %p49, %p50
    %p52 = scmp.ne.s32.totalorder %s44, %s47
    %p53 = scmp.eq.s32.totalorder %s12, 0
    %p54 = por %p52, %p53
    %p55 = scmp.ne.s32.totalorder %s44, %s47
    %p56 = scmp.eq.s32.totalorder %s17, 1
    %p57 = por %p55, %p56
    %p58 = scmp.ne.s32.totalorder %s47, %s48
    %p59 = scmp.eq.s32.totalorder %s17, 0
    %p60 = por %p58, %p59
    %p61 = scmp.ne.s32.totalorder %s47, %s48
    %p62 = scmp.eq.s32.totalorder %s18, 1
    %p63 = por %p61, %p62
    %p65 = scmp.ne.s32.totalorder %s48, %s64
    %p66 = scmp.eq.s32.totalorder %s18, 0
    %p67 = por %p65, %p66
    %s68 = ssub.s32 %s19, %s31
    %s69 = ssub.s32 %s20, %s27
    %s70 = sor.u32 %s68, %s69
    %p71 = scmp.eq.s32.totalorder %s70, 0
    %s73 = sadd.s32 %s72, 1
    %s74 = scalar_select %p71, %s72, %s73
    %p77 = pneg %p71
    %p78 = scmp.eq.s32.totalorder %s12, 1
    %p79 = por %p77, %p78
    %p80 = scmp.ne.s32.totalorder %s72, %s75
    %p81 = scmp.eq.s32.totalorder %s12, 0
    %p82 = por %p80, %p81
    %p83 = scmp.ne.s32.totalorder %s72, %s75
    %p84 = scmp.eq.s32.totalorder %s17, 1
    %p85 = por %p83, %p84
    %p86 = scmp.ne.s32.totalorder %s75, %s76
    %p87 = scmp.eq.s32.totalorder %s17, 0
    %p88 = por %p86, %p87
    %p89 = scmp.ne.s32.totalorder %s75, %s76
    %p90 = scmp.eq.s32.totalorder %s18, 1
    %p91 = por %p89, %p90
    %p93 = scmp.ne.s32.totalorder %s76, %s92
    %p94 = scmp.eq.s32.totalorder %s18, 0
    %p95 = por %p93, %p94
    %s96 = smul.u32 %s20, 16
    %s97 = sadd.s32 %s96, 16
    %p98 = scmp.lt.s32.totalorder %s97, 15
    %s99 = scalar_select %p98, %s97, 15
    %s100 = smul.u32 %s27, 16
    %s101 = sadd.s32 %s100, 16
    %p102 = scmp.lt.s32.totalorder %s101, 15
    %s103 = scalar_select %p102, %s101, 15
    %s104 = ssub.s32 %s19, %s31
    %s105 = ssub.s32 %s99, %s103
    %s106 = sor.u32 %s104, %s105
    %p107 = scmp.eq.s32.totalorder %s106, 0
    %s109 = sadd.s32 %s108, 1
    %s110 = scalar_select %p107, %s108, %s109
    %p113 = pneg %p107
    %p114 = scmp.eq.s32.totalorder %s12, 1
    %p115 = por %p113, %p114
    %p116 = scmp.ne.s32.totalorder %s108, %s111
    %p117 = scmp.eq.s32.totalorder %s12, 0
    %p118 = por %p116, %p117
    %p119 = scmp.ne.s32.totalorder %s108, %s111
    %p120 = scmp.eq.s32.totalorder %s17, 1
    %p121 = por %p119, %p120
    %p122 = scmp.ne.s32.totalorder %s111, %s112
    %p123 = scmp.eq.s32.totalorder %s17, 0
    %p124 = por %p122, %p123
    %p125 = scmp.ne.s32.totalorder %s111, %s112
    %p126 = scmp.eq.s32.totalorder %s18, 1
    %p127 = por %p125, %p126
    %p129 = scmp.ne.s32.totalorder %s112, %s128
    %p130 = scmp.eq.s32.totalorder %s18, 0
    %p131 = por %p129, %p130
    %s133 = sadd.s32 %s132, 1
    %p136 = scmp.eq.s32.totalorder %s12, 1
    %p137 = scmp.ne.s32.totalorder %s132, %s134
    %p138 = scmp.eq.s32.totalorder %s12, 0
    %p139 = por %p137, %p138
    %p140 = scmp.ne.s32.totalorder %s132, %s134
    %p141 = scmp.eq.s32.totalorder %s17, 1
    %p142 = por %p140, %p141
    %p143 = scmp.ne.s32.totalorder %s134, %s135
    %p144 = scmp.eq.s32.totalorder %s17, 0
    %p145 = por %p143, %p144
    %p146 = scmp.ne.s32.totalorder %s134, %s135
    %p147 = scmp.eq.s32.totalorder %s18, 1
    %p148 = por %p146, %p147
    %p150 = scmp.ne.s32.totalorder %s135, %s149
    %p151 = scmp.eq.s32.totalorder %s18, 0
    %p152 = por %p150, %p151
    %s153 = sadd.s32 %s19, %s20
    %s154 = sadd.s32 %s31, %s27
    %s155 = ssub.s32 %s153, %s154
    %p156 = scmp.eq.s32.totalorder %s155, 0
    %s158 = sadd.s32 %s157, 1
    %s159 = scalar_select %p156, %s157, %s158
    %p162 = pneg %p156
    %p163 = scmp.eq.s32.totalorder %s12, 1
    %p164 = por %p162, %p163
    %p165 = scmp.ne.s32.totalorder %s157, %s160
    %p166 = scmp.eq.s32.totalorder %s12, 0
    %p167 = por %p165, %p166
    %p168 = scmp.ne.s32.totalorder %s157, %s160
    %p169 = scmp.eq.s32.totalorder %s17, 1
    %p170 = por %p168, %p169
    %p171 = scmp.ne.s32.totalorder %s160, %s161
    %p172 = scmp.eq.s32.totalorder %s17, 0
    %p173 = por %p171, %p172
    %p174 = scmp.ne.s32.totalorder %s160, %s161
    %p175 = scmp.eq.s32.totalorder %s18, 1
    %p176 = por %p174, %p175
    %p178 = scmp.ne.s32.totalorder %s161, %s177
    %p179 = scmp.eq.s32.totalorder %s18, 0
    %p180 = por %p178, %p179
    %s181 = ssub.s32 %s19, %s31
    %s182 = ssub.s32 %s20, %s27
    %s183 = sor.u32 %s181, %s182
    %p184 = scmp.eq.s32.totalorder %s183, 0
    %s186 = sadd.s32 %s185, 1
    %s187 = scalar_select %p184, %s185, %s186
    %p190 = pneg %p184
    %p191 = scmp.eq.s32.totalorder %s12, 1
    %p192 = por %p190, %p191
    %p193 = scmp.ne.s32.totalorder %s185, %s188
    %p194 = scmp.eq.s32.totalorder %s12, 0
    %p195 = por %p193, %p194
    %p196 = scmp.ne.s32.totalorder %s185, %s188
    %p197 = scmp.eq.s32.totalorder %s17, 1
    %p198 = por %p196, %p197
    %p199 = scmp.ne.s32.totalorder %s188, %s189
    %p200 = scmp.eq.s32.totalorder %s17, 0
    %p201 = por %p199, %p200
    %p202 = scmp.ne.s32.totalorder %s188, %s189
    %p203 = scmp.eq.s32.totalorder %s18, 1
    %p204 = por %p202, %p203
    %p206 = scmp.ne.s32.totalorder %s189, %s205
    %p207 = scmp.eq.s32.totalorder %s18, 0
    %p208 = por %p206, %p207
    %p209 = scmp.le.s32.totalorder 1, %s12
    %p210 = scmp.lt.s32.totalorder %s12, 3
    %p211 = pnand %p209, %p210
    %p212 = pneg %p211
    // Predicated region
    $region9: #{stacked_conv_layers.6} parent=5 // pred_check
      _
    $region10: #{stacked_conv_layers.6} parent=5 // pred_check_branch
      %214 = sbr.rel (%p211) target = $region12
    $region11: #{stacked_conv_layers.6} parent=5 // pred_region
      %s215 = ssub.s32 %s12, 1
      // Predicated region
      $region13: #{stacked_conv_layers.6} parent=11 // pred_check
        %p216 = pneg %p145
      $region14: #{stacked_conv_layers.6} parent=11 // pred_check_branch
        %218 = sbr.rel (%p216) target = $region16
      $region15: #{stacked_conv_layers.6} parent=11 // pred_region
        _
      $region16: #{stacked_conv_layers.6} parent=11 // pred_fallthru
        _
    $region12: #{stacked_conv_layers.6} parent=5 // pred_fallthru
      _
    %p219 = scmp.lt.s32.totalorder %s12, 2
    // Predicated region
    $region17: #{stacked_conv_layers.6} parent=5 // pred_check
      %p220 = pneg %p219
    $region18: #{stacked_conv_layers.6} parent=5 // pred_check_branch
      %222 = sbr.rel (%p220) target = $region20
    $region19: #{stacked_conv_layers.6} parent=5 // pred_region
      // Predicated region
      $region21: #{stacked_conv_layers.6} parent=19 // pred_check
        %p223 = pneg %p54
      $region22: #{stacked_conv_layers.6} parent=19 // pred_check_branch
        %225 = sbr.rel (%p223) target = $region24
      $region23: #{stacked_conv_layers.6} parent=19 // pred_region
        %s226 = smul.u32 %s20, 16
        %s227 = ssub.s32 %s226, 1
        %p228 = scmp.gt.s32.totalorder %s227, 0
        %s229 = scalar_select %p228, %s227, 0
        %p230 = scmp.lt.s32.totalorder %s19, 1
        %s231 = scalar_select %p230, %s19, 1
        %p232 = scmp.lt.s32.totalorder %s229, 15
        %s233 = scalar_select %p232, %s229, 15
        %s234 = smul.addr %s233, 3
        %s235 = smul.addr %s231, 48
        %s236 = sadd.s32 %s234, %s235
        %s237 = smul.addr %s236, 4
        %s238 = scalar_lea.vmem %s0, %s237
        %s239 = smul.u32 %s20, 16
        %s240 = ssub.s32 %s239, 1
        %p241 = scmp.gt.s32.totalorder %s240, 0
        %s242 = scalar_select %p241, %s240, 0
      $region24: #{stacked_conv_layers.6} parent=19 // pred_fallthru
        _
      // Predicated region
      $region25: #{stacked_conv_layers.6} parent=19 // pred_check
        %p243 = pneg %p82
      $region26: #{stacked_conv_layers.6} parent=19 // pred_check_branch
        %245 = sbr.rel (%p243) target = $region28
      $region27: #{stacked_conv_layers.6} parent=19 // pred_region
        %s246 = smul.u32 16, %s20
        %p247 = scmp.lt.s32.totalorder %s19, 1
        %s248 = scalar_select %p247, %s19, 1
        %p249 = scmp.lt.s32.totalorder %s246, 15
        %s250 = scalar_select %p249, %s246, 15
        %s251 = smul.addr %s250, 3
        %s252 = smul.addr %s248, 48
        %s253 = sadd.s32 %s251, %s252
        %s254 = smul.addr %s253, 4
        %s255 = scalar_lea.vmem %s1, %s254
        %s256 = smul.u32 16, %s20
      $region28: #{stacked_conv_layers.6} parent=19 // pred_fallthru
        _
      // Predicated region
      $region29: #{stacked_conv_layers.6} parent=19 // pred_check
        %p257 = pneg %p118
      $region30: #{stacked_conv_layers.6} parent=19 // pred_check_branch
        %259 = sbr.rel (%p257) target = $region32
      $region31: #{stacked_conv_layers.6} parent=19 // pred_region
        %s260 = smul.u32 %s20, 16
        %s261 = sadd.s32 %s260, 16
        %p262 = scmp.lt.s32.totalorder %s261, 15
        %s263 = scalar_select %p262, %s261, 15
        %p264 = scmp.lt.s32.totalorder %s19, 1
        %s265 = scalar_select %p264, %s19, 1
        %p266 = scmp.lt.s32.totalorder %s263, 15
        %s267 = scalar_select %p266, %s263, 15
        %s268 = smul.addr %s267, 3
        %s269 = smul.addr %s265, 48
        %s270 = sadd.s32 %s268, %s269
        %s271 = smul.addr %s270, 4
        %s272 = scalar_lea.vmem %s2, %s271
        %s273 = smul.u32 %s20, 16
        %s274 = sadd.s32 %s273, 16
        %p275 = scmp.lt.s32.totalorder %s274, 15
        %s276 = scalar_select %p275, %s274, 15
      $region32: #{stacked_conv_layers.6} parent=19 // pred_fallthru
        _
    $region20: #{stacked_conv_layers.6} parent=5 // pred_fallthru
      _
    %p277 = scmp.le.s32.totalorder 1, %s12
    %p278 = scmp.lt.s32.totalorder %s12, 3
    %p279 = pnand %p277, %p278
    %p280 = pneg %p279
    // Predicated region
    $region33: #{stacked_conv_layers.6} parent=5 // pred_check
      _
    $region34: #{stacked_conv_layers.6} parent=5 // pred_check_branch
      %282 = sbr.rel (%p279) target = $region36
    $region35: #{stacked_conv_layers.6} parent=5 // pred_region
      %s283 = ssub.s32 %s12, 1
      %s284 = smul.u32 %s22, 16
      %s285 = ssub.s32 %s284, 1
      %p286 = scmp.gt.s32.totalorder %s285, 0
      %s287 = scalar_select %p286, %s285, 0
      %p288 = scmp.lt.s32.totalorder %s21, 1
      %s289 = scalar_select %p288, %s21, 1
      %p290 = scmp.lt.s32.totalorder %s287, 15
      %s291 = scalar_select %p290, %s287, 15
      %s292 = smul.addr %s291, 3
      %s293 = smul.addr %s289, 48
      %s294 = sadd.s32 %s292, %s293
      %s295 = smul.addr %s294, 4
      %s296 = scalar_lea.vmem %s0, %s295
      %p297 = pneg %p60
      %p298 = pneg %p57
      %s299 = smul.u32 16, %s22
      %p300 = scmp.lt.s32.totalorder %s21, 1
      %s301 = scalar_select %p300, %s21, 1
      %p302 = scmp.lt.s32.totalorder %s299, 15
      %s303 = scalar_select %p302, %s299, 15
      %s304 = smul.addr %s303, 3
      %s305 = smul.addr %s301, 48
      %s306 = sadd.s32 %s304, %s305
      %s307 = smul.addr %s306, 4
      %s308 = scalar_lea.vmem %s1, %s307
      %p309 = pneg %p88
      %p310 = pneg %p85
      %s311 = smul.u32 %s22, 16
      %s312 = sadd.s32 %s311, 16
      %p313 = scmp.lt.s32.totalorder %s312, 15
      %s314 = scalar_select %p313, %s312, 15
      %p315 = scmp.lt.s32.totalorder %s21, 1
      %s316 = scalar_select %p315, %s21, 1
      %p317 = scmp.lt.s32.totalorder %s314, 15
      %s318 = scalar_select %p317, %s314, 15
      %s319 = smul.addr %s318, 3
      %s320 = smul.addr %s316, 48
      %s321 = sadd.s32 %s319, %s320
      %s322 = smul.addr %s321, 4
      %s323 = scalar_lea.vmem %s2, %s322
      %p324 = pneg %p124
      %p325 = pneg %p121
      %p326 = pneg %p145
      %p327 = pneg %p142
      %p328 = pneg %p173
      %p329 = pneg %p170
      %s330 = sadd.s32 %s21, %s22
      %s331 = smul.u32 32, %s330
      %p332 = scmp.lt.s32.totalorder %s331, 63
      %s333 = scalar_select %p332, %s331, 63
      %s334 = smul.addr %s333, 4
      %s335 = scalar_lea.vmem %s4, %s334
      %p336 = pneg %p201
      %p337 = pneg %p198
      %p338 = scmp.lt.s32.totalorder %s21, 1
      %s339 = scalar_select %p338, %s21, 1
      %p340 = scmp.lt.s32.totalorder %s22, 0
      %s341 = scalar_select %p340, %s22, 0
      %s342 = sadd.s32 %s341, %s339
      %s343 = smul.addr %s342, 2
      %s344 = scalar_lea.vmem %s5, %s343
      %s345 = smul.u32 %s22, 16
      %s346 = ssub.s32 %s345, 1
      %p347 = scmp.gt.s32.totalorder %s346, 0
      %s348 = scalar_select %p347, %s346, 0
      %p349 = scmp.lt.s32.totalorder %s21, 1
      %s350 = scalar_select %p349, %s21, 1
      %p351 = scmp.lt.s32.totalorder %s348, 15
      %s352 = scalar_select %p351, %s348, 15
      %s353 = smul.addr %s352, 3
      %s354 = smul.addr %s350, 48
      %s355 = sadd.s32 %s353, %s354
      %s356 = smul.addr %s355, 4
      %s357 = scalar_lea.vmem %s0, %s356
      %s358 = smul.u32 %s22, 16
      %s359 = ssub.s32 %s358, 1
      %p360 = scmp.gt.s32.totalorder %s359, 0
      %s361 = scalar_select %p360, %s359, 0
      %s362 = smul.u32 16, %s22
      %p363 = scmp.lt.s32.totalorder %s21, 1
      %s364 = scalar_select %p363, %s21, 1
      %p365 = scmp.lt.s32.totalorder %s362, 15
      %s366 = scalar_select %p365, %s362, 15
      %s367 = smul.addr %s366, 3
      %s368 = smul.addr %s364, 48
      %s369 = sadd.s32 %s367, %s368
      %s370 = smul.addr %s369, 4
      %s371 = scalar_lea.vmem %s1, %s370
      %s372 = smul.u32 16, %s22
      %s373 = smul.u32 %s22, 16
      %s374 = sadd.s32 %s373, 16
      %p375 = scmp.lt.s32.totalorder %s374, 15
      %s376 = scalar_select %p375, %s374, 15
      %p377 = scmp.lt.s32.totalorder %s21, 1
      %s378 = scalar_select %p377, %s21, 1
      %p379 = scmp.lt.s32.totalorder %s376, 15
      %s380 = scalar_select %p379, %s376, 15
      %s381 = smul.addr %s380, 3
      %s382 = smul.addr %s378, 48
      %s383 = sadd.s32 %s381, %s382
      %s384 = smul.addr %s383, 4
      %s385 = scalar_lea.vmem %s2, %s384
      %s386 = smul.u32 %s22, 16
      %s387 = sadd.s32 %s386, 16
      %p388 = scmp.lt.s32.totalorder %s387, 15
      %s389 = scalar_select %p388, %s387, 15
      %s390 = sadd.s32 %s21, %s22
      %s391 = smul.u32 32, %s390
      %p392 = scmp.lt.s32.totalorder %s391, 63
      %s393 = scalar_select %p392, %s391, 63
      %s394 = smul.addr %s393, 4
      %s395 = scalar_lea.vmem %s4, %s394
      %s396 = sadd.s32 %s21, %s22
      %s397 = smul.u32 32, %s396
      %p398 = scmp.lt.s32.totalorder %s21, 1
      %s399 = scalar_select %p398, %s21, 1
      %p400 = scmp.lt.s32.totalorder %s22, 0
      %s401 = scalar_select %p400, %s22, 0
      %s402 = sadd.s32 %s401, %s399
      %s403 = smul.addr %s402, 2
      %s404 = scalar_lea.vmem %s5, %s403
      %p406 = scmp.gt.s32.totalorder %s22, 0
      %s407 = scalar_select %p406, 1.0, 0.0
      %p409 = scmp.ne.f32.partialorder %s407, %s407
      %s410 = sshrl.u32 %s407, 16
      %s411 = sand.u32 %s410, 1
      %s412 = sadd.s32 32767, %s411
      %s413 = sadd.s32 %s407, %s412
      %s414 = sand.u32 %s413, 4294901760
      %s415 = scalar_select %p409, 2143289344, %s414
      %s417 = sshrl.u32 %s415, 16
      %p418 = scmp.lt.s32.totalorder %s22, 0
      %s419 = scalar_select %p418, 1.0, 0.0
      %p421 = scmp.ne.f32.partialorder %s419, %s419
      %s422 = sshrl.u32 %s419, 16
      %s423 = sand.u32 %s422, 1
      %s424 = sadd.s32 32767, %s423
      %s425 = sadd.s32 %s419, %s424
      %s426 = sand.u32 %s425, 4294901760
      %s427 = scalar_select %p421, 2143289344, %s426
      %s429 = sshrl.u32 %s427, 16
      %v430 = vld [vmem:[%s357] sm:$0xf]
      %v431 = vld [vmem:[%s357 + $0x4] sm:$0xf]
      %v432 = vld [vmem:[%s357 + $0x8] sm:$0x1]
      %s433 = sshll.u32 %s417, 16
      %s434 = sor.u32 %s417, %s433
      %v435 = vstv %s434
      %v437 = vmul.bf16 %v430, %v435
      %v438 = vmul.bf16 %v431, %v435
      %v439 = vmul.bf16 %v432, %v435
      %v440 = vld [vmem:[%s371] sm:$0xf]
      %v441 = vld [vmem:[%s371 + $0x4] sm:$0xf]
      %v442 = vld [vmem:[%s371 + $0x8] sm:$0x1]
      %v443 = vld [vmem:[%s371 + $0xc] sm:$0xf]
      %v444 = vld [vmem:[%s371 + $0x10] sm:$0xf]
      %v445 = vld [vmem:[%s371 + $0x14] sm:$0x1]
      %v446 = vld [vmem:[%s371 + $0x18] sm:$0xf]
      %v447 = vld [vmem:[%s371 + $0x1c] sm:$0xf]
      %v448 = vld [vmem:[%s371 + $0x20] sm:$0x1]
      %v449 = vld [vmem:[%s371 + $0x24] sm:$0xf]
      %v450 = vld [vmem:[%s371 + $0x28] sm:$0xf]
      %v451 = vld [vmem:[%s371 + $0x2c] sm:$0x1]
      %v452 = vld [vmem:[%s371 + $0x30] sm:$0xf]
      %v453 = vld [vmem:[%s371 + $0x34] sm:$0xf]
      %v454 = vld [vmem:[%s371 + $0x38] sm:$0x1]
      %v455 = vld [vmem:[%s371 + $0x3c] sm:$0xf]
      %v456 = vld [vmem:[%s371 + $0x40] sm:$0xf]
      %v457 = vld [vmem:[%s371 + $0x44] sm:$0x1]
      %v458 = vld [vmem:[%s371 + $0x48] sm:$0xf]
      %v459 = vld [vmem:[%s371 + $0x4c] sm:$0xf]
      %v460 = vld [vmem:[%s371 + $0x50] sm:$0x1]
      %v461 = vld [vmem:[%s371 + $0x54] sm:$0xf]
      %v462 = vld [vmem:[%s371 + $0x58] sm:$0xf]
      %v463 = vld [vmem:[%s371 + $0x5c] sm:$0x1]
      %v464 = vld [vmem:[%s371 + $0x60] sm:$0xf]
      %v465 = vld [vmem:[%s371 + $0x64] sm:$0xf]
      %v466 = vld [vmem:[%s371 + $0x68] sm:$0x1]
      %v467 = vld [vmem:[%s371 + $0x6c] sm:$0xf]
      %v468 = vld [vmem:[%s371 + $0x70] sm:$0xf]
      %v469 = vld [vmem:[%s371 + $0x74] sm:$0x1]
      %v470 = vld [vmem:[%s371 + $0x78] sm:$0xf]
      %v471 = vld [vmem:[%s371 + $0x7c] sm:$0xf]
      %v472 = vld [vmem:[%s371 + $0x80] sm:$0x1]
      %v473 = vld [vmem:[%s371 + $0x84] sm:$0xf]
      %v474 = vld [vmem:[%s371 + $0x88] sm:$0xf]
      %v475 = vld [vmem:[%s371 + $0x8c] sm:$0x1]
      %v476 = vld [vmem:[%s371 + $0x90] sm:$0xf]
      %v477 = vld [vmem:[%s371 + $0x94] sm:$0xf]
      %v478 = vld [vmem:[%s371 + $0x98] sm:$0x1]
      %v479 = vld [vmem:[%s371 + $0x9c] sm:$0xf]
      %v480 = vld [vmem:[%s371 + $0xa0] sm:$0xf]
      %v481 = vld [vmem:[%s371 + $0xa4] sm:$0x1]
      %v482 = vld [vmem:[%s371 + $0xa8] sm:$0xf]
      %v483 = vld [vmem:[%s371 + $0xac] sm:$0xf]
      %v484 = vld [vmem:[%s371 + $0xb0] sm:$0x1]
      %v485 = vld [vmem:[%s371 + $0xb4] sm:$0xf]
      %v486 = vld [vmem:[%s371 + $0xb8] sm:$0xf]
      %v487 = vld [vmem:[%s371 + $0xbc] sm:$0x1]
      %v488 = vld [vmem:[%s385] sm:$0xf]
      %v489 = vld [vmem:[%s385 + $0x4] sm:$0xf]
      %v490 = vld [vmem:[%s385 + $0x8] sm:$0x1]
      %s491 = sshll.u32 %s429, 16
      %s492 = sor.u32 %s429, %s491
      %v493 = vstv %s492
      %v495 = vmul.bf16 %v488, %v493
      %v496 = vmul.bf16 %v489, %v493
      %v497 = vmul.bf16 %v490, %v493
      %v530 = vunpack.c.l.b16 %v437
      %v531 = vunpack.c.l.b16 %v438
      %v532 = vunpack.c.l.b16 %v440
      %v533 = vunpack.c.l.b16 %v441
      %v534 = vunpack.c.l.b16 %v443
      %v535 = vunpack.c.l.b16 %v444
      %v536 = vunpack.c.l.b16 %v446
      %v537 = vunpack.c.l.b16 %v447
      %v538 = vunpack.c.l.b16 %v449
      %v539 = vunpack.c.l.b16 %v450
      %v540 = vunpack.c.l.b16 %v452
      %v541 = vunpack.c.l.b16 %v453
      %v542 = vunpack.c.l.b16 %v455
      %v543 = vunpack.c.l.b16 %v456
      %v544 = vunpack.c.l.b16 %v458
      %v545 = vunpack.c.l.b16 %v459
      %v546 = vunpack.c.l.b16 %v461
      %v547 = vunpack.c.l.b16 %v462
      %v548 = vunpack.c.l.b16 %v464
      %v549 = vunpack.c.l.b16 %v465
      %v550 = vunpack.c.l.b16 %v467
      %v551 = vunpack.c.l.b16 %v468
      %v552 = vunpack.c.l.b16 %v470
      %v553 = vunpack.c.l.b16 %v471
      %v554 = vunpack.c.l.b16 %v473
      %v555 = vunpack.c.l.b16 %v474
      %v556 = vunpack.c.l.b16 %v476
      %v557 = vunpack.c.l.b16 %v477
      %v558 = vunpack.c.l.b16 %v479
      %v559 = vunpack.c.l.b16 %v480
      %v560 = vunpack.c.l.b16 %v482
      %v561 = vunpack.c.l.b16 %v483
      %v562 = vpack.c.b16 %v531, %v530
      %v563 = vpack.c.b16 %v533, %v532
      %v564 = vpack.c.b16 %v535, %v534
      %v565 = vpack.c.b16 %v537, %v536
      %v566 = vpack.c.b16 %v539, %v538
      %v567 = vpack.c.b16 %v541, %v540
      %v568 = vpack.c.b16 %v543, %v542
      %v569 = vpack.c.b16 %v545, %v544
      %v570 = vpack.c.b16 %v547, %v546
      %v571 = vpack.c.b16 %v549, %v548
      %v572 = vpack.c.b16 %v551, %v550
      %v573 = vpack.c.b16 %v553, %v552
      %v574 = vpack.c.b16 %v555, %v554
      %v575 = vpack.c.b16 %v557, %v556
      %v576 = vpack.c.b16 %v559, %v558
      %v577 = vpack.c.b16 %v561, %v560
      %v594 = vunpack.c.l.b16 %v439
      %v595 = vunpack.c.l.b16 %v442
      %v596 = vunpack.c.l.b16 %v445
      %v597 = vunpack.c.l.b16 %v448
      %v598 = vunpack.c.l.b16 %v451
      %v599 = vunpack.c.l.b16 %v454
      %v600 = vunpack.c.l.b16 %v457
      %v601 = vunpack.c.l.b16 %v460
      %v602 = vunpack.c.l.b16 %v463
      %v603 = vunpack.c.l.b16 %v466
      %v604 = vunpack.c.l.b16 %v469
      %v605 = vunpack.c.l.b16 %v472
      %v606 = vunpack.c.l.b16 %v475
      %v607 = vunpack.c.l.b16 %v478
      %v608 = vunpack.c.l.b16 %v481
      %v609 = vunpack.c.l.b16 %v484
      %v610 = vpack.c.b16 %v594, %v594
      %v611 = vpack.c.b16 %v595, %v595
      %v612 = vpack.c.b16 %v596, %v596
      %v613 = vpack.c.b16 %v597, %v597
      %v614 = vpack.c.b16 %v598, %v598
      %v615 = vpack.c.b16 %v599, %v599
      %v616 = vpack.c.b16 %v600, %v600
      %v617 = vpack.c.b16 %v601, %v601
      %v618 = vpack.c.b16 %v602, %v602
      %v619 = vpack.c.b16 %v603, %v603
      %v620 = vpack.c.b16 %v604, %v604
      %v621 = vpack.c.b16 %v605, %v605
      %v622 = vpack.c.b16 %v606, %v606
      %v623 = vpack.c.b16 %v607, %v607
      %v624 = vpack.c.b16 %v608, %v608
      %v625 = vpack.c.b16 %v609, %v609
      %vm626 = vsmask.f32 7424
      %v628 = vshrl.u32 %v562, 16
      %v630 = vshll.u32 %v562, 16
      %v632 = vrot.slane %v630, 1
      %v633 = vor.u32 %v628, %v632
      %v635 = vshll.u32 %v610, 16
      %v637 = vrot.slane %v635, 1
      %v638 = vsel %vm626, %v633, %v637
      %v640 = vshrl.u32 %v563, 16
      %v642 = vshll.u32 %v563, 16
      %v644 = vrot.slane %v642, 1
      %v645 = vor.u32 %v640, %v644
      %v647 = vshll.u32 %v611, 16
      %v649 = vrot.slane %v647, 1
      %v650 = vsel %vm626, %v645, %v649
      %v652 = vshrl.u32 %v564, 16
      %v654 = vshll.u32 %v564, 16
      %v656 = vrot.slane %v654, 1
      %v657 = vor.u32 %v652, %v656
      %v659 = vshll.u32 %v612, 16
      %v661 = vrot.slane %v659, 1
      %v662 = vsel %vm626, %v657, %v661
      %v664 = vshrl.u32 %v565, 16
      %v666 = vshll.u32 %v565, 16
      %v668 = vrot.slane %v666, 1
      %v669 = vor.u32 %v664, %v668
      %v671 = vshll.u32 %v613, 16
      %v673 = vrot.slane %v671, 1
      %v674 = vsel %vm626, %v669, %v673
      %v676 = vshrl.u32 %v566, 16
      %v678 = vshll.u32 %v566, 16
      %v680 = vrot.slane %v678, 1
      %v681 = vor.u32 %v676, %v680
      %v683 = vshll.u32 %v614, 16
      %v685 = vrot.slane %v683, 1
      %v686 = vsel %vm626, %v681, %v685
      %v688 = vshrl.u32 %v567, 16
      %v690 = vshll.u32 %v567, 16
      %v692 = vrot.slane %v690, 1
      %v693 = vor.u32 %v688, %v692
      %v695 = vshll.u32 %v615, 16
      %v697 = vrot.slane %v695, 1
      %v698 = vsel %vm626, %v693, %v697
      %v700 = vshrl.u32 %v568, 16
      %v702 = vshll.u32 %v568, 16
      %v704 = vrot.slane %v702, 1
      %v705 = vor.u32 %v700, %v704
      %v707 = vshll.u32 %v616, 16
      %v709 = vrot.slane %v707, 1
      %v710 = vsel %vm626, %v705, %v709
      %v712 = vshrl.u32 %v569, 16
      %v714 = vshll.u32 %v569, 16
      %v716 = vrot.slane %v714, 1
      %v717 = vor.u32 %v712, %v716
      %v719 = vshll.u32 %v617, 16
      %v721 = vrot.slane %v719, 1
      %v722 = vsel %vm626, %v717, %v721
      %v724 = vshrl.u32 %v570, 16
      %v726 = vshll.u32 %v570, 16
      %v728 = vrot.slane %v726, 1
      %v729 = vor.u32 %v724, %v728
      %v731 = vshll.u32 %v618, 16
      %v733 = vrot.slane %v731, 1
      %v734 = vsel %vm626, %v729, %v733
      %v736 = vshrl.u32 %v571, 16
      %v738 = vshll.u32 %v571, 16
      %v740 = vrot.slane %v738, 1
      %v741 = vor.u32 %v736, %v740
      %v743 = vshll.u32 %v619, 16
      %v745 = vrot.slane %v743, 1
      %v746 = vsel %vm626, %v741, %v745
      %v748 = vshrl.u32 %v572, 16
      %v750 = vshll.u32 %v572, 16
      %v752 = vrot.slane %v750, 1
      %v753 = vor.u32 %v748, %v752
      %v755 = vshll.u32 %v620, 16
      %v757 = vrot.slane %v755, 1
      %v758 = vsel %vm626, %v753, %v757
      %v760 = vshrl.u32 %v573, 16
      %v762 = vshll.u32 %v573, 16
      %v764 = vrot.slane %v762, 1
      %v765 = vor.u32 %v760, %v764
      %v767 = vshll.u32 %v621, 16
      %v769 = vrot.slane %v767, 1
      %v770 = vsel %vm626, %v765, %v769
      %v772 = vshrl.u32 %v574, 16
      %v774 = vshll.u32 %v574, 16
      %v776 = vrot.slane %v774, 1
      %v777 = vor.u32 %v772, %v776
      %v779 = vshll.u32 %v622, 16
      %v781 = vrot.slane %v779, 1
      %v782 = vsel %vm626, %v777, %v781
      %v784 = vshrl.u32 %v575, 16
      %v786 = vshll.u32 %v575, 16
      %v788 = vrot.slane %v786, 1
      %v789 = vor.u32 %v784, %v788
      %v791 = vshll.u32 %v623, 16
      %v793 = vrot.slane %v791, 1
      %v794 = vsel %vm626, %v789, %v793
      %v796 = vshrl.u32 %v576, 16
      %v798 = vshll.u32 %v576, 16
      %v800 = vrot.slane %v798, 1
      %v801 = vor.u32 %v796, %v800
      %v803 = vshll.u32 %v624, 16
      %v805 = vrot.slane %v803, 1
      %v806 = vsel %vm626, %v801, %v805
      %v808 = vshrl.u32 %v577, 16
      %v810 = vshll.u32 %v577, 16
      %v812 = vrot.slane %v810, 1
      %v813 = vor.u32 %v808, %v812
      %v815 = vshll.u32 %v625, 16
      %v817 = vrot.slane %v815, 1
      %v818 = vsel %vm626, %v813, %v817
      %819 = vrot.lane.b32.xlu0 %v638, 8
      %v820 = vpop.permute.xlu0 %819
      %821 = vrot.lane.b32.xlu0 %v650, 8
      %v822 = vpop.permute.xlu0 %821
      %823 = vrot.lane.b32.xlu0 %v662, 8
      %v824 = vpop.permute.xlu0 %823
      %825 = vrot.lane.b32.xlu0 %v674, 8
      %v826 = vpop.permute.xlu0 %825
      %827 = vrot.lane.b32.xlu0 %v686, 8
      %v828 = vpop.permute.xlu0 %827
      %829 = vrot.lane.b32.xlu0 %v698, 8
      %v830 = vpop.permute.xlu0 %829
      %831 = vrot.lane.b32.xlu0 %v710, 8
      %v832 = vpop.permute.xlu0 %831
      %833 = vrot.lane.b32.xlu0 %v722, 8
      %v834 = vpop.permute.xlu0 %833
      %835 = vrot.lane.b32.xlu0 %v734, 8
      %v836 = vpop.permute.xlu0 %835
      %837 = vrot.lane.b32.xlu0 %v746, 8
      %v838 = vpop.permute.xlu0 %837
      %839 = vrot.lane.b32.xlu0 %v758, 8
      %v840 = vpop.permute.xlu0 %839
      %841 = vrot.lane.b32.xlu0 %v770, 8
      %v842 = vpop.permute.xlu0 %841
      %843 = vrot.lane.b32.xlu0 %v782, 8
      %v844 = vpop.permute.xlu0 %843
      %845 = vrot.lane.b32.xlu0 %v794, 8
      %v846 = vpop.permute.xlu0 %845
      %847 = vrot.lane.b32.xlu0 %v806, 8
      %v848 = vpop.permute.xlu0 %847
      %849 = vrot.lane.b32.xlu0 %v818, 8
      %v850 = vpop.permute.xlu0 %849
      %vm851 = vcmask 1046528
      %v852 = vrot.slane %v562, 1
      %v853 = vrot.slane %v610, 1
      %v854 = vsel %vm851, %v852, %v853
      %v855 = vrot.slane %v563, 1
      %v856 = vrot.slane %v611, 1
      %v857 = vsel %vm851, %v855, %v856
      %v858 = vrot.slane %v564, 1
      %v859 = vrot.slane %v612, 1
      %v860 = vsel %vm851, %v858, %v859
      %v861 = vrot.slane %v565, 1
      %v862 = vrot.slane %v613, 1
      %v863 = vsel %vm851, %v861, %v862
      %v864 = vrot.slane %v566, 1
      %v865 = vrot.slane %v614, 1
      %v866 = vsel %vm851, %v864, %v865
      %v867 = vrot.slane %v567, 1
      %v868 = vrot.slane %v615, 1
      %v869 = vsel %vm851, %v867, %v868
      %v870 = vrot.slane %v568, 1
      %v871 = vrot.slane %v616, 1
      %v872 = vsel %vm851, %v870, %v871
      %v873 = vrot.slane %v569, 1
      %v874 = vrot.slane %v617, 1
      %v875 = vsel %vm851, %v873, %v874
      %v876 = vrot.slane %v570, 1
      %v877 = vrot.slane %v618, 1
      %v878 = vsel %vm851, %v876, %v877
      %v879 = vrot.slane %v571, 1
      %v880 = vrot.slane %v619, 1
      %v881 = vsel %vm851, %v879, %v880
      %v882 = vrot.slane %v572, 1
      %v883 = vrot.slane %v620, 1
      %v884 = vsel %vm851, %v882, %v883
      %v885 = vrot.slane %v573, 1
      %v886 = vrot.slane %v621, 1
      %v887 = vsel %vm851, %v885, %v886
      %v888 = vrot.slane %v574, 1
      %v889 = vrot.slane %v622, 1
      %v890 = vsel %vm851, %v888, %v889
      %v891 = vrot.slane %v575, 1
      %v892 = vrot.slane %v623, 1
      %v893 = vsel %vm851, %v891, %v892
      %v894 = vrot.slane %v576, 1
      %v895 = vrot.slane %v624, 1
      %v896 = vsel %vm851, %v894, %v895
      %v897 = vrot.slane %v577, 1
      %v898 = vrot.slane %v625, 1
      %v899 = vsel %vm851, %v897, %v898
      %900 = vrot.lane.b32.xlu0 %v854, 16
      %v901 = vpop.permute.xlu0 %900
      %902 = vrot.lane.b32.xlu0 %v857, 16
      %v903 = vpop.permute.xlu0 %902
      %904 = vrot.lane.b32.xlu0 %v860, 16
      %v905 = vpop.permute.xlu0 %904
      %906 = vrot.lane.b32.xlu0 %v863, 16
      %v907 = vpop.permute.xlu0 %906
      %908 = vrot.lane.b32.xlu0 %v866, 16
      %v909 = vpop.permute.xlu0 %908
      %910 = vrot.lane.b32.xlu0 %v869, 16
      %v911 = vpop.permute.xlu0 %910
      %912 = vrot.lane.b32.xlu0 %v872, 16
      %v913 = vpop.permute.xlu0 %912
      %914 = vrot.lane.b32.xlu0 %v875, 16
      %v915 = vpop.permute.xlu0 %914
      %916 = vrot.lane.b32.xlu0 %v878, 16
      %v917 = vpop.permute.xlu0 %916
      %918 = vrot.lane.b32.xlu0 %v881, 16
      %v919 = vpop.permute.xlu0 %918
      %920 = vrot.lane.b32.xlu0 %v884, 16
      %v921 = vpop.permute.xlu0 %920
      %922 = vrot.lane.b32.xlu0 %v887, 16
      %v923 = vpop.permute.xlu0 %922
      %924 = vrot.lane.b32.xlu0 %v890, 16
      %v925 = vpop.permute.xlu0 %924
      %926 = vrot.lane.b32.xlu0 %v893, 16
      %v927 = vpop.permute.xlu0 %926
      %928 = vrot.lane.b32.xlu0 %v896, 16
      %v929 = vpop.permute.xlu0 %928
      %930 = vrot.lane.b32.xlu0 %v899, 16
      %v931 = vpop.permute.xlu0 %930
      %v934 = vunpack.c.l.b16 %v485
      %v935 = vunpack.c.l.b16 %v486
      %v936 = vpack.c.b16 %v935, %v934
      %937 = vrot.lane.b32.xlu0 %v563, 24
      %v938 = vpop.permute.xlu0 %937
      %939 = vrot.lane.b32.xlu0 %v564, 24
      %v940 = vpop.permute.xlu0 %939
      %941 = vrot.lane.b32.xlu0 %v565, 24
      %v942 = vpop.permute.xlu0 %941
      %943 = vrot.lane.b32.xlu0 %v566, 24
      %v944 = vpop.permute.xlu0 %943
      %945 = vrot.lane.b32.xlu0 %v567, 24
      %v946 = vpop.permute.xlu0 %945
      %947 = vrot.lane.b32.xlu0 %v568, 24
      %v948 = vpop.permute.xlu0 %947
      %949 = vrot.lane.b32.xlu0 %v569, 24
      %v950 = vpop.permute.xlu0 %949
      %951 = vrot.lane.b32.xlu0 %v570, 24
      %v952 = vpop.permute.xlu0 %951
      %953 = vrot.lane.b32.xlu0 %v571, 24
      %v954 = vpop.permute.xlu0 %953
      %955 = vrot.lane.b32.xlu0 %v572, 24
      %v956 = vpop.permute.xlu0 %955
      %957 = vrot.lane.b32.xlu0 %v573, 24
      %v958 = vpop.permute.xlu0 %957
      %959 = vrot.lane.b32.xlu0 %v574, 24
      %v960 = vpop.permute.xlu0 %959
      %961 = vrot.lane.b32.xlu0 %v575, 24
      %v962 = vpop.permute.xlu0 %961
      %963 = vrot.lane.b32.xlu0 %v576, 24
      %v964 = vpop.permute.xlu0 %963
      %965 = vrot.lane.b32.xlu0 %v577, 24
      %v966 = vpop.permute.xlu0 %965
      %967 = vrot.lane.b32.xlu0 %v936, 24
      %v968 = vpop.permute.xlu0 %967
      %v970 = vunpack.c.l.b16 %v487
      %v971 = vpack.c.b16 %v970, %v970
      %v973 = vshrl.u32 %v936, 16
      %v975 = vshll.u32 %v936, 16
      %v977 = vrot.slane %v975, 1
      %v978 = vor.u32 %v973, %v977
      %v980 = vshll.u32 %v971, 16
      %v982 = vrot.slane %v980, 1
      %v983 = vsel %vm626, %v978, %v982
      %984 = vrot.lane.b32.xlu0 %v650, 32
      %v985 = vpop.permute.xlu0 %984
      %986 = vrot.lane.b32.xlu0 %v662, 32
      %v987 = vpop.permute.xlu0 %986
      %988 = vrot.lane.b32.xlu0 %v674, 32
      %v989 = vpop.permute.xlu0 %988
      %990 = vrot.lane.b32.xlu0 %v686, 32
      %v991 = vpop.permute.xlu0 %990
      %992 = vrot.lane.b32.xlu0 %v698, 32
      %v993 = vpop.permute.xlu0 %992
      %994 = vrot.lane.b32.xlu0 %v710, 32
      %v995 = vpop.permute.xlu0 %994
      %996 = vrot.lane.b32.xlu0 %v722, 32
      %v997 = vpop.permute.xlu0 %996
      %998 = vrot.lane.b32.xlu0 %v734, 32
      %v999 = vpop.permute.xlu0 %998
      %1000 = vrot.lane.b32.xlu0 %v746, 32
      %v1001 = vpop.permute.xlu0 %1000
      %1002 = vrot.lane.b32.xlu0 %v758, 32
      %v1003 = vpop.permute.xlu0 %1002
      %1004 = vrot.lane.b32.xlu0 %v770, 32
      %v1005 = vpop.permute.xlu0 %1004
      %1006 = vrot.lane.b32.xlu0 %v782, 32
      %v1007 = vpop.permute.xlu0 %1006
      %1008 = vrot.lane.b32.xlu0 %v794, 32
      %v1009 = vpop.permute.xlu0 %1008
      %1010 = vrot.lane.b32.xlu0 %v806, 32
      %v1011 = vpop.permute.xlu0 %1010
      %1012 = vrot.lane.b32.xlu0 %v818, 32
      %v1013 = vpop.permute.xlu0 %1012
      %1014 = vrot.lane.b32.xlu0 %v983, 32
      %v1015 = vpop.permute.xlu0 %1014
      %v1016 = vrot.slane %v936, 1
      %v1017 = vrot.slane %v971, 1
      %v1018 = vsel %vm851, %v1016, %v1017
      %1019 = vrot.lane.b32.xlu0 %v857, 40
      %v1020 = vpop.permute.xlu0 %1019
      %1021 = vrot.lane.b32.xlu0 %v860, 40
      %v1022 = vpop.permute.xlu0 %1021
      %1023 = vrot.lane.b32.xlu0 %v863, 40
      %v1024 = vpop.permute.xlu0 %1023
      %1025 = vrot.lane.b32.xlu0 %v866, 40
      %v1026 = vpop.permute.xlu0 %1025
      %1027 = vrot.lane.b32.xlu0 %v869, 40
      %v1028 = vpop.permute.xlu0 %1027
      %1029 = vrot.lane.b32.xlu0 %v872, 40
      %v1030 = vpop.permute.xlu0 %1029
      %1031 = vrot.lane.b32.xlu0 %v875, 40
      %v1032 = vpop.permute.xlu0 %1031
      %1033 = vrot.lane.b32.xlu0 %v878, 40
      %v1034 = vpop.permute.xlu0 %1033
      %1035 = vrot.lane.b32.xlu0 %v881, 40
      %v1036 = vpop.permute.xlu0 %1035
      %1037 = vrot.lane.b32.xlu0 %v884, 40
      %v1038 = vpop.permute.xlu0 %1037
      %1039 = vrot.lane.b32.xlu0 %v887, 40
      %v1040 = vpop.permute.xlu0 %1039
      %1041 = vrot.lane.b32.xlu0 %v890, 40
      %v1042 = vpop.permute.xlu0 %1041
      %1043 = vrot.lane.b32.xlu0 %v893, 40
      %v1044 = vpop.permute.xlu0 %1043
      %1045 = vrot.lane.b32.xlu0 %v896, 40
      %v1046 = vpop.permute.xlu0 %1045
      %1047 = vrot.lane.b32.xlu0 %v899, 40
      %v1048 = vpop.permute.xlu0 %1047
      %1049 = vrot.lane.b32.xlu0 %v1018, 40
      %v1050 = vpop.permute.xlu0 %1049
      %v1053 = vunpack.c.l.b16 %v495
      %v1054 = vunpack.c.l.b16 %v496
      %v1055 = vpack.c.b16 %v1054, %v1053
      %1056 = vrot.lane.b32.xlu0 %v564, 48
      %v1057 = vpop.permute.xlu0 %1056
      %1058 = vrot.lane.b32.xlu0 %v565, 48
      %v1059 = vpop.permute.xlu0 %1058
      %1060 = vrot.lane.b32.xlu0 %v566, 48
      %v1061 = vpop.permute.xlu0 %1060
      %1062 = vrot.lane.b32.xlu0 %v567, 48
      %v1063 = vpop.permute.xlu0 %1062
      %1064 = vrot.lane.b32.xlu0 %v568, 48
      %v1065 = vpop.permute.xlu0 %1064
      %1066 = vrot.lane.b32.xlu0 %v569, 48
      %v1067 = vpop.permute.xlu0 %1066
      %1068 = vrot.lane.b32.xlu0 %v570, 48
      %v1069 = vpop.permute.xlu0 %1068
      %1070 = vrot.lane.b32.xlu0 %v571, 48
      %v1071 = vpop.permute.xlu0 %1070
      %1072 = vrot.lane.b32.xlu0 %v572, 48
      %v1073 = vpop.permute.xlu0 %1072
      %1074 = vrot.lane.b32.xlu0 %v573, 48
      %v1075 = vpop.permute.xlu0 %1074
      %1076 = vrot.lane.b32.xlu0 %v574, 48
      %v1077 = vpop.permute.xlu0 %1076
      %1078 = vrot.lane.b32.xlu0 %v575, 48
      %v1079 = vpop.permute.xlu0 %1078
      %1080 = vrot.lane.b32.xlu0 %v576, 48
      %v1081 = vpop.permute.xlu0 %1080
      %1082 = vrot.lane.b32.xlu0 %v577, 48
      %v1083 = vpop.permute.xlu0 %1082
      %1084 = vrot.lane.b32.xlu0 %v936, 48
      %v1085 = vpop.permute.xlu0 %1084
      %1086 = vrot.lane.b32.xlu0 %v1055, 48
      %v1087 = vpop.permute.xlu0 %1086
      %v1089 = vunpack.c.l.b16 %v497
      %v1090 = vpack.c.b16 %v1089, %v1089
      %v1092 = vshrl.u32 %v1055, 16
      %v1094 = vshll.u32 %v1055, 16
      %v1096 = vrot.slane %v1094, 1
      %v1097 = vor.u32 %v1092, %v1096
      %v1099 = vshll.u32 %v1090, 16
      %v1101 = vrot.slane %v1099, 1
      %v1102 = vsel %vm626, %v1097, %v1101
      %1103 = vrot.lane.b32.xlu0 %v662, 56
      %v1104 = vpop.permute.xlu0 %1103
      %1105 = vrot.lane.b32.xlu0 %v674, 56
      %v1106 = vpop.permute.xlu0 %1105
      %1107 = vrot.lane.b32.xlu0 %v686, 56
      %v1108 = vpop.permute.xlu0 %1107
      %1109 = vrot.lane.b32.xlu0 %v698, 56
      %v1110 = vpop.permute.xlu0 %1109
      %1111 = vrot.lane.b32.xlu0 %v710, 56
      %v1112 = vpop.permute.xlu0 %1111
      %1113 = vrot.lane.b32.xlu0 %v722, 56
      %v1114 = vpop.permute.xlu0 %1113
      %1115 = vrot.lane.b32.xlu0 %v734, 56
      %v1116 = vpop.permute.xlu0 %1115
      %1117 = vrot.lane.b32.xlu0 %v746, 56
      %v1118 = vpop.permute.xlu0 %1117
      %1119 = vrot.lane.b32.xlu0 %v758, 56
      %v1120 = vpop.permute.xlu0 %1119
      %1121 = vrot.lane.b32.xlu0 %v770, 56
      %v1122 = vpop.permute.xlu0 %1121
      %1123 = vrot.lane.b32.xlu0 %v782, 56
      %v1124 = vpop.permute.xlu0 %1123
      %1125 = vrot.lane.b32.xlu0 %v794, 56
      %v1126 = vpop.permute.xlu0 %1125
      %1127 = vrot.lane.b32.xlu0 %v806, 56
      %v1128 = vpop.permute.xlu0 %1127
      %1129 = vrot.lane.b32.xlu0 %v818, 56
      %v1130 = vpop.permute.xlu0 %1129
      %1131 = vrot.lane.b32.xlu0 %v983, 56
      %v1132 = vpop.permute.xlu0 %1131
      %1133 = vrot.lane.b32.xlu0 %v1102, 56
      %v1134 = vpop.permute.xlu0 %1133
      %v1135 = vrot.slane %v1055, 1
      %v1136 = vrot.slane %v1090, 1
      %v1137 = vsel %vm851, %v1135, %v1136
      %1138 = vrot.lane.b32.xlu0 %v860, 64
      %v1139 = vpop.permute.xlu0 %1138
      %1140 = vrot.lane.b32.xlu0 %v863, 64
      %v1141 = vpop.permute.xlu0 %1140
      %1142 = vrot.lane.b32.xlu0 %v866, 64
      %v1143 = vpop.permute.xlu0 %1142
      %1144 = vrot.lane.b32.xlu0 %v869, 64
      %v1145 = vpop.permute.xlu0 %1144
      %1146 = vrot.lane.b32.xlu0 %v872, 64
      %v1147 = vpop.permute.xlu0 %1146
      %1148 = vrot.lane.b32.xlu0 %v875, 64
      %v1149 = vpop.permute.xlu0 %1148
      %1150 = vrot.lane.b32.xlu0 %v878, 64
      %v1151 = vpop.permute.xlu0 %1150
      %1152 = vrot.lane.b32.xlu0 %v881, 64
      %v1153 = vpop.permute.xlu0 %1152
      %1154 = vrot.lane.b32.xlu0 %v884, 64
      %v1155 = vpop.permute.xlu0 %1154
      %1156 = vrot.lane.b32.xlu0 %v887, 64
      %v1157 = vpop.permute.xlu0 %1156
      %1158 = vrot.lane.b32.xlu0 %v890, 64
      %v1159 = vpop.permute.xlu0 %1158
      %1160 = vrot.lane.b32.xlu0 %v893, 64
      %v1161 = vpop.permute.xlu0 %1160
      %1162 = vrot.lane.b32.xlu0 %v896, 64
      %v1163 = vpop.permute.xlu0 %1162
      %1164 = vrot.lane.b32.xlu0 %v899, 64
      %v1165 = vpop.permute.xlu0 %1164
      %1166 = vrot.lane.b32.xlu0 %v1018, 64
      %v1167 = vpop.permute.xlu0 %1166
      %1168 = vrot.lane.b32.xlu0 %v1137, 64
      %v1169 = vpop.permute.xlu0 %1168
      %vm1170 = vcmask 64512
      %v1172 = vsel %vm1170, %v562, %v820
      %v1174 = vsel %vm1170, %v563, %v822
      %v1176 = vsel %vm1170, %v564, %v824
      %v1178 = vsel %vm1170, %v565, %v826
      %v1180 = vsel %vm1170, %v566, %v828
      %v1182 = vsel %vm1170, %v567, %v830
      %v1184 = vsel %vm1170, %v568, %v832
      %v1186 = vsel %vm1170, %v569, %v834
      %v1188 = vsel %vm1170, %v570, %v836
      %v1190 = vsel %vm1170, %v571, %v838
      %v1192 = vsel %vm1170, %v572, %v840
      %v1194 = vsel %vm1170, %v573, %v842
      %v1196 = vsel %vm1170, %v574, %v844
      %v1198 = vsel %vm1170, %v575, %v846
      %v1200 = vsel %vm1170, %v576, %v848
      %v1202 = vsel %vm1170, %v577, %v850
      %vm1203 = vcmask 130048
      %v1205 = vsel %vm1203, %v1172, %v901
      %v1207 = vsel %vm1203, %v1174, %v903
      %v1209 = vsel %vm1203, %v1176, %v905
      %v1211 = vsel %vm1203, %v1178, %v907
      %v1213 = vsel %vm1203, %v1180, %v909
      %v1215 = vsel %vm1203, %v1182, %v911
      %v1217 = vsel %vm1203, %v1184, %v913
      %v1219 = vsel %vm1203, %v1186, %v915
      %v1221 = vsel %vm1203, %v1188, %v917
      %v1223 = vsel %vm1203, %v1190, %v919
      %v1225 = vsel %vm1203, %v1192, %v921
      %v1227 = vsel %vm1203, %v1194, %v923
      %v1229 = vsel %vm1203, %v1196, %v925
      %v1231 = vsel %vm1203, %v1198, %v927
      %v1233 = vsel %vm1203, %v1200, %v929
      %v1235 = vsel %vm1203, %v1202, %v931
      %vm1236 = vcmask 195584
      %v1238 = vsel %vm1236, %v1205, %v938
      %v1240 = vsel %vm1236, %v1207, %v940
      %v1242 = vsel %vm1236, %v1209, %v942
      %v1244 = vsel %vm1236, %v1211, %v944
      %v1246 = vsel %vm1236, %v1213, %v946
      %v1248 = vsel %vm1236, %v1215, %v948
      %v1250 = vsel %vm1236, %v1217, %v950
      %v1252 = vsel %vm1236, %v1219, %v952
      %v1254 = vsel %vm1236, %v1221, %v954
      %v1256 = vsel %vm1236, %v1223, %v956
      %v1258 = vsel %vm1236, %v1225, %v958
      %v1260 = vsel %vm1236, %v1227, %v960
      %v1262 = vsel %vm1236, %v1229, %v962
      %v1264 = vsel %vm1236, %v1231, %v964
      %v1266 = vsel %vm1236, %v1233, %v966
      %v1268 = vsel %vm1236, %v1235, %v968
      %vm1269 = vcmask 261120
      %v1271 = vsel %vm1269, %v1238, %v985
      %v1273 = vsel %vm1269, %v1240, %v987
      %v1275 = vsel %vm1269, %v1242, %v989
      %v1277 = vsel %vm1269, %v1244, %v991
      %v1279 = vsel %vm1269, %v1246, %v993
      %v1281 = vsel %vm1269, %v1248, %v995
      %v1283 = vsel %vm1269, %v1250, %v997
      %v1285 = vsel %vm1269, %v1252, %v999
      %v1287 = vsel %vm1269, %v1254, %v1001
      %v1289 = vsel %vm1269, %v1256, %v1003
      %v1291 = vsel %vm1269, %v1258, %v1005
      %v1293 = vsel %vm1269, %v1260, %v1007
      %v1295 = vsel %vm1269, %v1262, %v1009
      %v1297 = vsel %vm1269, %v1264, %v1011
      %v1299 = vsel %vm1269, %v1266, %v1013
      %v1301 = vsel %vm1269, %v1268, %v1015
      %vm1302 = vcmask 326656
      %v1304 = vsel %vm1302, %v1271, %v1020
      %v1306 = vsel %vm1302, %v1273, %v1022
      %v1308 = vsel %vm1302, %v1275, %v1024
      %v1310 = vsel %vm1302, %v1277, %v1026
      %v1312 = vsel %vm1302, %v1279, %v1028
      %v1314 = vsel %vm1302, %v1281, %v1030
      %v1316 = vsel %vm1302, %v1283, %v1032
      %v1318 = vsel %vm1302, %v1285, %v1034
      %v1320 = vsel %vm1302, %v1287, %v1036
      %v1322 = vsel %vm1302, %v1289, %v1038
      %v1324 = vsel %vm1302, %v1291, %v1040
      %v1326 = vsel %vm1302, %v1293, %v1042
      %v1328 = vsel %vm1302, %v1295, %v1044
      %v1330 = vsel %vm1302, %v1297, %v1046
      %v1332 = vsel %vm1302, %v1299, %v1048
      %v1334 = vsel %vm1302, %v1301, %v1050
      %vm1335 = vcmask 392192
      %v1337 = vsel %vm1335, %v1304, %v1057
      %v1339 = vsel %vm1335, %v1306, %v1059
      %v1341 = vsel %vm1335, %v1308, %v1061
      %v1343 = vsel %vm1335, %v1310, %v1063
      %v1345 = vsel %vm1335, %v1312, %v1065
      %v1347 = vsel %vm1335, %v1314, %v1067
      %v1349 = vsel %vm1335, %v1316, %v1069
      %v1351 = vsel %vm1335, %v1318, %v1071
      %v1353 = vsel %vm1335, %v1320, %v1073
      %v1355 = vsel %vm1335, %v1322, %v1075
      %v1357 = vsel %vm1335, %v1324, %v1077
      %v1359 = vsel %vm1335, %v1326, %v1079
      %v1361 = vsel %vm1335, %v1328, %v1081
      %v1363 = vsel %vm1335, %v1330, %v1083
      %v1365 = vsel %vm1335, %v1332, %v1085
      %v1367 = vsel %vm1335, %v1334, %v1087
      %vm1368 = vcmask 457728
      %v1370 = vsel %vm1368, %v1337, %v1104
      %v1372 = vsel %vm1368, %v1339, %v1106
      %v1374 = vsel %vm1368, %v1341, %v1108
      %v1376 = vsel %vm1368, %v1343, %v1110
      %v1378 = vsel %vm1368, %v1345, %v1112
      %v1380 = vsel %vm1368, %v1347, %v1114
      %v1382 = vsel %vm1368, %v1349, %v1116
      %v1384 = vsel %vm1368, %v1351, %v1118
      %v1386 = vsel %vm1368, %v1353, %v1120
      %v1388 = vsel %vm1368, %v1355, %v1122
      %v1390 = vsel %vm1368, %v1357, %v1124
      %v1392 = vsel %vm1368, %v1359, %v1126
      %v1394 = vsel %vm1368, %v1361, %v1128
      %v1396 = vsel %vm1368, %v1363, %v1130
      %v1398 = vsel %vm1368, %v1365, %v1132
      %v1400 = vsel %vm1368, %v1367, %v1134
      %vm1401 = vcmask 523264
      %v1403 = vsel %vm1401, %v1370, %v1139
      %v1405 = vsel %vm1401, %v1372, %v1141
      %v1407 = vsel %vm1401, %v1374, %v1143
      %v1409 = vsel %vm1401, %v1376, %v1145
      %v1411 = vsel %vm1401, %v1378, %v1147
      %v1413 = vsel %vm1401, %v1380, %v1149
      %v1415 = vsel %vm1401, %v1382, %v1151
      %v1417 = vsel %vm1401, %v1384, %v1153
      %v1419 = vsel %vm1401, %v1386, %v1155
      %v1421 = vsel %vm1401, %v1388, %v1157
      %v1423 = vsel %vm1401, %v1390, %v1159
      %v1425 = vsel %vm1401, %v1392, %v1161
      %v1427 = vsel %vm1401, %v1394, %v1163
      %v1429 = vsel %vm1401, %v1396, %v1165
      %v1431 = vsel %vm1401, %v1398, %v1167
      %v1433 = vsel %vm1401, %v1400, %v1169
      %v1434 = vld [vmem:[%s3] sm:$0xf]
      %v1435 = vld [vmem:[%s3 + $0x4] sm:$0xf]
      %v1436 = vld [vmem:[%s3 + $0x8] sm:$0xf]
      %v1437 = vld [vmem:[%s3 + $0xc] sm:$0xf]
      %v1438 = vld [vmem:[%s3 + $0x10] sm:$0xf]
      %v1439 = vld [vmem:[%s3 + $0x14] sm:$0xf]
      %v1440 = vld [vmem:[%s3 + $0x18] sm:$0xf]
      %v1441 = vld [vmem:[%s3 + $0x1c] sm:$0xf]
      %v1442 = vld [vmem:[%s3 + $0x20] sm:$0xf]
      %v1452 = vunpack.c.l.b16 %v1434
      %v1453 = vunpack.c.l.b16 %v1435
      %v1454 = vunpack.c.l.b16 %v1436
      %v1455 = vunpack.c.l.b16 %v1437
      %v1456 = vunpack.c.l.b16 %v1438
      %v1457 = vunpack.c.l.b16 %v1439
      %v1458 = vunpack.c.l.b16 %v1440
      %v1459 = vunpack.c.l.b16 %v1441
      %v1460 = vunpack.c.l.b16 %v1442
      %v1461 = vpack.c.b16 %v1453, %v1452
      %v1462 = vpack.c.b16 %v1455, %v1454
      %v1463 = vpack.c.b16 %v1457, %v1456
      %v1464 = vpack.c.b16 %v1459, %v1458
      %v1465 = vpack.c.b16 %v1460, %v1460
      %vm1470 = vcmask 588800
      %v1471 = vsel %vm1470, %v1403, 0
      %v1473 = vsel %vm1470, %v1405, 0
      %v1475 = vsel %vm1470, %v1407, 0
      %v1477 = vsel %vm1470, %v1409, 0
      %v1479 = vsel %vm1470, %v1411, 0
      %v1481 = vsel %vm1470, %v1413, 0
      %v1483 = vsel %vm1470, %v1415, 0
      %v1485 = vsel %vm1470, %v1417, 0
      %v1487 = vsel %vm1470, %v1419, 0
      %v1489 = vsel %vm1470, %v1421, 0
      %v1491 = vsel %vm1470, %v1423, 0
      %v1493 = vsel %vm1470, %v1425, 0
      %v1495 = vsel %vm1470, %v1427, 0
      %v1497 = vsel %vm1470, %v1429, 0
      %v1499 = vsel %vm1470, %v1431, 0
      %v1501 = vsel %vm1470, %v1433, 0
      %vm1503 = vcmask 1043456
      %v1505 = vsel %vm1503, %v1465, 0
      %1507 = vmatprep.subr.bf16.mxu0 0
      %1508 = vmatpush1.bf16.msra.mxu0 0
      %1509 = vmatprep.subr.bf16.mxu0 0
      %1510 = vmatpush1.bf16.msra.mxu0 0
      %1511 = vmatprep.subr.bf16.mxu0 0
      %1512 = vmatpush1.bf16.msra.mxu0 0
      %1513 = vmatprep.subr.bf16.mxu0 0
      %1514 = vmatpush1.bf16.msra.mxu0 %v1505
      %1515 = vmatprep.subr.bf16.mxu0 0
      %1516 = vmatpush1.bf16.msra.mxu0 %v1464
      %1517 = vmatprep.subr.bf16.mxu0 0
      %1518 = vmatpush1.bf16.msra.mxu0 %v1463
      %1519 = vmatprep.subr.bf16.mxu0 0
      %1520 = vmatpush1.bf16.msra.mxu0 %v1462
      %1521 = vmatprep.subr.bf16.mxu0 0
      %1522 = vmatpush1.bf16.msra.mxu0 %v1461
      %1523 = vmatprep.subr.bf16.mxu0 0
      %1524 = vmatpush2.bf16.msra.mxu0 0
      %1525 = vmatprep.subr.bf16.mxu0 0
      %1526 = vmatpush2.bf16.msra.mxu0 0
      %1527 = vmatprep.subr.bf16.mxu0 0
      %1528 = vmatpush2.bf16.msra.mxu0 0
      %1529 = vmatprep.subr.bf16.mxu0 0
      %1530 = vmatpush2.bf16.msra.mxu0 0
      %1531 = vmatprep.subr.bf16.mxu0 0
      %1532 = vmatpush2.bf16.msra.mxu0 0
      %1533 = vmatprep.subr.bf16.mxu0 0
      %1534 = vmatpush2.bf16.msra.mxu0 0
      %1535 = vmatprep.subr.bf16.mxu0 0
      %1536 = vmatpush2.bf16.msra.mxu0 0
      %1537 = vmatprep.subr.bf16.mxu0 0
      %1538 = vmatpush2.bf16.msra.mxu0 0
      %1539 = vmatprep.mubr.bf16.mxu0 0
      %1540 = vmatmul.mubr.bf16.gmra.mxu0 %v1471
      %v1541 = vpop.f32.mrf.mxu0
      %v1542 = vadd.f32 0.0, %v1541
      %v1543 = vpop.f32.mrf.mxu0
      %v1544 = vpop.f32.mrf.mxu0
      %v1545 = vadd.f32 0.0, %v1544
      %v1546 = vpop.f32.mrf.mxu0
      %1547 = vmatprep.mubr.bf16.mxu0 0
      %1548 = vmatmul.mubr.bf16.gmra.mxu0 %v1473
      %v1549 = vpop.f32.mrf.mxu0
      %v1550 = vadd.f32 0.0, %v1549
      %v1551 = vpop.f32.mrf.mxu0
      %v1552 = vpop.f32.mrf.mxu0
      %v1553 = vadd.f32 0.0, %v1552
      %v1554 = vpop.f32.mrf.mxu0
      %1555 = vmatprep.mubr.bf16.mxu0 0
      %1556 = vmatmul.mubr.bf16.gmra.mxu0 %v1475
      %v1557 = vpop.f32.mrf.mxu0
      %v1558 = vadd.f32 0.0, %v1557
      %v1559 = vpop.f32.mrf.mxu0
      %v1560 = vpop.f32.mrf.mxu0
      %v1561 = vadd.f32 0.0, %v1560
      %v1562 = vpop.f32.mrf.mxu0
      %1563 = vmatprep.mubr.bf16.mxu0 0
      %1564 = vmatmul.mubr.bf16.gmra.mxu0 %v1477
      %v1565 = vpop.f32.mrf.mxu0
      %v1566 = vadd.f32 0.0, %v1565
      %v1567 = vpop.f32.mrf.mxu0
      %v1568 = vpop.f32.mrf.mxu0
      %v1569 = vadd.f32 0.0, %v1568
      %v1570 = vpop.f32.mrf.mxu0
      %1571 = vmatprep.mubr.bf16.mxu0 0
      %1572 = vmatmul.mubr.bf16.gmra.mxu0 %v1479
      %v1573 = vpop.f32.mrf.mxu0
      %v1574 = vadd.f32 0.0, %v1573
      %v1575 = vpop.f32.mrf.mxu0
      %v1576 = vpop.f32.mrf.mxu0
      %v1577 = vadd.f32 0.0, %v1576
      %v1578 = vpop.f32.mrf.mxu0
      %1579 = vmatprep.mubr.bf16.mxu0 0
      %1580 = vmatmul.mubr.bf16.gmra.mxu0 %v1481
      %v1581 = vpop.f32.mrf.mxu0
      %v1582 = vadd.f32 0.0, %v1581
      %v1583 = vpop.f32.mrf.mxu0
      %v1584 = vpop.f32.mrf.mxu0
      %v1585 = vadd.f32 0.0, %v1584
      %v1586 = vpop.f32.mrf.mxu0
      %1587 = vmatprep.mubr.bf16.mxu0 0
      %1588 = vmatmul.mubr.bf16.gmra.mxu0 %v1483
      %v1589 = vpop.f32.mrf.mxu0
      %v1590 = vadd.f32 0.0, %v1589
      %v1591 = vpop.f32.mrf.mxu0
      %v1592 = vpop.f32.mrf.mxu0
      %v1593 = vadd.f32 0.0, %v1592
      %v1594 = vpop.f32.mrf.mxu0
      %1595 = vmatprep.mubr.bf16.mxu0 0
      %1596 = vmatmul.mubr.bf16.gmra.mxu0 %v1485
      %v1597 = vpop.f32.mrf.mxu0
      %v1598 = vadd.f32 0.0, %v1597
      %v1599 = vpop.f32.mrf.mxu0
      %v1600 = vpop.f32.mrf.mxu0
      %v1601 = vadd.f32 0.0, %v1600
      %v1602 = vpop.f32.mrf.mxu0
      %1603 = vmatprep.mubr.bf16.mxu0 0
      %1604 = vmatmul.mubr.bf16.gmra.mxu0 %v1487
      %v1605 = vpop.f32.mrf.mxu0
      %v1606 = vadd.f32 0.0, %v1605
      %v1607 = vpop.f32.mrf.mxu0
      %v1608 = vpop.f32.mrf.mxu0
      %v1609 = vadd.f32 0.0, %v1608
      %v1610 = vpop.f32.mrf.mxu0
      %1611 = vmatprep.mubr.bf16.mxu0 0
      %1612 = vmatmul.mubr.bf16.gmra.mxu0 %v1489
      %v1613 = vpop.f32.mrf.mxu0
      %v1614 = vadd.f32 0.0, %v1613
      %v1615 = vpop.f32.mrf.mxu0
      %v1616 = vpop.f32.mrf.mxu0
      %v1617 = vadd.f32 0.0, %v1616
      %v1618 = vpop.f32.mrf.mxu0
      %1619 = vmatprep.mubr.bf16.mxu0 0
      %1620 = vmatmul.mubr.bf16.gmra.mxu0 %v1491
      %v1621 = vpop.f32.mrf.mxu0
      %v1622 = vadd.f32 0.0, %v1621
      %v1623 = vpop.f32.mrf.mxu0
      %v1624 = vpop.f32.mrf.mxu0
      %v1625 = vadd.f32 0.0, %v1624
      %v1626 = vpop.f32.mrf.mxu0
      %1627 = vmatprep.mubr.bf16.mxu0 0
      %1628 = vmatmul.mubr.bf16.gmra.mxu0 %v1493
      %v1629 = vpop.f32.mrf.mxu0
      %v1630 = vadd.f32 0.0, %v1629
      %v1631 = vpop.f32.mrf.mxu0
      %v1632 = vpop.f32.mrf.mxu0
      %v1633 = vadd.f32 0.0, %v1632
      %v1634 = vpop.f32.mrf.mxu0
      %1635 = vmatprep.mubr.bf16.mxu0 0
      %1636 = vmatmul.mubr.bf16.gmra.mxu0 %v1495
      %v1637 = vpop.f32.mrf.mxu0
      %v1638 = vadd.f32 0.0, %v1637
      %v1639 = vpop.f32.mrf.mxu0
      %v1640 = vpop.f32.mrf.mxu0
      %v1641 = vadd.f32 0.0, %v1640
      %v1642 = vpop.f32.mrf.mxu0
      %1643 = vmatprep.mubr.bf16.mxu0 0
      %1644 = vmatmul.mubr.bf16.gmra.mxu0 %v1497
      %v1645 = vpop.f32.mrf.mxu0
      %v1646 = vadd.f32 0.0, %v1645
      %v1647 = vpop.f32.mrf.mxu0
      %v1648 = vpop.f32.mrf.mxu0
      %v1649 = vadd.f32 0.0, %v1648
      %v1650 = vpop.f32.mrf.mxu0
      %1651 = vmatprep.mubr.bf16.mxu0 0
      %1652 = vmatmul.mubr.bf16.gmra.mxu0 %v1499
      %v1653 = vpop.f32.mrf.mxu0
      %v1654 = vadd.f32 0.0, %v1653
      %v1655 = vpop.f32.mrf.mxu0
      %v1656 = vpop.f32.mrf.mxu0
      %v1657 = vadd.f32 0.0, %v1656
      %v1658 = vpop.f32.mrf.mxu0
      %1659 = vmatprep.mubr.bf16.mxu0 0
      %1660 = vmatmul.mubr.bf16.gmra.mxu0 %v1501
      %v1661 = vpop.f32.mrf.mxu0
      %v1662 = vadd.f32 0.0, %v1661
      %v1663 = vpop.f32.mrf.mxu0
      %v1664 = vpop.f32.mrf.mxu0
      %v1665 = vadd.f32 0.0, %v1664
      %v1666 = vpop.f32.mrf.mxu0
      %1667 = vdwg.mxu0
      %v1668 = vsel %vm1170, %v1542, 0.0
      %v1669 = vsel %vm1170, %v1545, 0.0
      %v1670 = vadd.f32 %v1668, %v1669
      %v1671 = vsel %vm1170, %v1550, 0.0
      %v1672 = vadd.f32 %v1670, %v1671
      %v1673 = vsel %vm1170, %v1553, 0.0
      %v1674 = vadd.f32 %v1672, %v1673
      %v1675 = vsel %vm1170, %v1558, 0.0
      %v1676 = vadd.f32 %v1674, %v1675
      %v1677 = vsel %vm1170, %v1561, 0.0
      %v1678 = vadd.f32 %v1676, %v1677
      %v1679 = vsel %vm1170, %v1566, 0.0
      %v1680 = vadd.f32 %v1678, %v1679
      %v1681 = vsel %vm1170, %v1569, 0.0
      %v1682 = vadd.f32 %v1680, %v1681
      %v1683 = vsel %vm1170, %v1574, 0.0
      %v1684 = vadd.f32 %v1682, %v1683
      %v1685 = vsel %vm1170, %v1577, 0.0
      %v1686 = vadd.f32 %v1684, %v1685
      %v1687 = vsel %vm1170, %v1582, 0.0
      %v1688 = vadd.f32 %v1686, %v1687
      %v1689 = vsel %vm1170, %v1585, 0.0
      %v1690 = vadd.f32 %v1688, %v1689
      %v1691 = vsel %vm1170, %v1590, 0.0
      %v1692 = vadd.f32 %v1690, %v1691
      %v1693 = vsel %vm1170, %v1593, 0.0
      %v1694 = vadd.f32 %v1692, %v1693
      %v1695 = vsel %vm1170, %v1598, 0.0
      %v1696 = vadd.f32 %v1694, %v1695
      %v1697 = vsel %vm1170, %v1601, 0.0
      %v1698 = vadd.f32 %v1696, %v1697
      %v1699 = vsel %vm1170, %v1606, 0.0
      %v1700 = vadd.f32 %v1698, %v1699
      %v1701 = vsel %vm1170, %v1609, 0.0
      %v1702 = vadd.f32 %v1700, %v1701
      %v1703 = vsel %vm1170, %v1614, 0.0
      %v1704 = vadd.f32 %v1702, %v1703
      %v1705 = vsel %vm1170, %v1617, 0.0
      %v1706 = vadd.f32 %v1704, %v1705
      %v1707 = vsel %vm1170, %v1622, 0.0
      %v1708 = vadd.f32 %v1706, %v1707
      %v1709 = vsel %vm1170, %v1625, 0.0
      %v1710 = vadd.f32 %v1708, %v1709
      %v1711 = vsel %vm1170, %v1630, 0.0
      %v1712 = vadd.f32 %v1710, %v1711
      %v1713 = vsel %vm1170, %v1633, 0.0
      %v1714 = vadd.f32 %v1712, %v1713
      %v1715 = vsel %vm1170, %v1638, 0.0
      %v1716 = vadd.f32 %v1714, %v1715
      %v1717 = vsel %vm1170, %v1641, 0.0
      %v1718 = vadd.f32 %v1716, %v1717
      %v1719 = vsel %vm1170, %v1646, 0.0
      %v1720 = vadd.f32 %v1718, %v1719
      %v1721 = vsel %vm1170, %v1649, 0.0
      %v1722 = vadd.f32 %v1720, %v1721
      %v1723 = vsel %vm1170, %v1654, 0.0
      %v1724 = vadd.f32 %v1722, %v1723
      %v1725 = vsel %vm1170, %v1657, 0.0
      %v1726 = vadd.f32 %v1724, %v1725
      %v1727 = vsel %vm1170, %v1662, 0.0
      %v1728 = vadd.f32 %v1726, %v1727
      %v1729 = vsel %vm1170, %v1665, 0.0
      %v1730 = vadd.f32 %v1728, %v1729
      %v1731 = vrot.slane %v1730, 4
      %v1732 = vadd.f32 %v1730, %v1731
      %v1733 = vrot.slane %v1732, 2
      %v1734 = vadd.f32 %v1732, %v1733
      %v1735 = vrot.slane %v1734, 1
      %v1736 = vadd.f32 %v1734, %v1735
      %v1737 = vmul.f32 %v1542, %v1542
      %v1738 = vmul.f32 %v1545, %v1545
      %v1739 = vmul.f32 %v1550, %v1550
      %v1740 = vmul.f32 %v1553, %v1553
      %v1741 = vmul.f32 %v1558, %v1558
      %v1742 = vmul.f32 %v1561, %v1561
      %v1743 = vmul.f32 %v1566, %v1566
      %v1744 = vmul.f32 %v1569, %v1569
      %v1745 = vmul.f32 %v1574, %v1574
      %v1746 = vmul.f32 %v1577, %v1577
      %v1747 = vmul.f32 %v1582, %v1582
      %v1748 = vmul.f32 %v1585, %v1585
      %v1749 = vmul.f32 %v1590, %v1590
      %v1750 = vmul.f32 %v1593, %v1593
      %v1751 = vmul.f32 %v1598, %v1598
      %v1752 = vmul.f32 %v1601, %v1601
      %v1753 = vmul.f32 %v1606, %v1606
      %v1754 = vmul.f32 %v1609, %v1609
      %v1755 = vmul.f32 %v1614, %v1614
      %v1756 = vmul.f32 %v1617, %v1617
      %v1757 = vmul.f32 %v1622, %v1622
      %v1758 = vmul.f32 %v1625, %v1625
      %v1759 = vmul.f32 %v1630, %v1630
      %v1760 = vmul.f32 %v1633, %v1633
      %v1761 = vmul.f32 %v1638, %v1638
      %v1762 = vmul.f32 %v1641, %v1641
      %v1763 = vmul.f32 %v1646, %v1646
      %v1764 = vmul.f32 %v1649, %v1649
      %v1765 = vmul.f32 %v1654, %v1654
      %v1766 = vmul.f32 %v1657, %v1657
      %v1767 = vmul.f32 %v1662, %v1662
      %v1768 = vmul.f32 %v1665, %v1665
      %v1769 = vsel %vm1170, %v1737, 0.0
      %v1770 = vsel %vm1170, %v1738, 0.0
      %v1771 = vadd.f32 %v1769, %v1770
      %v1772 = vsel %vm1170, %v1739, 0.0
      %v1773 = vadd.f32 %v1771, %v1772
      %v1774 = vsel %vm1170, %v1740, 0.0
      %v1775 = vadd.f32 %v1773, %v1774
      %v1776 = vsel %vm1170, %v1741, 0.0
      %v1777 = vadd.f32 %v1775, %v1776
      %v1778 = vsel %vm1170, %v1742, 0.0
      %v1779 = vadd.f32 %v1777, %v1778
      %v1780 = vsel %vm1170, %v1743, 0.0
      %v1781 = vadd.f32 %v1779, %v1780
      %v1782 = vsel %vm1170, %v1744, 0.0
      %v1783 = vadd.f32 %v1781, %v1782
      %v1784 = vsel %vm1170, %v1745, 0.0
      %v1785 = vadd.f32 %v1783, %v1784
      %v1786 = vsel %vm1170, %v1746, 0.0
      %v1787 = vadd.f32 %v1785, %v1786
      %v1788 = vsel %vm1170, %v1747, 0.0
      %v1789 = vadd.f32 %v1787, %v1788
      %v1790 = vsel %vm1170, %v1748, 0.0
      %v1791 = vadd.f32 %v1789, %v1790
      %v1792 = vsel %vm1170, %v1749, 0.0
      %v1793 = vadd.f32 %v1791, %v1792
      %v1794 = vsel %vm1170, %v1750, 0.0
      %v1795 = vadd.f32 %v1793, %v1794
      %v1796 = vsel %vm1170, %v1751, 0.0
      %v1797 = vadd.f32 %v1795, %v1796
      %v1798 = vsel %vm1170, %v1752, 0.0
      %v1799 = vadd.f32 %v1797, %v1798
      %v1800 = vsel %vm1170, %v1753, 0.0
      %v1801 = vadd.f32 %v1799, %v1800
      %v1802 = vsel %vm1170, %v1754, 0.0
      %v1803 = vadd.f32 %v1801, %v1802
      %v1804 = vsel %vm1170, %v1755, 0.0
      %v1805 = vadd.f32 %v1803, %v1804
      %v1806 = vsel %vm1170, %v1756, 0.0
      %v1807 = vadd.f32 %v1805, %v1806
      %v1808 = vsel %vm1170, %v1757, 0.0
      %v1809 = vadd.f32 %v1807, %v1808
      %v1810 = vsel %vm1170, %v1758, 0.0
      %v1811 = vadd.f32 %v1809, %v1810
      %v1812 = vsel %vm1170, %v1759, 0.0
      %v1813 = vadd.f32 %v1811, %v1812
      %v1814 = vsel %vm1170, %v1760, 0.0
      %v1815 = vadd.f32 %v1813, %v1814
      %v1816 = vsel %vm1170, %v1761, 0.0
      %v1817 = vadd.f32 %v1815, %v1816
      %v1818 = vsel %vm1170, %v1762, 0.0
      %v1819 = vadd.f32 %v1817, %v1818
      %v1820 = vsel %vm1170, %v1763, 0.0
      %v1821 = vadd.f32 %v1819, %v1820
      %v1822 = vsel %vm1170, %v1764, 0.0
      %v1823 = vadd.f32 %v1821, %v1822
      %v1824 = vsel %vm1170, %v1765, 0.0
      %v1825 = vadd.f32 %v1823, %v1824
      %v1826 = vsel %vm1170, %v1766, 0.0
      %v1827 = vadd.f32 %v1825, %v1826
      %v1828 = vsel %vm1170, %v1767, 0.0
      %v1829 = vadd.f32 %v1827, %v1828
      %v1830 = vsel %vm1170, %v1768, 0.0
      %v1831 = vadd.f32 %v1829, %v1830
      %v1832 = vrot.slane %v1831, 4
      %v1833 = vadd.f32 %v1831, %v1832
      %v1834 = vrot.slane %v1833, 2
      %v1835 = vadd.f32 %v1833, %v1834
      %v1836 = vrot.slane %v1835, 1
      %v1837 = vadd.f32 %v1835, %v1836
      %vm1838 = vcmask 1040384
      %v1839 = vsel %vm1838, %v1736, %v1837
      %vm1840 = vcmask 58368
      %1841 = vst.msk [vmem:[%s404] sm:$0x3] %vm1840, %v1839
      %v1842 = vpack.c.bf16 %v1545, %v1542
      %v1843 = vpack.c.bf16 %v1553, %v1550
      %v1844 = vpack.c.bf16 %v1561, %v1558
      %v1845 = vpack.c.bf16 %v1569, %v1566
      %v1846 = vpack.c.bf16 %v1577, %v1574
      %v1847 = vpack.c.bf16 %v1585, %v1582
      %v1848 = vpack.c.bf16 %v1593, %v1590
      %v1849 = vpack.c.bf16 %v1601, %v1598
      %v1850 = vpack.c.bf16 %v1609, %v1606
      %v1851 = vpack.c.bf16 %v1617, %v1614
      %v1852 = vpack.c.bf16 %v1625, %v1622
      %v1853 = vpack.c.bf16 %v1633, %v1630
      %v1854 = vpack.c.bf16 %v1641, %v1638
      %v1855 = vpack.c.bf16 %v1649, %v1646
      %v1856 = vpack.c.bf16 %v1657, %v1654
      %v1857 = vpack.c.bf16 %v1665, %v1662
      %v1874 = vunpack.c.l.b16 %v1842
      %v1875 = vunpack.c.h.b16 %v1842
      %v1876 = vunpack.c.l.b16 %v1843
      %v1877 = vunpack.c.h.b16 %v1843
      %v1878 = vunpack.c.l.b16 %v1844
      %v1879 = vunpack.c.h.b16 %v1844
      %v1880 = vunpack.c.l.b16 %v1845
      %v1881 = vunpack.c.h.b16 %v1845
      %v1882 = vunpack.c.l.b16 %v1846
      %v1883 = vunpack.c.h.b16 %v1846
      %v1884 = vunpack.c.l.b16 %v1847
      %v1885 = vunpack.c.h.b16 %v1847
      %v1886 = vunpack.c.l.b16 %v1848
      %v1887 = vunpack.c.h.b16 %v1848
      %v1888 = vunpack.c.l.b16 %v1849
      %v1889 = vunpack.c.h.b16 %v1849
      %v1890 = vunpack.c.l.b16 %v1850
      %v1891 = vunpack.c.h.b16 %v1850
      %v1892 = vunpack.c.l.b16 %v1851
      %v1893 = vunpack.c.h.b16 %v1851
      %v1894 = vunpack.c.l.b16 %v1852
      %v1895 = vunpack.c.h.b16 %v1852
      %v1896 = vunpack.c.l.b16 %v1853
      %v1897 = vunpack.c.h.b16 %v1853
      %v1898 = vunpack.c.l.b16 %v1854
      %v1899 = vunpack.c.h.b16 %v1854
      %v1900 = vunpack.c.l.b16 %v1855
      %v1901 = vunpack.c.h.b16 %v1855
      %v1902 = vunpack.c.l.b16 %v1856
      %v1903 = vunpack.c.h.b16 %v1856
      %v1904 = vunpack.c.l.b16 %v1857
      %v1905 = vunpack.c.h.b16 %v1857
      %v1906 = vpack.c.b16 %v1874, %v1874
      %v1907 = vpack.c.b16 %v1875, %v1875
      %v1908 = vpack.c.b16 %v1876, %v1876
      %v1909 = vpack.c.b16 %v1877, %v1877
      %v1910 = vpack.c.b16 %v1878, %v1878
      %v1911 = vpack.c.b16 %v1879, %v1879
      %v1912 = vpack.c.b16 %v1880, %v1880
      %v1913 = vpack.c.b16 %v1881, %v1881
      %v1914 = vpack.c.b16 %v1882, %v1882
      %v1915 = vpack.c.b16 %v1883, %v1883
      %v1916 = vpack.c.b16 %v1884, %v1884
      %v1917 = vpack.c.b16 %v1885, %v1885
      %v1918 = vpack.c.b16 %v1886, %v1886
      %v1919 = vpack.c.b16 %v1887, %v1887
      %v1920 = vpack.c.b16 %v1888, %v1888
      %v1921 = vpack.c.b16 %v1889, %v1889
      %v1922 = vpack.c.b16 %v1890, %v1890
      %v1923 = vpack.c.b16 %v1891, %v1891
      %v1924 = vpack.c.b16 %v1892, %v1892
      %v1925 = vpack.c.b16 %v1893, %v1893
      %v1926 = vpack.c.b16 %v1894, %v1894
      %v1927 = vpack.c.b16 %v1895, %v1895
      %v1928 = vpack.c.b16 %v1896, %v1896
      %v1929 = vpack.c.b16 %v1897, %v1897
      %v1930 = vpack.c.b16 %v1898, %v1898
      %v1931 = vpack.c.b16 %v1899, %v1899
      %v1932 = vpack.c.b16 %v1900, %v1900
      %v1933 = vpack.c.b16 %v1901, %v1901
      %v1934 = vpack.c.b16 %v1902, %v1902
      %v1935 = vpack.c.b16 %v1903, %v1903
      %v1936 = vpack.c.b16 %v1904, %v1904
      %v1937 = vpack.c.b16 %v1905, %v1905
      %vm1970 = vcmask 60416
      %1971 = vst.msk [vmem:[%s395] sm:$0xf] %vm1970, %v1906
      %1972 = vst.msk [vmem:[%s395 + $0x4] sm:$0xf] %vm1970, %v1907
      %1973 = vst.msk [vmem:[%s395 + $0x8] sm:$0xf] %vm1970, %v1908
      %1974 = vst.msk [vmem:[%s395 + $0xc] sm:$0xf] %vm1970, %v1909
      %1975 = vst.msk [vmem:[%s395 + $0x10] sm:$0xf] %vm1970, %v1910
      %1976 = vst.msk [vmem:[%s395 + $0x14] sm:$0xf] %vm1970, %v1911
      %1977 = vst.msk [vmem:[%s395 + $0x18] sm:$0xf] %vm1970, %v1912
      %1978 = vst.msk [vmem:[%s395 + $0x1c] sm:$0xf] %vm1970, %v1913
      %1979 = vst.msk [vmem:[%s395 + $0x20] sm:$0xf] %vm1970, %v1914
      %1980 = vst.msk [vmem:[%s395 + $0x24] sm:$0xf] %vm1970, %v1915
      %1981 = vst.msk [vmem:[%s395 + $0x28] sm:$0xf] %vm1970, %v1916
      %1982 = vst.msk [vmem:[%s395 + $0x2c] sm:$0xf] %vm1970, %v1917
      %1983 = vst.msk [vmem:[%s395 + $0x30] sm:$0xf] %vm1970, %v1918
      %1984 = vst.msk [vmem:[%s395 + $0x34] sm:$0xf] %vm1970, %v1919
      %1985 = vst.msk [vmem:[%s395 + $0x38] sm:$0xf] %vm1970, %v1920
      %1986 = vst.msk [vmem:[%s395 + $0x3c] sm:$0xf] %vm1970, %v1921
      %1987 = vst.msk [vmem:[%s395 + $0x40] sm:$0xf] %vm1970, %v1922
      %1988 = vst.msk [vmem:[%s395 + $0x44] sm:$0xf] %vm1970, %v1923
      %1989 = vst.msk [vmem:[%s395 + $0x48] sm:$0xf] %vm1970, %v1924
      %1990 = vst.msk [vmem:[%s395 + $0x4c] sm:$0xf] %vm1970, %v1925
      %1991 = vst.msk [vmem:[%s395 + $0x50] sm:$0xf] %vm1970, %v1926
      %1992 = vst.msk [vmem:[%s395 + $0x54] sm:$0xf] %vm1970, %v1927
      %1993 = vst.msk [vmem:[%s395 + $0x58] sm:$0xf] %vm1970, %v1928
      %1994 = vst.msk [vmem:[%s395 + $0x5c] sm:$0xf] %vm1970, %v1929
      %1995 = vst.msk [vmem:[%s395 + $0x60] sm:$0xf] %vm1970, %v1930
      %1996 = vst.msk [vmem:[%s395 + $0x64] sm:$0xf] %vm1970, %v1931
      %1997 = vst.msk [vmem:[%s395 + $0x68] sm:$0xf] %vm1970, %v1932
      %1998 = vst.msk [vmem:[%s395 + $0x6c] sm:$0xf] %vm1970, %v1933
      %1999 = vst.msk [vmem:[%s395 + $0x70] sm:$0xf] %vm1970, %v1934
      %2000 = vst.msk [vmem:[%s395 + $0x74] sm:$0xf] %vm1970, %v1935
      %2001 = vst.msk [vmem:[%s395 + $0x78] sm:$0xf] %vm1970, %v1936
      %2002 = vst.msk [vmem:[%s395 + $0x7c] sm:$0xf] %vm1970, %v1937
      %s2003 = sadd.s32 %s21, %s22
      %s2004 = smul.u32 32, %s2003
      %p2005 = scmp.lt.s32.totalorder %s2004, 63
      %s2006 = scalar_select %p2005, %s2004, 63
      %s2007 = smul.addr %s2006, 4
      %s2008 = scalar_lea.vmem %s4, %s2007
      %p2009 = scmp.lt.s32.totalorder %s21, 1
      %s2010 = scalar_select %p2009, %s21, 1
      %p2011 = scmp.lt.s32.totalorder %s22, 0
      %s2012 = scalar_select %p2011, %s22, 0
      %s2013 = sadd.s32 %s2012, %s2010
      %s2014 = smul.addr %s2013, 2
      %s2015 = scalar_lea.vmem %s5, %s2014
      // Predicated region
      $region37: #{stacked_conv_layers.6} parent=35 // pred_check
        %p2016 = pneg %p170
      $region38: #{stacked_conv_layers.6} parent=35 // pred_check_branch
        %2018 = sbr.rel (%p2016) target = $region40
      $region39: #{stacked_conv_layers.6} parent=35 // pred_region
        %s2019 = sadd.s32 %s21, %s22
        %s2020 = smul.u32 32, %s2019
      $region40: #{stacked_conv_layers.6} parent=35 // pred_fallthru
        _
      // Predicated region
      $region41: #{stacked_conv_layers.6} parent=35 // pred_check
        %p2021 = pneg %p198
      $region42: #{stacked_conv_layers.6} parent=35 // pred_check_branch
        %2023 = sbr.rel (%p2021) target = $region44
      $region43: #{stacked_conv_layers.6} parent=35 // pred_region
        _
      $region44: #{stacked_conv_layers.6} parent=35 // pred_fallthru
        _
    $region36: #{stacked_conv_layers.6} parent=5 // pred_fallthru
      _
    %p2024 = scmp.le.s32.totalorder 2, %s12
    // Predicated region
    $region45: #{stacked_conv_layers.6} parent=5 // pred_check
      %p2025 = pneg %p2024
    $region46: #{stacked_conv_layers.6} parent=5 // pred_check_branch
      %2027 = sbr.rel (%p2025) target = $region48
    $region47: #{stacked_conv_layers.6} parent=5 // pred_region
      %s2028 = ssub.s32 %s12, 2
      // Predicated region
      $region49: #{stacked_conv_layers.6} parent=47 // pred_check
        %p2029 = pneg %p176
      $region50: #{stacked_conv_layers.6} parent=47 // pred_check_branch
        %2031 = sbr.rel (%p2029) target = $region52
      $region51: #{stacked_conv_layers.6} parent=47 // pred_region
        %s2032 = sadd.s32 %s23, %s24
        %s2033 = smul.u32 32, %s2032
        %p2034 = scmp.lt.s32.totalorder %s2033, 63
        %s2035 = scalar_select %p2034, %s2033, 63
        %s2036 = smul.addr %s2035, 4
        %s2037 = scalar_lea.vmem %s4, %s2036
      $region52: #{stacked_conv_layers.6} parent=47 // pred_fallthru
        _
      // Predicated region
      $region53: #{stacked_conv_layers.6} parent=47 // pred_check
        %p2038 = pneg %p204
      $region54: #{stacked_conv_layers.6} parent=47 // pred_check_branch
        %2040 = sbr.rel (%p2038) target = $region56
      $region55: #{stacked_conv_layers.6} parent=47 // pred_region
        %p2041 = scmp.lt.s32.totalorder %s23, 1
        %s2042 = scalar_select %p2041, %s23, 1
        %p2043 = scmp.lt.s32.totalorder %s24, 0
        %s2044 = scalar_select %p2043, %s24, 0
        %s2045 = sadd.s32 %s2044, %s2042
        %s2046 = smul.addr %s2045, 2
        %s2047 = scalar_lea.vmem %s5, %s2046
      $region56: #{stacked_conv_layers.6} parent=47 // pred_fallthru
        _
    $region48: #{stacked_conv_layers.6} parent=5 // pred_fallthru
      _
  $region6: #{stacked_conv_layers.6} parent=0 // loop_footer
    %s16 = sadd.s32 1, %s12
  $region7: #{stacked_conv_layers.6} parent=0 // loop_footer_branch
    %11 = sbr.rel target = $region3
  $region8: #{stacked_conv_layers.6} parent=0 // loop_exit
    _

</llo_original>
